<compile_context>
chip_gen: v5e
topology: v5e:2x2
jax: 0.10.0
libtpu: 0.0.40
codegen_flags: <defaults>
</compile_context>

<pallas_src>
import functools
import math

import jax
import jax.numpy as jnp
from jax.experimental import pallas as pl
from jax.experimental.pallas import tpu as pltpu

# ---- model hyper-parameters (consistent with the module __init__) ----------
MAXLEN = 8          # maxlength
ACID_SIZE = 25      # acid_size
E = 32              # embed_dim
H = 4               # nhead
HD = E // H         # head dim
NUM_LAYERS = 2      # num_layers
FF = 2048           # nn.TransformerEncoderLayer default dim_feedforward
FCH = 512           # FFN chunk width (FF // FCH chunks per layer)
LN_EPS = 1e-5       # nn.LayerNorm default eps
NUM_PHOS = 4        # phos_embedding = nn.Embedding(4, embed_dim)

N = 2               # example batch
L = MAXLEN          # example sequence length (== max(peptide_length))


def _layer_norm(v, w, b):
    mu = jnp.mean(v, axis=-1, keepdims=True)
    var = jnp.mean((v - mu) ** 2, axis=-1, keepdims=True)
    return (v - mu) * jax.lax.rsqrt(var + LN_EPS) * w + b


def model_kernel(n, l,
                 x_ref, mask_ref,
                 wqkv_ref, bqkv_ref, ow_ref, ob_ref,
                 ln1w_ref, ln1b_ref, ln2w_ref, ln2b_ref,
                 w1T_ref, b1_ref, w2T_ref, b2_ref,
                 rtw_ref, rtb_ref,
                 out_ref, xf_ref):
    m = n * l
    layer = pl.program_id(0)

    @pl.when(layer == 0)
    def _():
        xf_ref[...] = x_ref[...]

    xf = xf_ref[...]                          # (m, E) f32 running activation
    xb = xf.astype(jnp.bfloat16)              # single bf16 cast per layer

    # ----- multi-head self attention ---------------------------------------
    # TODO(synk): dropout layers use eval-mode (identity) semantics; PyTorch
    # training-mode dropout randomness is not reproduced.
    # Fused QKV: one (m,E)x(E,3E) matmul; 1/sqrt(HD) folded into Q at pack time.
    qkv = (jnp.dot(xb, wqkv_ref[0], preferred_element_type=jnp.float32)
           + bqkv_ref[0])                     # (m, 3E) f32

    def head_stack(off):
        # (m, HD) lane slices -> (H*n, l, HD), batch order b = h*n + ni
        parts = [qkv[:, off + h * HD: off + (h + 1) * HD].reshape(n, l, HD)
                 for h in range(H)]
        return jnp.concatenate(parts, axis=0)

    q = head_stack(0)
    k = head_stack(E)
    v = head_stack(2 * E)

    # batched over all heads at once: single score einsum, single softmax,
    # single PV einsum.
    s = jnp.einsum('bqd,bkd->bqk', q, k,
                   preferred_element_type=jnp.float32)        # (H*n, l, l)
    s = s + mask_ref[...]                                     # (H*n, 1, l)
    s = s - jnp.max(s, axis=-1, keepdims=True)
    e = jnp.exp(s)
    p = e * pl.reciprocal(jnp.sum(e, axis=-1, keepdims=True), approx=True)
    o = jnp.einsum('bqk,bkd->bqd', p, v,
                   preferred_element_type=jnp.float32)        # (H*n, l, HD)

    # concat heads back into 32 lanes; single out-projection matmul
    oc = jnp.concatenate(
        [o[h * n:(h + 1) * n].reshape(m, HD) for h in range(H)],
        axis=-1).astype(jnp.bfloat16)                          # (m, E)
    attn = (jnp.dot(oc, ow_ref[0], preferred_element_type=jnp.float32)
            + ob_ref[0])

    # residual + post-norm (nn.TransformerEncoderLayer default)
    y = _layer_norm(xf + attn, ln1w_ref[0], ln1b_ref[0])

    # ----- feed-forward, chunked over FF to bound the live intermediate -----
    yb = y.astype(jnp.bfloat16)
    ffacc = jnp.zeros((m, E), jnp.float32)
    for c in range(FF // FCH):                # 4 chunks, static slices
        lo = c * FCH
        h1 = (jnp.dot(yb, w1T_ref[0, :, lo:lo + FCH],
                      preferred_element_type=jnp.float32)
              + b1_ref[0, :, lo:lo + FCH])
        h1 = jnp.maximum(h1, 0.0).astype(jnp.bfloat16)
        ffacc = ffacc + jnp.dot(h1, w2T_ref[0, lo:lo + FCH, :],
                                preferred_element_type=jnp.float32)
    ff = ffacc + b2_ref[0]
    xnew = _layer_norm(y + ff, ln2w_ref[0], ln2b_ref[0])
    xf_ref[...] = xnew

    # ----- head: output[0] (sequence position 0) -> rtlinear (VPU reduce) ---
    @pl.when(layer == pl.num_programs(0) - 1)
    def _():
        tok0 = xnew.reshape(n, l, E)[:, 0, :]                       # (n, E)
        out_ref[...] = (jnp.sum(tok0 * rtw_ref[...], axis=-1, keepdims=True)
                        + rtb_ref[...])                             # (n, 1)


# --------------------------- parameters -------------------------------------
def init_raw_params(key):
    """Random params in the PyTorch module's own layouts."""
    ks = jax.random.split(key, 16)

    def nrm(k, shape, scale=0.05):
        return (scale * jax.random.normal(k, shape)).astype(jnp.float32)

    layers = []
    for i in range(NUM_LAYERS):
        lk = jax.random.split(ks[3 + i], 8)
        layers.append(dict(
            in_proj_w=nrm(lk[0], (3 * E, E)),     # MultiheadAttention in_proj
            in_proj_b=nrm(lk[1], (3 * E,)),
            out_proj_w=nrm(lk[2], (E, E)),
            out_proj_b=nrm(lk[3], (E,)),
            ln1_w=jnp.ones((E,), jnp.float32), ln1_b=jnp.zeros((E,), jnp.float32),
            ln2_w=jnp.ones((E,), jnp.float32), ln2_b=jnp.zeros((E,), jnp.float32),
            lin1_w=nrm(lk[4], (FF, E)), lin1_b=nrm(lk[5], (FF,)),
            lin2_w=nrm(lk[6], (E, FF)), lin2_b=nrm(lk[7], (E,)),
        ))
    # NOTE: conv, charge_embedding, mslinear, self.dropout exist in __init__
    # but are unused by forward(), so they are not materialized.
    return dict(
        a_emb=nrm(ks[0], (ACID_SIZE, E)).at[0].set(0.0),   # padding_idx=0
        pos_emb=nrm(ks[1], (MAXLEN, E)),
        phos_emb=nrm(ks[2], (NUM_PHOS, E)),
        layers=layers,
        rt_w=nrm(ks[3 + NUM_LAYERS], (1, E)),
        rt_b=jnp.zeros((1,), jnp.float32),
    )


def pack_params(raw):
    """One-time re-layout: lane-dense fused QKV / out-proj, 1/sqrt(HD) folded
    into the Q columns, big matrices cast to bf16."""
    scale = 1.0 / math.sqrt(HD)
    qscale = jnp.concatenate([jnp.full((E,), scale, jnp.float32),
                              jnp.ones((2 * E,), jnp.float32)])
    wqkv, bqkv, ow, ob = [], [], [], []
    ln1w, ln1b, ln2w, ln2b = [], [], [], []
    w1T, b1, w2T, b2 = [], [], [], []
    for lyr in raw['layers']:
        w = lyr['in_proj_w'] * qscale[:, None]       # (3E, E), Q rows pre-scaled
        b = lyr['in_proj_b'] * qscale
        wqkv.append(w.T)                             # (E, 3E)   lane-dense
        bqkv.append(b.reshape(1, 3 * E))             # (1, 3E)   lane-dense
        ow.append(lyr['out_proj_w'].T)               # (E, E)    lane-dense
        ob.append(lyr['out_proj_b'].reshape(1, E))
        ln1w.append(lyr['ln1_w'].reshape(1, E)); ln1b.append(lyr['ln1_b'].reshape(1, E))
        ln2w.append(lyr['ln2_w'].reshape(1, E)); ln2b.append(lyr['ln2_b'].reshape(1, E))
        w1T.append(lyr['lin1_w'].T)                  # (E, FF)   lane-dense
        b1.append(lyr['lin1_b'].reshape(1, FF))
        w2T.append(lyr['lin2_w'].T)                  # (FF, E)   MXU-native
        b2.append(lyr['lin2_b'].reshape(1, E))

    stk = lambda xs, dt=jnp.float32: jnp.stack(xs).astype(dt)
    return dict(
        a_emb=raw['a_emb'], pos_emb=raw['pos_emb'], phos_emb=raw['phos_emb'],
        wqkv=stk(wqkv, jnp.bfloat16),      # (Ln, E, 3E)
        bqkv=stk(bqkv),                    # (Ln, 1, 3E)  f32
        ow=stk(ow, jnp.bfloat16),          # (Ln, E, E)
        ob=stk(ob),                        # (Ln, 1, E)
        ln1w=stk(ln1w), ln1b=stk(ln1b), ln2w=stk(ln2w), ln2b=stk(ln2b),
        w1T=stk(w1T, jnp.bfloat16),        # (Ln, E, FF)
        b1=stk(b1),                        # (Ln, 1, FF)
        w2T=stk(w2T, jnp.bfloat16),        # (Ln, FF, E)
        b2=stk(b2),                        # (Ln, 1, E)
        rtw=raw['rt_w'],                   # (1, E)
        rtb=raw['rt_b'].reshape(1, 1),     # (1, 1)
    )


# --------------------------- forward -----------------------------------------
def deepcharge_irt_forward(kp, peptide_tokens, peptide_length, charge,
                           decoration):
    n, l = peptide_tokens.shape
    m = n * l

    # plain-JAX glue: embedding gathers + additive key padding mask
    a_embed = kp['a_emb'][peptide_tokens]                    # (n, l, E)
    pos_embed = kp['pos_emb'][jnp.arange(l)][None]           # (1, l, E)
    phos_embed = kp['phos_emb'][decoration]                  # (n, l, E)
    ninput = (pos_embed + a_embed + phos_embed).astype(jnp.float32).reshape(m, E)

    # attentionmask(): True (masked) where position >= peptide_length
    pad = jnp.arange(l)[None, :] >= peptide_length[:, None]  # (n, l)
    add_mask = jnp.where(pad, jnp.float32(-1e30), jnp.float32(0.0))   # (n, l)
    # replicate per attention head; kernel batch order is b = h*n + ni
    add_mask = jnp.tile(add_mask[:, None, :], (H, 1, 1))     # (H*n, 1, l)

    grid_spec = pltpu.PrefetchScalarGridSpec(
        num_scalar_prefetch=0,
        grid=(NUM_LAYERS,),
        in_specs=[
            pl.BlockSpec((m, E), lambda i: (0, 0)),                 # x (flat)
            pl.BlockSpec((H * n, 1, l), lambda i: (0, 0, 0)),       # mask
            pl.BlockSpec((1, E, 3 * E), lambda i: (i, 0, 0)),       # wqkv
            pl.BlockSpec((1, 1, 3 * E), lambda i: (i, 0, 0)),       # bqkv
            pl.BlockSpec((1, E, E), lambda i: (i, 0, 0)),           # ow
            pl.BlockSpec((1, 1, E), lambda i: (i, 0, 0)),           # ob
            pl.BlockSpec((1, 1, E), lambda i: (i, 0, 0)),           # ln1w
            pl.BlockSpec((1, 1, E), lambda i: (i, 0, 0)),           # ln1b
            pl.BlockSpec((1, 1, E), lambda i: (i, 0, 0)),           # ln2w
            pl.BlockSpec((1, 1, E), lambda i: (i, 0, 0)),           # ln2b
            pl.BlockSpec((1, E, FF), lambda i: (i, 0, 0)),          # w1T
            pl.BlockSpec((1, 1, FF), lambda i: (i, 0, 0)),          # b1
            pl.BlockSpec((1, FF, E), lambda i: (i, 0, 0)),          # w2T
            pl.BlockSpec((1, 1, E), lambda i: (i, 0, 0)),           # b2
            pl.BlockSpec((1, E), lambda i: (0, 0)),                 # rtw
            pl.BlockSpec((1, 1), lambda i: (0, 0)),                 # rtb
        ],
        out_specs=pl.BlockSpec((n, 1), lambda i: (0, 0)),
        scratch_shapes=[pltpu.VMEM((m, E), jnp.float32)],
    )

    args = (ninput, add_mask,
            kp['wqkv'], kp['bqkv'], kp['ow'], kp['ob'],
            kp['ln1w'], kp['ln1b'], kp['ln2w'], kp['ln2b'],
            kp['w1T'], kp['b1'], kp['w2T'], kp['b2'],
            kp['rtw'], kp['rtb'])

    # advisory cost hint for XLA's scheduler around the custom call
    flops = NUM_LAYERS * (2 * m * E * 3 * E              # fused QKV
                          + 2 * 2 * (H * n) * l * l * HD  # scores + PV
                          + 2 * m * E * E                 # out-projection
                          + 2 * 2 * m * E * FF)           # two FFN matmuls
    bytes_accessed = sum(int(a.size) * a.dtype.itemsize for a in args) + n * 4
    cost = pl.CostEstimate(flops=flops,
                           transcendentals=NUM_LAYERS * (H * n) * l * l,
                           bytes_accessed=bytes_accessed)

    pred = pl.pallas_call(
        functools.partial(model_kernel, n, l),
        out_shape=jax.ShapeDtypeStruct((n, 1), jnp.float32),
        grid_spec=grid_spec,
        compiler_params=pltpu.CompilerParams(
            dimension_semantics=("arbitrary",)),   # layer axis carries state;
        # (a batch-"parallel" axis for v7x's 2nd TC only pays off at batch >> 2)
        cost_estimate=cost,
    )(*args)

    # matches: outputrt = self.rtlinear(output[0].squeeze()).squeeze()
    return {'pred': pred.squeeze(), 'sequence': peptide_tokens,
            'charge': charge, 'decoration': decoration,
            'seq_len': peptide_length}


if __name__ == "__main__":
    key = jax.random.PRNGKey(0)
    pkey, tkey, dkey = jax.random.split(key, 3)
    raw = init_raw_params(pkey)
    kparams = pack_params(raw)      # one-time weight re-layout (no per-call transposes)

    peptide_tokens = jax.random.randint(tkey, (N, L), 1, ACID_SIZE,
                                        dtype=jnp.int32)
    # max(peptide_length) must equal L (attentionmask pads to seq_len.max()).
    peptide_length = jnp.array([L, 5], dtype=jnp.int32)
    charge = jnp.array([2, 3], dtype=jnp.int32)          # unused by forward math
    decoration = jax.random.randint(dkey, (N, L), 0, NUM_PHOS, dtype=jnp.int32)

    fwd = jax.jit(deepcharge_irt_forward)
    out = fwd(kparams, peptide_tokens, peptide_length, charge, decoration)
    pred = jax.block_until_ready(out['pred'])
    assert pred.shape == (N,), pred.shape
    assert bool(jnp.all(jnp.isfinite(pred))), "non-finite prediction"
    print("KERNEL_OK")
</pallas_src>

<mosaic_0001>
module attributes {stable_mosaic.version = 11 : i64} {
  func.func @model_kernel(%arg0: i32, %arg1: memref<16x32xf32, #tpu.memory_space<vmem>>, %arg2: memref<8x1x8xf32, #tpu.memory_space<vmem>>, %arg3: memref<1x32x96xbf16, #tpu.memory_space<vmem>>, %arg4: memref<1x1x96xf32, #tpu.memory_space<vmem>>, %arg5: memref<1x32x32xbf16, #tpu.memory_space<vmem>>, %arg6: memref<1x1x32xf32, #tpu.memory_space<vmem>>, %arg7: memref<1x1x32xf32, #tpu.memory_space<vmem>>, %arg8: memref<1x1x32xf32, #tpu.memory_space<vmem>>, %arg9: memref<1x1x32xf32, #tpu.memory_space<vmem>>, %arg10: memref<1x1x32xf32, #tpu.memory_space<vmem>>, %arg11: memref<1x32x2048xbf16, #tpu.memory_space<vmem>>, %arg12: memref<1x1x2048xf32, #tpu.memory_space<vmem>>, %arg13: memref<1x2048x32xbf16, #tpu.memory_space<vmem>>, %arg14: memref<1x1x32xf32, #tpu.memory_space<vmem>>, %arg15: memref<1x32xf32, #tpu.memory_space<vmem>>, %arg16: memref<1x1xf32, #tpu.memory_space<vmem>>, %arg17: memref<2x1xf32, #tpu.memory_space<vmem>>, %arg18: memref<16x32xf32, #tpu.memory_space<vmem>>) attributes {dimension_semantics = [#tpu.dimension_semantics<arbitrary>], iteration_bounds = array<i64: 2>, scalar_prefetch = 0 : i64, scratch_operands = 1 : i64, tpu.core_type = #tpu.core_type<tc>, window_params = [{pipeline_mode = #tpu.pipeline_mode<synchronous>, transform_indices = @transform_0, window_bounds = array<i64: 16, 32>}, {pipeline_mode = #tpu.pipeline_mode<synchronous>, transform_indices = @transform_1, window_bounds = array<i64: 8, 1, 8>}, {transform_indices = @transform_2, window_bounds = array<i64: 1, 32, 96>}, {transform_indices = @transform_3, window_bounds = array<i64: 1, 1, 96>}, {transform_indices = @transform_4, window_bounds = array<i64: 1, 32, 32>}, {transform_indices = @transform_5, window_bounds = array<i64: 1, 1, 32>}, {transform_indices = @transform_6, window_bounds = array<i64: 1, 1, 32>}, {transform_indices = @transform_7, window_bounds = array<i64: 1, 1, 32>}, {transform_indices = @transform_8, window_bounds = array<i64: 1, 1, 32>}, {transform_indices = @transform_9, window_bounds = array<i64: 1, 1, 32>}, {transform_indices = @transform_10, window_bounds = array<i64: 1, 32, 2048>}, {transform_indices = @transform_11, window_bounds = array<i64: 1, 1, 2048>}, {transform_indices = @transform_12, window_bounds = array<i64: 1, 2048, 32>}, {transform_indices = @transform_13, window_bounds = array<i64: 1, 1, 32>}, {pipeline_mode = #tpu.pipeline_mode<synchronous>, transform_indices = @transform_14, window_bounds = array<i64: 1, 32>}, {pipeline_mode = #tpu.pipeline_mode<synchronous>, transform_indices = @transform_15, window_bounds = array<i64: 1, 1>}, {pipeline_mode = #tpu.pipeline_mode<synchronous>, transform_indices = @transform_16, window_bounds = array<i64: 2, 1>}]} {
    %c0_i32 = arith.constant 0 : i32
    %0 = arith.cmpi eq, %arg0, %c0_i32 : i32
    %1 = arith.extui %0 : i1 to i32
    %c0_i32_0 = arith.constant 0 : i32
    %2 = arith.cmpi ne, %1, %c0_i32_0 : i32
    scf.if %2 {
      %c0_96 = arith.constant 0 : index
      %c0_97 = arith.constant 0 : index
      %191 = vector.load %arg1[%c0_96, %c0_97] : memref<16x32xf32, #tpu.memory_space<vmem>>, vector<16x32xf32>
      %c0_98 = arith.constant 0 : index
      %c0_99 = arith.constant 0 : index
      %192 = vector.load %arg18[%c0_98, %c0_99] : memref<16x32xf32, #tpu.memory_space<vmem>>, vector<16x32xf32>
      tpu.vector_store %arg18[%c0_98, %c0_99], %191 {strides = array<i32>} : memref<16x32xf32, #tpu.memory_space<vmem>>, vector<16x32xf32>,
    } else {
    }
    %c0 = arith.constant 0 : index
    %c0_1 = arith.constant 0 : index
    %3 = vector.load %arg18[%c0, %c0_1] : memref<16x32xf32, #tpu.memory_space<vmem>>, vector<16x32xf32>
    %4 = arith.truncf %3 : vector<16x32xf32> to vector<16x32xbf16>
    %c0_2 = arith.constant 0 : index
    %c0_3 = arith.constant 0 : index
    %c0_4 = arith.constant 0 : index
    %5 = vector.load %arg3[%c0_2, %c0_3, %c0_4] : memref<1x32x96xbf16, #tpu.memory_space<vmem>>, vector<1x32x96xbf16>
    %6 = vector.shape_cast %5 : vector<1x32x96xbf16> to vector<32x96xbf16>
    %cst = arith.constant dense<0.000000e+00> : vector<16x96xf32>
    %7 = tpu.matmul %4, %6, %cst {dimension_numbers = #tpu.dot_dimension_numbers<[1], [0], [0], [1], [0, 0, 1, 1], [], []>} : vector<16x32xbf16>, vector<32x96xbf16>, vector<16x96xf32> -> vector<16x96xf32>
    %c0_5 = arith.constant 0 : index
    %c0_6 = arith.constant 0 : index
    %c0_7 = arith.constant 0 : index
    %8 = vector.load %arg4[%c0_5, %c0_6, %c0_7] : memref<1x1x96xf32, #tpu.memory_space<vmem>>, vector<1x1x96xf32>
    %9 = vector.shape_cast %8 : vector<1x1x96xf32> to vector<1x96xf32>
    %10 = vector.broadcast %9 : vector<1x96xf32> to vector<16x96xf32>
    %11 = arith.addf %7, %10 : vector<16x96xf32>
    %12 = vector.extract_strided_slice %11 {offsets = [0, 0], sizes = [16, 8], strides = [1, 1]} : vector<16x96xf32> to vector<16x8xf32>
    %13 = vector.shape_cast %12 : vector<16x8xf32> to vector<2x8x8xf32>
    %14 = vector.extract_strided_slice %11 {offsets = [0, 8], sizes = [16, 8], strides = [1, 1]} : vector<16x96xf32> to vector<16x8xf32>
    %15 = vector.shape_cast %14 : vector<16x8xf32> to vector<2x8x8xf32>
    %16 = vector.extract_strided_slice %11 {offsets = [0, 16], sizes = [16, 8], strides = [1, 1]} : vector<16x96xf32> to vector<16x8xf32>
    %17 = vector.shape_cast %16 : vector<16x8xf32> to vector<2x8x8xf32>
    %18 = vector.extract_strided_slice %11 {offsets = [0, 24], sizes = [16, 8], strides = [1, 1]} : vector<16x96xf32> to vector<16x8xf32>
    %19 = vector.shape_cast %18 : vector<16x8xf32> to vector<2x8x8xf32>
    %20 = tpu.concatenate %13, %15, %17, %19 in 0 : vector<2x8x8xf32>, vector<2x8x8xf32>, vector<2x8x8xf32>, vector<2x8x8xf32> -> vector<8x8x8xf32>
    %21 = vector.extract_strided_slice %11 {offsets = [0, 32], sizes = [16, 8], strides = [1, 1]} : vector<16x96xf32> to vector<16x8xf32>
    %22 = vector.shape_cast %21 : vector<16x8xf32> to vector<2x8x8xf32>
    %23 = vector.extract_strided_slice %11 {offsets = [0, 40], sizes = [16, 8], strides = [1, 1]} : vector<16x96xf32> to vector<16x8xf32>
    %24 = vector.shape_cast %23 : vector<16x8xf32> to vector<2x8x8xf32>
    %25 = vector.extract_strided_slice %11 {offsets = [0, 48], sizes = [16, 8], strides = [1, 1]} : vector<16x96xf32> to vector<16x8xf32>
    %26 = vector.shape_cast %25 : vector<16x8xf32> to vector<2x8x8xf32>
    %27 = vector.extract_strided_slice %11 {offsets = [0, 56], sizes = [16, 8], strides = [1, 1]} : vector<16x96xf32> to vector<16x8xf32>
    %28 = vector.shape_cast %27 : vector<16x8xf32> to vector<2x8x8xf32>
    %29 = tpu.concatenate %22, %24, %26, %28 in 0 : vector<2x8x8xf32>, vector<2x8x8xf32>, vector<2x8x8xf32>, vector<2x8x8xf32> -> vector<8x8x8xf32>
    %30 = vector.extract_strided_slice %11 {offsets = [0, 64], sizes = [16, 8], strides = [1, 1]} : vector<16x96xf32> to vector<16x8xf32>
    %31 = vector.shape_cast %30 : vector<16x8xf32> to vector<2x8x8xf32>
    %32 = vector.extract_strided_slice %11 {offsets = [0, 72], sizes = [16, 8], strides = [1, 1]} : vector<16x96xf32> to vector<16x8xf32>
    %33 = vector.shape_cast %32 : vector<16x8xf32> to vector<2x8x8xf32>
    %34 = vector.extract_strided_slice %11 {offsets = [0, 80], sizes = [16, 8], strides = [1, 1]} : vector<16x96xf32> to vector<16x8xf32>
    %35 = vector.shape_cast %34 : vector<16x8xf32> to vector<2x8x8xf32>
    %36 = vector.extract_strided_slice %11 {offsets = [0, 88], sizes = [16, 8], strides = [1, 1]} : vector<16x96xf32> to vector<16x8xf32>
    %37 = vector.shape_cast %36 : vector<16x8xf32> to vector<2x8x8xf32>
    %38 = tpu.concatenate %31, %33, %35, %37 in 0 : vector<2x8x8xf32>, vector<2x8x8xf32>, vector<2x8x8xf32>, vector<2x8x8xf32> -> vector<8x8x8xf32>
    "tpu.trace_start"() <{level = 10 : i32, message = "bqd,bkd->bqk"}> : () -> ()
    %cst_8 = arith.constant dense<0.000000e+00> : vector<8x8x8xf32>
    %39 = tpu.matmul %20, %29, %cst_8 {dimension_numbers = #tpu.dot_dimension_numbers<[2], [2], [1], [1], [0, 0, 0, 1, 1, 1], [0], [0]>} : vector<8x8x8xf32>, vector<8x8x8xf32>, vector<8x8x8xf32> -> vector<8x8x8xf32>
    "tpu.trace_stop"() : () -> ()
    %c0_9 = arith.constant 0 : index
    %c0_10 = arith.constant 0 : index
    %c0_11 = arith.constant 0 : index
    %40 = vector.load %arg2[%c0_9, %c0_10, %c0_11] : memref<8x1x8xf32, #tpu.memory_space<vmem>>, vector<8x1x8xf32>
    %41 = vector.broadcast %40 : vector<8x1x8xf32> to vector<8x8x8xf32>
    %42 = arith.addf %39, %41 : vector<8x8x8xf32>
    %cst_12 = arith.constant dense<0xFF800000> : vector<8x8xf32>
    %43 = vector.multi_reduction <maximumf>, %42, %cst_12 [2] : vector<8x8x8xf32> to vector<8x8xf32>
    %44 = vector.shape_cast %43 : vector<8x8xf32> to vector<8x8x1xf32>
    %45 = vector.broadcast %44 : vector<8x8x1xf32> to vector<8x8x8xf32>
    %46 = arith.subf %42, %45 : vector<8x8x8xf32>
    %47 = math.exp %46 : vector<8x8x8xf32>
    %cst_13 = arith.constant dense<0.000000e+00> : vector<8x8xf32>
    %48 = vector.multi_reduction <add>, %47, %cst_13 [2] : vector<8x8x8xf32> to vector<8x8xf32>
    %49 = vector.shape_cast %48 : vector<8x8xf32> to vector<8x8x1xf32>
    %50 = tpu.reciprocal %49 {approx = true} : vector<8x8x1xf32> -> vector<8x8x1xf32>
    %51 = vector.broadcast %50 : vector<8x8x1xf32> to vector<8x8x8xf32>
    %52 = arith.mulf %47, %51 : vector<8x8x8xf32>
    "tpu.trace_start"() <{level = 10 : i32, message = "bqk,bkd->bqd"}> : () -> ()
    %cst_14 = arith.constant dense<0.000000e+00> : vector<8x8x8xf32>
    %53 = tpu.matmul %52, %38, %cst_14 {dimension_numbers = #tpu.dot_dimension_numbers<[2], [1], [1], [2], [0, 0, 0, 1, 1, 2], [0], [0]>} : vector<8x8x8xf32>, vector<8x8x8xf32>, vector<8x8x8xf32> -> vector<8x8x8xf32>
    "tpu.trace_stop"() : () -> ()
    %54 = vector.extract_strided_slice %53 {offsets = [0, 0, 0], sizes = [2, 8, 8], strides = [1, 1, 1]} : vector<8x8x8xf32> to vector<2x8x8xf32>
    %55 = vector.shape_cast %54 : vector<2x8x8xf32> to vector<16x8xf32>
    %56 = vector.extract_strided_slice %53 {offsets = [2, 0, 0], sizes = [2, 8, 8], strides = [1, 1, 1]} : vector<8x8x8xf32> to vector<2x8x8xf32>
    %57 = vector.shape_cast %56 : vector<2x8x8xf32> to vector<16x8xf32>
    %58 = vector.extract_strided_slice %53 {offsets = [4, 0, 0], sizes = [2, 8, 8], strides = [1, 1, 1]} : vector<8x8x8xf32> to vector<2x8x8xf32>
    %59 = vector.shape_cast %58 : vector<2x8x8xf32> to vector<16x8xf32>
    %60 = vector.extract_strided_slice %53 {offsets = [6, 0, 0], sizes = [2, 8, 8], strides = [1, 1, 1]} : vector<8x8x8xf32> to vector<2x8x8xf32>
    %61 = vector.shape_cast %60 : vector<2x8x8xf32> to vector<16x8xf32>
    %62 = tpu.concatenate %55, %57, %59, %61 in 1 : vector<16x8xf32>, vector<16x8xf32>, vector<16x8xf32>, vector<16x8xf32> -> vector<16x32xf32>
    %63 = arith.truncf %62 : vector<16x32xf32> to vector<16x32xbf16>
    %c0_15 = arith.constant 0 : index
    %c0_16 = arith.constant 0 : index
    %c0_17 = arith.constant 0 : index
    %64 = vector.load %arg5[%c0_15, %c0_16, %c0_17] : memref<1x32x32xbf16, #tpu.memory_space<vmem>>, vector<1x32x32xbf16>
    %65 = vector.shape_cast %64 : vector<1x32x32xbf16> to vector<32x32xbf16>
    %cst_18 = arith.constant dense<0.000000e+00> : vector<16x32xf32>
    %66 = tpu.matmul %63, %65, %cst_18 {dimension_numbers = #tpu.dot_dimension_numbers<[1], [0], [0], [1], [0, 0, 1, 1], [], []>} : vector<16x32xbf16>, vector<32x32xbf16>, vector<16x32xf32> -> vector<16x32xf32>
    %c0_19 = arith.constant 0 : index
    %c0_20 = arith.constant 0 : index
    %c0_21 = arith.constant 0 : index
    %67 = vector.load %arg6[%c0_19, %c0_20, %c0_21] : memref<1x1x32xf32, #tpu.memory_space<vmem>>, vector<1x1x32xf32>
    %68 = vector.shape_cast %67 : vector<1x1x32xf32> to vector<1x32xf32>
    %69 = vector.broadcast %68 : vector<1x32xf32> to vector<16x32xf32>
    %70 = arith.addf %66, %69 : vector<16x32xf32>
    %71 = arith.addf %3, %70 : vector<16x32xf32>
    %c0_22 = arith.constant 0 : index
    %c0_23 = arith.constant 0 : index
    %c0_24 = arith.constant 0 : index
    %72 = vector.load %arg7[%c0_22, %c0_23, %c0_24] : memref<1x1x32xf32, #tpu.memory_space<vmem>>, vector<1x1x32xf32>
    %73 = vector.shape_cast %72 : vector<1x1x32xf32> to vector<1x32xf32>
    %c0_25 = arith.constant 0 : index
    %c0_26 = arith.constant 0 : index
    %c0_27 = arith.constant 0 : index
    %74 = vector.load %arg8[%c0_25, %c0_26, %c0_27] : memref<1x1x32xf32, #tpu.memory_space<vmem>>, vector<1x1x32xf32>
    %75 = vector.shape_cast %74 : vector<1x1x32xf32> to vector<1x32xf32>
    %cst_28 = arith.constant dense<0.000000e+00> : vector<16xf32>
    %76 = vector.multi_reduction <add>, %71, %cst_28 [1] : vector<16x32xf32> to vector<16xf32>
    %77 = vector.shape_cast %76 : vector<16xf32> to vector<16x1xf32>
    %cst_29 = arith.constant 3.200000e+01 : f32
    %78 = vector.broadcast %cst_29 : f32 to vector<16x1xf32>
    %79 = arith.divf %77, %78 : vector<16x1xf32>
    %80 = vector.broadcast %79 : vector<16x1xf32> to vector<16x32xf32>
    %81 = arith.subf %71, %80 : vector<16x32xf32>
    %82 = arith.mulf %81, %81 : vector<16x32xf32>
    %cst_30 = arith.constant dense<0.000000e+00> : vector<16xf32>
    %83 = vector.multi_reduction <add>, %82, %cst_30 [1] : vector<16x32xf32> to vector<16xf32>
    %84 = vector.shape_cast %83 : vector<16xf32> to vector<16x1xf32>
    %cst_31 = arith.constant 3.200000e+01 : f32
    %85 = vector.broadcast %cst_31 : f32 to vector<16x1xf32>
    %86 = arith.divf %84, %85 : vector<16x1xf32>
    %87 = vector.broadcast %79 : vector<16x1xf32> to vector<16x32xf32>
    %88 = arith.subf %71, %87 : vector<16x32xf32>
    %cst_32 = arith.constant 9.99999974E-6 : f32
    %89 = vector.broadcast %cst_32 : f32 to vector<16x1xf32>
    %90 = arith.addf %86, %89 : vector<16x1xf32>
    %91 = math.rsqrt %90 : vector<16x1xf32>
    %92 = vector.broadcast %91 : vector<16x1xf32> to vector<16x32xf32>
    %93 = arith.mulf %88, %92 : vector<16x32xf32>
    %94 = vector.broadcast %73 : vector<1x32xf32> to vector<16x32xf32>
    %95 = arith.mulf %93, %94 : vector<16x32xf32>
    %96 = vector.broadcast %75 : vector<1x32xf32> to vector<16x32xf32>
    %97 = arith.addf %95, %96 : vector<16x32xf32>
    %98 = arith.truncf %97 : vector<16x32xf32> to vector<16x32xbf16>
    %cst_33 = arith.constant 0.000000e+00 : f32
    %99 = vector.broadcast %cst_33 : f32 to vector<16x32xf32>
    %c0_34 = arith.constant 0 : index
    %c0_35 = arith.constant 0 : index
    %c0_36 = arith.constant 0 : index
    %100 = vector.load %arg11[%c0_34, %c0_35, %c0_36] : memref<1x32x2048xbf16, #tpu.memory_space<vmem>>, vector<1x32x512xbf16>
    %101 = vector.shape_cast %100 : vector<1x32x512xbf16> to vector<32x512xbf16>
    %cst_37 = arith.constant dense<0.000000e+00> : vector<16x512xf32>
    %102 = tpu.matmul %98, %101, %cst_37 {dimension_numbers = #tpu.dot_dimension_numbers<[1], [0], [0], [1], [0, 0, 1, 1], [], []>} : vector<16x32xbf16>, vector<32x512xbf16>, vector<16x512xf32> -> vector<16x512xf32>
    %c0_38 = arith.constant 0 : index
    %c0_39 = arith.constant 0 : index
    %c0_40 = arith.constant 0 : index
    %103 = vector.load %arg12[%c0_38, %c0_39, %c0_40] : memref<1x1x2048xf32, #tpu.memory_space<vmem>>, vector<1x1x512xf32>
    %104 = vector.shape_cast %103 : vector<1x1x512xf32> to vector<1x512xf32>
    %105 = vector.broadcast %104 : vector<1x512xf32> to vector<16x512xf32>
    %106 = arith.addf %102, %105 : vector<16x512xf32>
    %cst_41 = arith.constant 0.000000e+00 : f32
    %107 = vector.broadcast %cst_41 : f32 to vector<16x512xf32>
    %108 = arith.maximumf %106, %107 : vector<16x512xf32>
    %109 = arith.truncf %108 : vector<16x512xf32> to vector<16x512xbf16>
    %c0_42 = arith.constant 0 : index
    %c0_43 = arith.constant 0 : index
    %c0_44 = arith.constant 0 : index
    %110 = vector.load %arg13[%c0_42, %c0_43, %c0_44] : memref<1x2048x32xbf16, #tpu.memory_space<vmem>>, vector<1x512x32xbf16>
    %111 = vector.shape_cast %110 : vector<1x512x32xbf16> to vector<512x32xbf16>
    %cst_45 = arith.constant dense<0.000000e+00> : vector<16x32xf32>
    %112 = tpu.matmul %109, %111, %cst_45 {dimension_numbers = #tpu.dot_dimension_numbers<[1], [0], [0], [1], [0, 0, 1, 1], [], []>} : vector<16x512xbf16>, vector<512x32xbf16>, vector<16x32xf32> -> vector<16x32xf32>
    %113 = arith.addf %99, %112 : vector<16x32xf32>
    %c0_46 = arith.constant 0 : index
    %c0_47 = arith.constant 0 : index
    %c512 = arith.constant 512 : index
    %114 = vector.load %arg11[%c0_46, %c0_47, %c512] : memref<1x32x2048xbf16, #tpu.memory_space<vmem>>, vector<1x32x512xbf16>
    %115 = vector.shape_cast %114 : vector<1x32x512xbf16> to vector<32x512xbf16>
    %cst_48 = arith.constant dense<0.000000e+00> : vector<16x512xf32>
    %116 = tpu.matmul %98, %115, %cst_48 {dimension_numbers = #tpu.dot_dimension_numbers<[1], [0], [0], [1], [0, 0, 1, 1], [], []>} : vector<16x32xbf16>, vector<32x512xbf16>, vector<16x512xf32> -> vector<16x512xf32>
    %c0_49 = arith.constant 0 : index
    %c0_50 = arith.constant 0 : index
    %c512_51 = arith.constant 512 : index
    %117 = vector.load %arg12[%c0_49, %c0_50, %c512_51] : memref<1x1x2048xf32, #tpu.memory_space<vmem>>, vector<1x1x512xf32>
    %118 = vector.shape_cast %117 : vector<1x1x512xf32> to vector<1x512xf32>
    %119 = vector.broadcast %118 : vector<1x512xf32> to vector<16x512xf32>
    %120 = arith.addf %116, %119 : vector<16x512xf32>
    %cst_52 = arith.constant 0.000000e+00 : f32
    %121 = vector.broadcast %cst_52 : f32 to vector<16x512xf32>
    %122 = arith.maximumf %120, %121 : vector<16x512xf32>
    %123 = arith.truncf %122 : vector<16x512xf32> to vector<16x512xbf16>
    %c0_53 = arith.constant 0 : index
    %c512_54 = arith.constant 512 : index
    %c0_55 = arith.constant 0 : index
    %124 = vector.load %arg13[%c0_53, %c512_54, %c0_55] : memref<1x2048x32xbf16, #tpu.memory_space<vmem>>, vector<1x512x32xbf16>
    %125 = vector.shape_cast %124 : vector<1x512x32xbf16> to vector<512x32xbf16>
    %cst_56 = arith.constant dense<0.000000e+00> : vector<16x32xf32>
    %126 = tpu.matmul %123, %125, %cst_56 {dimension_numbers = #tpu.dot_dimension_numbers<[1], [0], [0], [1], [0, 0, 1, 1], [], []>} : vector<16x512xbf16>, vector<512x32xbf16>, vector<16x32xf32> -> vector<16x32xf32>
    %127 = arith.addf %113, %126 : vector<16x32xf32>
    %c0_57 = arith.constant 0 : index
    %c0_58 = arith.constant 0 : index
    %c1024 = arith.constant 1024 : index
    %128 = vector.load %arg11[%c0_57, %c0_58, %c1024] : memref<1x32x2048xbf16, #tpu.memory_space<vmem>>, vector<1x32x512xbf16>
    %129 = vector.shape_cast %128 : vector<1x32x512xbf16> to vector<32x512xbf16>
    %cst_59 = arith.constant dense<0.000000e+00> : vector<16x512xf32>
    %130 = tpu.matmul %98, %129, %cst_59 {dimension_numbers = #tpu.dot_dimension_numbers<[1], [0], [0], [1], [0, 0, 1, 1], [], []>} : vector<16x32xbf16>, vector<32x512xbf16>, vector<16x512xf32> -> vector<16x512xf32>
    %c0_60 = arith.constant 0 : index
    %c0_61 = arith.constant 0 : index
    %c1024_62 = arith.constant 1024 : index
    %131 = vector.load %arg12[%c0_60, %c0_61, %c1024_62] : memref<1x1x2048xf32, #tpu.memory_space<vmem>>, vector<1x1x512xf32>
    %132 = vector.shape_cast %131 : vector<1x1x512xf32> to vector<1x512xf32>
    %133 = vector.broadcast %132 : vector<1x512xf32> to vector<16x512xf32>
    %134 = arith.addf %130, %133 : vector<16x512xf32>
    %cst_63 = arith.constant 0.000000e+00 : f32
    %135 = vector.broadcast %cst_63 : f32 to vector<16x512xf32>
    %136 = arith.maximumf %134, %135 : vector<16x512xf32>
    %137 = arith.truncf %136 : vector<16x512xf32> to vector<16x512xbf16>
    %c0_64 = arith.constant 0 : index
    %c1024_65 = arith.constant 1024 : index
    %c0_66 = arith.constant 0 : index
    %138 = vector.load %arg13[%c0_64, %c1024_65, %c0_66] : memref<1x2048x32xbf16, #tpu.memory_space<vmem>>, vector<1x512x32xbf16>
    %139 = vector.shape_cast %138 : vector<1x512x32xbf16> to vector<512x32xbf16>
    %cst_67 = arith.constant dense<0.000000e+00> : vector<16x32xf32>
    %140 = tpu.matmul %137, %139, %cst_67 {dimension_numbers = #tpu.dot_dimension_numbers<[1], [0], [0], [1], [0, 0, 1, 1], [], []>} : vector<16x512xbf16>, vector<512x32xbf16>, vector<16x32xf32> -> vector<16x32xf32>
    %141 = arith.addf %127, %140 : vector<16x32xf32>
    %c0_68 = arith.constant 0 : index
    %c0_69 = arith.constant 0 : index
    %c1536 = arith.constant 1536 : index
    %142 = vector.load %arg11[%c0_68, %c0_69, %c1536] : memref<1x32x2048xbf16, #tpu.memory_space<vmem>>, vector<1x32x512xbf16>
    %143 = vector.shape_cast %142 : vector<1x32x512xbf16> to vector<32x512xbf16>
    %cst_70 = arith.constant dense<0.000000e+00> : vector<16x512xf32>
    %144 = tpu.matmul %98, %143, %cst_70 {dimension_numbers = #tpu.dot_dimension_numbers<[1], [0], [0], [1], [0, 0, 1, 1], [], []>} : vector<16x32xbf16>, vector<32x512xbf16>, vector<16x512xf32> -> vector<16x512xf32>
    %c0_71 = arith.constant 0 : index
    %c0_72 = arith.constant 0 : index
    %c1536_73 = arith.constant 1536 : index
    %145 = vector.load %arg12[%c0_71, %c0_72, %c1536_73] : memref<1x1x2048xf32, #tpu.memory_space<vmem>>, vector<1x1x512xf32>
    %146 = vector.shape_cast %145 : vector<1x1x512xf32> to vector<1x512xf32>
    %147 = vector.broadcast %146 : vector<1x512xf32> to vector<16x512xf32>
    %148 = arith.addf %144, %147 : vector<16x512xf32>
    %cst_74 = arith.constant 0.000000e+00 : f32
    %149 = vector.broadcast %cst_74 : f32 to vector<16x512xf32>
    %150 = arith.maximumf %148, %149 : vector<16x512xf32>
    %151 = arith.truncf %150 : vector<16x512xf32> to vector<16x512xbf16>
    %c0_75 = arith.constant 0 : index
    %c1536_76 = arith.constant 1536 : index
    %c0_77 = arith.constant 0 : index
    %152 = vector.load %arg13[%c0_75, %c1536_76, %c0_77] : memref<1x2048x32xbf16, #tpu.memory_space<vmem>>, vector<1x512x32xbf16>
    %153 = vector.shape_cast %152 : vector<1x512x32xbf16> to vector<512x32xbf16>
    %cst_78 = arith.constant dense<0.000000e+00> : vector<16x32xf32>
    %154 = tpu.matmul %151, %153, %cst_78 {dimension_numbers = #tpu.dot_dimension_numbers<[1], [0], [0], [1], [0, 0, 1, 1], [], []>} : vector<16x512xbf16>, vector<512x32xbf16>, vector<16x32xf32> -> vector<16x32xf32>
    %155 = arith.addf %141, %154 : vector<16x32xf32>
    %c0_79 = arith.constant 0 : index
    %c0_80 = arith.constant 0 : index
    %c0_81 = arith.constant 0 : index
    %156 = vector.load %arg14[%c0_79, %c0_80, %c0_81] : memref<1x1x32xf32, #tpu.memory_space<vmem>>, vector<1x1x32xf32>
    %157 = vector.shape_cast %156 : vector<1x1x32xf32> to vector<1x32xf32>
    %158 = vector.broadcast %157 : vector<1x32xf32> to vector<16x32xf32>
    %159 = arith.addf %155, %158 : vector<16x32xf32>
    %160 = arith.addf %97, %159 : vector<16x32xf32>
    %c0_82 = arith.constant 0 : index
    %c0_83 = arith.constant 0 : index
    %c0_84 = arith.constant 0 : index
    %161 = vector.load %arg9[%c0_82, %c0_83, %c0_84] : memref<1x1x32xf32, #tpu.memory_space<vmem>>, vector<1x1x32xf32>
    %162 = vector.shape_cast %161 : vector<1x1x32xf32> to vector<1x32xf32>
    %c0_85 = arith.constant 0 : index
    %c0_86 = arith.constant 0 : index
    %c0_87 = arith.constant 0 : index
    %163 = vector.load %arg10[%c0_85, %c0_86, %c0_87] : memref<1x1x32xf32, #tpu.memory_space<vmem>>, vector<1x1x32xf32>
    %164 = vector.shape_cast %163 : vector<1x1x32xf32> to vector<1x32xf32>
    %cst_88 = arith.constant dense<0.000000e+00> : vector<16xf32>
    %165 = vector.multi_reduction <add>, %160, %cst_88 [1] : vector<16x32xf32> to vector<16xf32>
    %166 = vector.shape_cast %165 : vector<16xf32> to vector<16x1xf32>
    %cst_89 = arith.constant 3.200000e+01 : f32
    %167 = vector.broadcast %cst_89 : f32 to vector<16x1xf32>
    %168 = arith.divf %166, %167 : vector<16x1xf32>
    %169 = vector.broadcast %168 : vector<16x1xf32> to vector<16x32xf32>
    %170 = arith.subf %160, %169 : vector<16x32xf32>
    %171 = arith.mulf %170, %170 : vector<16x32xf32>
    %cst_90 = arith.constant dense<0.000000e+00> : vector<16xf32>
    %172 = vector.multi_reduction <add>, %171, %cst_90 [1] : vector<16x32xf32> to vector<16xf32>
    %173 = vector.shape_cast %172 : vector<16xf32> to vector<16x1xf32>
    %cst_91 = arith.constant 3.200000e+01 : f32
    %174 = vector.broadcast %cst_91 : f32 to vector<16x1xf32>
    %175 = arith.divf %173, %174 : vector<16x1xf32>
    %176 = vector.broadcast %168 : vector<16x1xf32> to vector<16x32xf32>
    %177 = arith.subf %160, %176 : vector<16x32xf32>
    %cst_92 = arith.constant 9.99999974E-6 : f32
    %178 = vector.broadcast %cst_92 : f32 to vector<16x1xf32>
    %179 = arith.addf %175, %178 : vector<16x1xf32>
    %180 = math.rsqrt %179 : vector<16x1xf32>
    %181 = vector.broadcast %180 : vector<16x1xf32> to vector<16x32xf32>
    %182 = arith.mulf %177, %181 : vector<16x32xf32>
    %183 = vector.broadcast %162 : vector<1x32xf32> to vector<16x32xf32>
    %184 = arith.mulf %182, %183 : vector<16x32xf32>
    %185 = vector.broadcast %164 : vector<1x32xf32> to vector<16x32xf32>
    %186 = arith.addf %184, %185 : vector<16x32xf32>
    %c0_93 = arith.constant 0 : index
    %c0_94 = arith.constant 0 : index
    %187 = vector.load %arg18[%c0_93, %c0_94] : memref<16x32xf32, #tpu.memory_space<vmem>>, vector<16x32xf32>
    tpu.vector_store %arg18[%c0_93, %c0_94], %186 {strides = array<i32>} : memref<16x32xf32, #tpu.memory_space<vmem>>, vector<16x32xf32>,
    %c1_i32 = arith.constant 1 : i32
    %188 = arith.cmpi eq, %arg0, %c1_i32 : i32
    %189 = arith.extui %188 : i1 to i32
    %c0_i32_95 = arith.constant 0 : i32
    %190 = arith.cmpi ne, %189, %c0_i32_95 : i32
    scf.if %190 {
      %191 = vector.shape_cast %186 : vector<16x32xf32> to vector<2x8x32xf32>
      %192 = vector.extract_strided_slice %191 {offsets = [0, 0, 0], sizes = [2, 1, 32], strides = [1, 1, 1]} : vector<2x8x32xf32> to vector<2x1x32xf32>
      %193 = vector.shape_cast %192 : vector<2x1x32xf32> to vector<2x32xf32>
      %c0_96 = arith.constant 0 : index
      %c0_97 = arith.constant 0 : index
      %194 = vector.load %arg15[%c0_96, %c0_97] : memref<1x32xf32, #tpu.memory_space<vmem>>, vector<1x32xf32>
      %195 = vector.broadcast %194 : vector<1x32xf32> to vector<2x32xf32>
      %196 = arith.mulf %193, %195 : vector<2x32xf32>
      %cst_98 = arith.constant dense<0.000000e+00> : vector<2xf32>
      %197 = vector.multi_reduction <add>, %196, %cst_98 [1] : vector<2x32xf32> to vector<2xf32>
      %198 = vector.shape_cast %197 : vector<2xf32> to vector<2x1xf32>
      %c0_99 = arith.constant 0 : index
      %c0_100 = arith.constant 0 : index
      %199 = vector.load %arg16[%c0_99, %c0_100] : memref<1x1xf32, #tpu.memory_space<vmem>>, vector<1x1xf32>
      %200 = vector.broadcast %199 : vector<1x1xf32> to vector<2x1xf32>
      %201 = arith.addf %198, %200 : vector<2x1xf32>
      %c0_101 = arith.constant 0 : index
      %c0_102 = arith.constant 0 : index
      %202 = vector.load %arg17[%c0_101, %c0_102] : memref<2x1xf32, #tpu.memory_space<vmem>>, vector<2x1xf32>
      tpu.vector_store %arg17[%c0_101, %c0_102], %201 {strides = array<i32>} : memref<2x1xf32, #tpu.memory_space<vmem>>, vector<2x1xf32>,
    } else {
    }
    return
  }
  func.func @transform_0(%arg0: i32) -> (i32, i32) {
    %c0_i32 = arith.constant 0 : i32
    %c0_i32_0 = arith.constant 0 : i32
    %c0_i32_1 = arith.constant 0 : i32
    return %c0_i32, %c0_i32_0 : i32, i32
  }
  func.func @transform_1(%arg0: i32) -> (i32, i32, i32) {
    %c0_i32 = arith.constant 0 : i32
    %c0_i32_0 = arith.constant 0 : i32
    %c0_i32_1 = arith.constant 0 : i32
    %c0_i32_2 = arith.constant 0 : i32
    return %c0_i32, %c0_i32_0, %c0_i32_1 : i32, i32, i32
  }
  func.func @transform_2(%arg0: i32) -> (i32, i32, i32) {
    %c0_i32 = arith.constant 0 : i32
    %c0_i32_0 = arith.constant 0 : i32
    %c0_i32_1 = arith.constant 0 : i32
    return %arg0, %c0_i32, %c0_i32_0 : i32, i32, i32
  }
  func.func @transform_3(%arg0: i32) -> (i32, i32, i32) {
    %c0_i32 = arith.constant 0 : i32
    %c0_i32_0 = arith.constant 0 : i32
    %c0_i32_1 = arith.constant 0 : i32
    return %arg0, %c0_i32, %c0_i32_0 : i32, i32, i32
  }
  func.func @transform_4(%arg0: i32) -> (i32, i32, i32) {
    %c0_i32 = arith.constant 0 : i32
    %c0_i32_0 = arith.constant 0 : i32
    %c0_i32_1 = arith.constant 0 : i32
    return %arg0, %c0_i32, %c0_i32_0 : i32, i32, i32
  }
  func.func @transform_5(%arg0: i32) -> (i32, i32, i32) {
    %c0_i32 = arith.constant 0 : i32
    %c0_i32_0 = arith.constant 0 : i32
    %c0_i32_1 = arith.constant 0 : i32
    return %arg0, %c0_i32, %c0_i32_0 : i32, i32, i32
  }
  func.func @transform_6(%arg0: i32) -> (i32, i32, i32) {
    %c0_i32 = arith.constant 0 : i32
    %c0_i32_0 = arith.constant 0 : i32
    %c0_i32_1 = arith.constant 0 : i32
    return %arg0, %c0_i32, %c0_i32_0 : i32, i32, i32
  }
  func.func @transform_7(%arg0: i32) -> (i32, i32, i32) {
    %c0_i32 = arith.constant 0 : i32
    %c0_i32_0 = arith.constant 0 : i32
    %c0_i32_1 = arith.constant 0 : i32
    return %arg0, %c0_i32, %c0_i32_0 : i32, i32, i32
  }
  func.func @transform_8(%arg0: i32) -> (i32, i32, i32) {
    %c0_i32 = arith.constant 0 : i32
    %c0_i32_0 = arith.constant 0 : i32
    %c0_i32_1 = arith.constant 0 : i32
    return %arg0, %c0_i32, %c0_i32_0 : i32, i32, i32
  }
  func.func @transform_9(%arg0: i32) -> (i32, i32, i32) {
    %c0_i32 = arith.constant 0 : i32
    %c0_i32_0 = arith.constant 0 : i32
    %c0_i32_1 = arith.constant 0 : i32
    return %arg0, %c0_i32, %c0_i32_0 : i32, i32, i32
  }
  func.func @transform_10(%arg0: i32) -> (i32, i32, i32) {
    %c0_i32 = arith.constant 0 : i32
    %c0_i32_0 = arith.constant 0 : i32
    %c0_i32_1 = arith.constant 0 : i32
    return %arg0, %c0_i32, %c0_i32_0 : i32, i32, i32
  }
  func.func @transform_11(%arg0: i32) -> (i32, i32, i32) {
    %c0_i32 = arith.constant 0 : i32
    %c0_i32_0 = arith.constant 0 : i32
    %c0_i32_1 = arith.constant 0 : i32
    return %arg0, %c0_i32, %c0_i32_0 : i32, i32, i32
  }
  func.func @transform_12(%arg0: i32) -> (i32, i32, i32) {
    %c0_i32 = arith.constant 0 : i32
    %c0_i32_0 = arith.constant 0 : i32
    %c0_i32_1 = arith.constant 0 : i32
    return %arg0, %c0_i32, %c0_i32_0 : i32, i32, i32
  }
  func.func @transform_13(%arg0: i32) -> (i32, i32, i32) {
    %c0_i32 = arith.constant 0 : i32
    %c0_i32_0 = arith.constant 0 : i32
    %c0_i32_1 = arith.constant 0 : i32
    return %arg0, %c0_i32, %c0_i32_0 : i32, i32, i32
  }
  func.func @transform_14(%arg0: i32) -> (i32, i32) {
    %c0_i32 = arith.constant 0 : i32
    %c0_i32_0 = arith.constant 0 : i32
    %c0_i32_1 = arith.constant 0 : i32
    return %c0_i32, %c0_i32_0 : i32, i32
  }
  func.func @transform_15(%arg0: i32) -> (i32, i32) {
    %c0_i32 = arith.constant 0 : i32
    %c0_i32_0 = arith.constant 0 : i32
    %c0_i32_1 = arith.constant 0 : i32
    return %c0_i32, %c0_i32_0 : i32, i32
  }
  func.func @transform_16(%arg0: i32) -> (i32, i32) {
    %c0_i32 = arith.constant 0 : i32
    %c0_i32_0 = arith.constant 0 : i32
    %c0_i32_1 = arith.constant 0 : i32
    return %c0_i32, %c0_i32_0 : i32, i32
  }
}

</mosaic_0001>

<llo_original>
// kernel: deepcharge_irt_forward.1
$region0: #{deepcharge_irt_forward.1}
  #allocation0 [shape = 'u32[]', space=smem, size = 0x4, offset = 0x4, fixed_abs, tag = 'smem constant byte address 0x4 - core index']
  #allocation1 [shape = 'u32[72,128]{1,0:T(1,128)}', space=vmem, size = 0x9000, scoped, tag = 'internal scratch']
  #allocation2 [shape = 'f32[16,32]{1,0:T(8,128)}', space=vmem, size = 0x2000, scoped, tag = 'scratch operand']
  #allocation3 [shape = 'f32[1,1]{1,0:T(1,128)S(1)}', space=vmem, size = 0x200, scoped, tag = 'scoped memory for deepcharge_irt_forward.1']
  %s0 = inlined_call_operand.vmem [shape: f32[16,32], index: 0, kind: input, shape index: {}]
  %s1 = inlined_call_operand.vmem [shape: f32[8,1,8], index: 1, kind: input, shape index: {}]
  %s2 = inlined_call_operand.vmem [shape: bf16[2,32,96], index: 2, kind: input, shape index: {}]
  %s3 = inlined_call_operand.vmem [shape: f32[2,1,96], index: 3, kind: input, shape index: {}]
  %s4 = inlined_call_operand.vmem [shape: bf16[2,32,32], index: 4, kind: input, shape index: {}]
  %s5 = inlined_call_operand.vmem [shape: f32[2,1,32], index: 5, kind: input, shape index: {}]
  %s6 = inlined_call_operand.vmem [shape: f32[2,1,32], index: 6, kind: input, shape index: {}]
  %s7 = inlined_call_operand.vmem [shape: f32[2,1,32], index: 7, kind: input, shape index: {}]
  %s8 = inlined_call_operand.vmem [shape: f32[2,1,32], index: 8, kind: input, shape index: {}]
  %s9 = inlined_call_operand.vmem [shape: f32[2,1,32], index: 9, kind: input, shape index: {}]
  %s10 = inlined_call_operand.vmem [shape: bf16[2,32,2048], index: 10, kind: input, shape index: {}]
  %s11 = inlined_call_operand.vmem [shape: f32[2,1,2048], index: 11, kind: input, shape index: {}]
  %s12 = inlined_call_operand.vmem [shape: bf16[2,2048,32], index: 12, kind: input, shape index: {}]
  %s13 = inlined_call_operand.vmem [shape: f32[2,1,32], index: 13, kind: input, shape index: {}]
  %s14 = inlined_call_operand.vmem [shape: f32[1,32], index: 14, kind: input, shape index: {}]
  %s15 = inlined_call_operand.<no memory space> [shape: f32[1,1], index: 15, kind: input, shape index: {}]
  %s16 = inlined_call_operand.vmem [shape: f32[2,1], index: 16, kind: output, shape index: {}]
  %s17 = sld [smem:[#allocation0]]
  $region105: #{deepcharge_irt_forward.1} parent=0
    _
  %s19 = ssub.s32 1, %s17
  %s20 = scalar_select 0, %s19, %s17
  %v21 = vstv %s15
  %22 = vst [vmem:[#allocation3] sm:$0x1] %v21
  loop: start=0, step=1, limit=4
  $region2: #{deepcharge_irt_forward.1} parent=0 // loop_pre_header
    _
  $region3: #{deepcharge_irt_forward.1} parent=0 // loop_header
    %s24 = sphi 0, %s28
    %p25 = scmp.ge.s32.totalorder %s24, 4
    %s32 = sphi 0, %s32
    %s34 = sphi 0, %s32
    %s35 = sphi 0, %s34
    %s49 = sphi 0, %s35
    %s53 = sphi 0, %s53
    %s55 = sphi 0, %s53
    %s56 = sphi 0, %s55
    %s70 = sphi 0, %s56
    %s76 = sphi 0, %s78
    %s79 = sphi 0, %s76
    %s80 = sphi 0, %s79
    %s96 = sphi 0, %s80
    %s102 = sphi 0, %s104
    %s105 = sphi 0, %s102
    %s106 = sphi 0, %s105
    %s122 = sphi 0, %s106
    %s128 = sphi 0, %s130
    %s131 = sphi 0, %s128
    %s132 = sphi 0, %s131
    %s148 = sphi 0, %s132
    %s154 = sphi 0, %s156
    %s157 = sphi 0, %s154
    %s158 = sphi 0, %s157
    %s174 = sphi 0, %s158
    %s180 = sphi 0, %s182
    %s183 = sphi 0, %s180
    %s184 = sphi 0, %s183
    %s200 = sphi 0, %s184
    %s206 = sphi 0, %s208
    %s209 = sphi 0, %s206
    %s210 = sphi 0, %s209
    %s226 = sphi 0, %s210
    %s232 = sphi 0, %s234
    %s235 = sphi 0, %s232
    %s236 = sphi 0, %s235
    %s252 = sphi 0, %s236
    %s258 = sphi 0, %s260
    %s261 = sphi 0, %s258
    %s262 = sphi 0, %s261
    %s278 = sphi 0, %s262
    %s284 = sphi 0, %s286
    %s287 = sphi 0, %s284
    %s288 = sphi 0, %s287
    %s304 = sphi 0, %s288
    %s310 = sphi 0, %s312
    %s313 = sphi 0, %s310
    %s314 = sphi 0, %s313
    %s330 = sphi 0, %s314
    %s336 = sphi 0, %s338
    %s339 = sphi 0, %s336
    %s340 = sphi 0, %s339
    %s356 = sphi 0, %s340
    %s362 = sphi 0, %s364
    %s365 = sphi 0, %s362
    %s366 = sphi 0, %s365
    %s382 = sphi 0, %s366
    %s386 = sphi 0, %s386
    %s388 = sphi 0, %s386
    %s389 = sphi 0, %s388
    %s403 = sphi 0, %s389
    %s407 = sphi 0, %s407
    %s409 = sphi 0, %s407
    %s410 = sphi 0, %s409
    %s424 = sphi 0, %s410
    %s428 = sphi 0, %s428
    %s430 = sphi 0, %s428
    %s431 = sphi 0, %s430
    %s445 = sphi 0, %s431
  $region4: #{deepcharge_irt_forward.1} parent=0 // loop_header_branch
    %27 = sbr.rel (%p25) target = $region8
  $region5: #{deepcharge_irt_forward.1} parent=0 // loop_body
    %s29 = ssub.s32 %s24, 1
    %s30 = ssub.s32 %s24, 2
    %s31 = sadd.s32 %s24, 1
    %s33 = sadd.s32 %s32, 1
    %p36 = scmp.eq.s32.totalorder %s24, 1
    %p37 = scmp.ne.s32.totalorder %s32, %s34
    %p38 = scmp.eq.s32.totalorder %s24, 0
    %p39 = por %p37, %p38
    %p40 = scmp.ne.s32.totalorder %s32, %s34
    %p41 = scmp.eq.s32.totalorder %s29, 1
    %p42 = por %p40, %p41
    %p43 = scmp.ne.s32.totalorder %s34, %s35
    %p44 = scmp.eq.s32.totalorder %s29, 0
    %p45 = por %p43, %p44
    %p46 = scmp.ne.s32.totalorder %s34, %s35
    %p47 = scmp.eq.s32.totalorder %s30, 1
    %p48 = por %p46, %p47
    %p50 = scmp.ne.s32.totalorder %s35, %s49
    %p51 = scmp.eq.s32.totalorder %s30, 0
    %p52 = por %p50, %p51
    %s54 = sadd.s32 %s53, 1
    %p57 = scmp.eq.s32.totalorder %s24, 1
    %p58 = scmp.ne.s32.totalorder %s53, %s55
    %p59 = scmp.eq.s32.totalorder %s24, 0
    %p60 = por %p58, %p59
    %p61 = scmp.ne.s32.totalorder %s53, %s55
    %p62 = scmp.eq.s32.totalorder %s29, 1
    %p63 = por %p61, %p62
    %p64 = scmp.ne.s32.totalorder %s55, %s56
    %p65 = scmp.eq.s32.totalorder %s29, 0
    %p66 = por %p64, %p65
    %p67 = scmp.ne.s32.totalorder %s55, %s56
    %p68 = scmp.eq.s32.totalorder %s30, 1
    %p69 = por %p67, %p68
    %p71 = scmp.ne.s32.totalorder %s56, %s70
    %p72 = scmp.eq.s32.totalorder %s30, 0
    %p73 = por %p71, %p72
    %s74 = ssub.s32 %s24, %s31
    %p75 = scmp.eq.s32.totalorder %s74, 0
    %s77 = sadd.s32 %s76, 1
    %s78 = scalar_select %p75, %s76, %s77
    %p81 = pneg %p75
    %p82 = scmp.eq.s32.totalorder %s24, 1
    %p83 = por %p81, %p82
    %p84 = scmp.ne.s32.totalorder %s76, %s79
    %p85 = scmp.eq.s32.totalorder %s24, 0
    %p86 = por %p84, %p85
    %p87 = scmp.ne.s32.totalorder %s76, %s79
    %p88 = scmp.eq.s32.totalorder %s29, 1
    %p89 = por %p87, %p88
    %p90 = scmp.ne.s32.totalorder %s79, %s80
    %p91 = scmp.eq.s32.totalorder %s29, 0
    %p92 = por %p90, %p91
    %p93 = scmp.ne.s32.totalorder %s79, %s80
    %p94 = scmp.eq.s32.totalorder %s30, 1
    %p95 = por %p93, %p94
    %p97 = scmp.ne.s32.totalorder %s80, %s96
    %p98 = scmp.eq.s32.totalorder %s30, 0
    %p99 = por %p97, %p98
    %s100 = ssub.s32 %s24, %s31
    %p101 = scmp.eq.s32.totalorder %s100, 0
    %s103 = sadd.s32 %s102, 1
    %s104 = scalar_select %p101, %s102, %s103
    %p107 = pneg %p101
    %p108 = scmp.eq.s32.totalorder %s24, 1
    %p109 = por %p107, %p108
    %p110 = scmp.ne.s32.totalorder %s102, %s105
    %p111 = scmp.eq.s32.totalorder %s24, 0
    %p112 = por %p110, %p111
    %p113 = scmp.ne.s32.totalorder %s102, %s105
    %p114 = scmp.eq.s32.totalorder %s29, 1
    %p115 = por %p113, %p114
    %p116 = scmp.ne.s32.totalorder %s105, %s106
    %p117 = scmp.eq.s32.totalorder %s29, 0
    %p118 = por %p116, %p117
    %p119 = scmp.ne.s32.totalorder %s105, %s106
    %p120 = scmp.eq.s32.totalorder %s30, 1
    %p121 = por %p119, %p120
    %p123 = scmp.ne.s32.totalorder %s106, %s122
    %p124 = scmp.eq.s32.totalorder %s30, 0
    %p125 = por %p123, %p124
    %s126 = ssub.s32 %s24, %s31
    %p127 = scmp.eq.s32.totalorder %s126, 0
    %s129 = sadd.s32 %s128, 1
    %s130 = scalar_select %p127, %s128, %s129
    %p133 = pneg %p127
    %p134 = scmp.eq.s32.totalorder %s24, 1
    %p135 = por %p133, %p134
    %p136 = scmp.ne.s32.totalorder %s128, %s131
    %p137 = scmp.eq.s32.totalorder %s24, 0
    %p138 = por %p136, %p137
    %p139 = scmp.ne.s32.totalorder %s128, %s131
    %p140 = scmp.eq.s32.totalorder %s29, 1
    %p141 = por %p139, %p140
    %p142 = scmp.ne.s32.totalorder %s131, %s132
    %p143 = scmp.eq.s32.totalorder %s29, 0
    %p144 = por %p142, %p143
    %p145 = scmp.ne.s32.totalorder %s131, %s132
    %p146 = scmp.eq.s32.totalorder %s30, 1
    %p147 = por %p145, %p146
    %p149 = scmp.ne.s32.totalorder %s132, %s148
    %p150 = scmp.eq.s32.totalorder %s30, 0
    %p151 = por %p149, %p150
    %s152 = ssub.s32 %s24, %s31
    %p153 = scmp.eq.s32.totalorder %s152, 0
    %s155 = sadd.s32 %s154, 1
    %s156 = scalar_select %p153, %s154, %s155
    %p159 = pneg %p153
    %p160 = scmp.eq.s32.totalorder %s24, 1
    %p161 = por %p159, %p160
    %p162 = scmp.ne.s32.totalorder %s154, %s157
    %p163 = scmp.eq.s32.totalorder %s24, 0
    %p164 = por %p162, %p163
    %p165 = scmp.ne.s32.totalorder %s154, %s157
    %p166 = scmp.eq.s32.totalorder %s29, 1
    %p167 = por %p165, %p166
    %p168 = scmp.ne.s32.totalorder %s157, %s158
    %p169 = scmp.eq.s32.totalorder %s29, 0
    %p170 = por %p168, %p169
    %p171 = scmp.ne.s32.totalorder %s157, %s158
    %p172 = scmp.eq.s32.totalorder %s30, 1
    %p173 = por %p171, %p172
    %p175 = scmp.ne.s32.totalorder %s158, %s174
    %p176 = scmp.eq.s32.totalorder %s30, 0
    %p177 = por %p175, %p176
    %s178 = ssub.s32 %s24, %s31
    %p179 = scmp.eq.s32.totalorder %s178, 0
    %s181 = sadd.s32 %s180, 1
    %s182 = scalar_select %p179, %s180, %s181
    %p185 = pneg %p179
    %p186 = scmp.eq.s32.totalorder %s24, 1
    %p187 = por %p185, %p186
    %p188 = scmp.ne.s32.totalorder %s180, %s183
    %p189 = scmp.eq.s32.totalorder %s24, 0
    %p190 = por %p188, %p189
    %p191 = scmp.ne.s32.totalorder %s180, %s183
    %p192 = scmp.eq.s32.totalorder %s29, 1
    %p193 = por %p191, %p192
    %p194 = scmp.ne.s32.totalorder %s183, %s184
    %p195 = scmp.eq.s32.totalorder %s29, 0
    %p196 = por %p194, %p195
    %p197 = scmp.ne.s32.totalorder %s183, %s184
    %p198 = scmp.eq.s32.totalorder %s30, 1
    %p199 = por %p197, %p198
    %p201 = scmp.ne.s32.totalorder %s184, %s200
    %p202 = scmp.eq.s32.totalorder %s30, 0
    %p203 = por %p201, %p202
    %s204 = ssub.s32 %s24, %s31
    %p205 = scmp.eq.s32.totalorder %s204, 0
    %s207 = sadd.s32 %s206, 1
    %s208 = scalar_select %p205, %s206, %s207
    %p211 = pneg %p205
    %p212 = scmp.eq.s32.totalorder %s24, 1
    %p213 = por %p211, %p212
    %p214 = scmp.ne.s32.totalorder %s206, %s209
    %p215 = scmp.eq.s32.totalorder %s24, 0
    %p216 = por %p214, %p215
    %p217 = scmp.ne.s32.totalorder %s206, %s209
    %p218 = scmp.eq.s32.totalorder %s29, 1
    %p219 = por %p217, %p218
    %p220 = scmp.ne.s32.totalorder %s209, %s210
    %p221 = scmp.eq.s32.totalorder %s29, 0
    %p222 = por %p220, %p221
    %p223 = scmp.ne.s32.totalorder %s209, %s210
    %p224 = scmp.eq.s32.totalorder %s30, 1
    %p225 = por %p223, %p224
    %p227 = scmp.ne.s32.totalorder %s210, %s226
    %p228 = scmp.eq.s32.totalorder %s30, 0
    %p229 = por %p227, %p228
    %s230 = ssub.s32 %s24, %s31
    %p231 = scmp.eq.s32.totalorder %s230, 0
    %s233 = sadd.s32 %s232, 1
    %s234 = scalar_select %p231, %s232, %s233
    %p237 = pneg %p231
    %p238 = scmp.eq.s32.totalorder %s24, 1
    %p239 = por %p237, %p238
    %p240 = scmp.ne.s32.totalorder %s232, %s235
    %p241 = scmp.eq.s32.totalorder %s24, 0
    %p242 = por %p240, %p241
    %p243 = scmp.ne.s32.totalorder %s232, %s235
    %p244 = scmp.eq.s32.totalorder %s29, 1
    %p245 = por %p243, %p244
    %p246 = scmp.ne.s32.totalorder %s235, %s236
    %p247 = scmp.eq.s32.totalorder %s29, 0
    %p248 = por %p246, %p247
    %p249 = scmp.ne.s32.totalorder %s235, %s236
    %p250 = scmp.eq.s32.totalorder %s30, 1
    %p251 = por %p249, %p250
    %p253 = scmp.ne.s32.totalorder %s236, %s252
    %p254 = scmp.eq.s32.totalorder %s30, 0
    %p255 = por %p253, %p254
    %s256 = ssub.s32 %s24, %s31
    %p257 = scmp.eq.s32.totalorder %s256, 0
    %s259 = sadd.s32 %s258, 1
    %s260 = scalar_select %p257, %s258, %s259
    %p263 = pneg %p257
    %p264 = scmp.eq.s32.totalorder %s24, 1
    %p265 = por %p263, %p264
    %p266 = scmp.ne.s32.totalorder %s258, %s261
    %p267 = scmp.eq.s32.totalorder %s24, 0
    %p268 = por %p266, %p267
    %p269 = scmp.ne.s32.totalorder %s258, %s261
    %p270 = scmp.eq.s32.totalorder %s29, 1
    %p271 = por %p269, %p270
    %p272 = scmp.ne.s32.totalorder %s261, %s262
    %p273 = scmp.eq.s32.totalorder %s29, 0
    %p274 = por %p272, %p273
    %p275 = scmp.ne.s32.totalorder %s261, %s262
    %p276 = scmp.eq.s32.totalorder %s30, 1
    %p277 = por %p275, %p276
    %p279 = scmp.ne.s32.totalorder %s262, %s278
    %p280 = scmp.eq.s32.totalorder %s30, 0
    %p281 = por %p279, %p280
    %s282 = ssub.s32 %s24, %s31
    %p283 = scmp.eq.s32.totalorder %s282, 0
    %s285 = sadd.s32 %s284, 1
    %s286 = scalar_select %p283, %s284, %s285
    %p289 = pneg %p283
    %p290 = scmp.eq.s32.totalorder %s24, 1
    %p291 = por %p289, %p290
    %p292 = scmp.ne.s32.totalorder %s284, %s287
    %p293 = scmp.eq.s32.totalorder %s24, 0
    %p294 = por %p292, %p293
    %p295 = scmp.ne.s32.totalorder %s284, %s287
    %p296 = scmp.eq.s32.totalorder %s29, 1
    %p297 = por %p295, %p296
    %p298 = scmp.ne.s32.totalorder %s287, %s288
    %p299 = scmp.eq.s32.totalorder %s29, 0
    %p300 = por %p298, %p299
    %p301 = scmp.ne.s32.totalorder %s287, %s288
    %p302 = scmp.eq.s32.totalorder %s30, 1
    %p303 = por %p301, %p302
    %p305 = scmp.ne.s32.totalorder %s288, %s304
    %p306 = scmp.eq.s32.totalorder %s30, 0
    %p307 = por %p305, %p306
    %s308 = ssub.s32 %s24, %s31
    %p309 = scmp.eq.s32.totalorder %s308, 0
    %s311 = sadd.s32 %s310, 1
    %s312 = scalar_select %p309, %s310, %s311
    %p315 = pneg %p309
    %p316 = scmp.eq.s32.totalorder %s24, 1
    %p317 = por %p315, %p316
    %p318 = scmp.ne.s32.totalorder %s310, %s313
    %p319 = scmp.eq.s32.totalorder %s24, 0
    %p320 = por %p318, %p319
    %p321 = scmp.ne.s32.totalorder %s310, %s313
    %p322 = scmp.eq.s32.totalorder %s29, 1
    %p323 = por %p321, %p322
    %p324 = scmp.ne.s32.totalorder %s313, %s314
    %p325 = scmp.eq.s32.totalorder %s29, 0
    %p326 = por %p324, %p325
    %p327 = scmp.ne.s32.totalorder %s313, %s314
    %p328 = scmp.eq.s32.totalorder %s30, 1
    %p329 = por %p327, %p328
    %p331 = scmp.ne.s32.totalorder %s314, %s330
    %p332 = scmp.eq.s32.totalorder %s30, 0
    %p333 = por %p331, %p332
    %s334 = ssub.s32 %s24, %s31
    %p335 = scmp.eq.s32.totalorder %s334, 0
    %s337 = sadd.s32 %s336, 1
    %s338 = scalar_select %p335, %s336, %s337
    %p341 = pneg %p335
    %p342 = scmp.eq.s32.totalorder %s24, 1
    %p343 = por %p341, %p342
    %p344 = scmp.ne.s32.totalorder %s336, %s339
    %p345 = scmp.eq.s32.totalorder %s24, 0
    %p346 = por %p344, %p345
    %p347 = scmp.ne.s32.totalorder %s336, %s339
    %p348 = scmp.eq.s32.totalorder %s29, 1
    %p349 = por %p347, %p348
    %p350 = scmp.ne.s32.totalorder %s339, %s340
    %p351 = scmp.eq.s32.totalorder %s29, 0
    %p352 = por %p350, %p351
    %p353 = scmp.ne.s32.totalorder %s339, %s340
    %p354 = scmp.eq.s32.totalorder %s30, 1
    %p355 = por %p353, %p354
    %p357 = scmp.ne.s32.totalorder %s340, %s356
    %p358 = scmp.eq.s32.totalorder %s30, 0
    %p359 = por %p357, %p358
    %s360 = ssub.s32 %s24, %s31
    %p361 = scmp.eq.s32.totalorder %s360, 0
    %s363 = sadd.s32 %s362, 1
    %s364 = scalar_select %p361, %s362, %s363
    %p367 = pneg %p361
    %p368 = scmp.eq.s32.totalorder %s24, 1
    %p369 = por %p367, %p368
    %p370 = scmp.ne.s32.totalorder %s362, %s365
    %p371 = scmp.eq.s32.totalorder %s24, 0
    %p372 = por %p370, %p371
    %p373 = scmp.ne.s32.totalorder %s362, %s365
    %p374 = scmp.eq.s32.totalorder %s29, 1
    %p375 = por %p373, %p374
    %p376 = scmp.ne.s32.totalorder %s365, %s366
    %p377 = scmp.eq.s32.totalorder %s29, 0
    %p378 = por %p376, %p377
    %p379 = scmp.ne.s32.totalorder %s365, %s366
    %p380 = scmp.eq.s32.totalorder %s30, 1
    %p381 = por %p379, %p380
    %p383 = scmp.ne.s32.totalorder %s366, %s382
    %p384 = scmp.eq.s32.totalorder %s30, 0
    %p385 = por %p383, %p384
    %s387 = sadd.s32 %s386, 1
    %p390 = scmp.eq.s32.totalorder %s24, 1
    %p391 = scmp.ne.s32.totalorder %s386, %s388
    %p392 = scmp.eq.s32.totalorder %s24, 0
    %p393 = por %p391, %p392
    %p394 = scmp.ne.s32.totalorder %s386, %s388
    %p395 = scmp.eq.s32.totalorder %s29, 1
    %p396 = por %p394, %p395
    %p397 = scmp.ne.s32.totalorder %s388, %s389
    %p398 = scmp.eq.s32.totalorder %s29, 0
    %p399 = por %p397, %p398
    %p400 = scmp.ne.s32.totalorder %s388, %s389
    %p401 = scmp.eq.s32.totalorder %s30, 1
    %p402 = por %p400, %p401
    %p404 = scmp.ne.s32.totalorder %s389, %s403
    %p405 = scmp.eq.s32.totalorder %s30, 0
    %p406 = por %p404, %p405
    %s408 = sadd.s32 %s407, 1
    %p411 = scmp.eq.s32.totalorder %s24, 1
    %p412 = scmp.ne.s32.totalorder %s407, %s409
    %p413 = scmp.eq.s32.totalorder %s24, 0
    %p414 = por %p412, %p413
    %p415 = scmp.ne.s32.totalorder %s407, %s409
    %p416 = scmp.eq.s32.totalorder %s29, 1
    %p417 = por %p415, %p416
    %p418 = scmp.ne.s32.totalorder %s409, %s410
    %p419 = scmp.eq.s32.totalorder %s29, 0
    %p420 = por %p418, %p419
    %p421 = scmp.ne.s32.totalorder %s409, %s410
    %p422 = scmp.eq.s32.totalorder %s30, 1
    %p423 = por %p421, %p422
    %p425 = scmp.ne.s32.totalorder %s410, %s424
    %p426 = scmp.eq.s32.totalorder %s30, 0
    %p427 = por %p425, %p426
    %s429 = sadd.s32 %s428, 1
    %p432 = scmp.eq.s32.totalorder %s24, 1
    %p433 = scmp.ne.s32.totalorder %s428, %s430
    %p434 = scmp.eq.s32.totalorder %s24, 0
    %p435 = por %p433, %p434
    %p436 = scmp.ne.s32.totalorder %s428, %s430
    %p437 = scmp.eq.s32.totalorder %s29, 1
    %p438 = por %p436, %p437
    %p439 = scmp.ne.s32.totalorder %s430, %s431
    %p440 = scmp.eq.s32.totalorder %s29, 0
    %p441 = por %p439, %p440
    %p442 = scmp.ne.s32.totalorder %s430, %s431
    %p443 = scmp.eq.s32.totalorder %s30, 1
    %p444 = por %p442, %p443
    %p446 = scmp.ne.s32.totalorder %s431, %s445
    %p447 = scmp.eq.s32.totalorder %s30, 0
    %p448 = por %p446, %p447
    %p449 = scmp.le.s32.totalorder 1, %s24
    %p450 = scmp.lt.s32.totalorder %s24, 3
    %p451 = pnand %p449, %p450
    %p452 = pneg %p451
    // Predicated region
    $region9: #{deepcharge_irt_forward.1} parent=5 // pred_check
      _
    $region10: #{deepcharge_irt_forward.1} parent=5 // pred_check_branch
      %454 = sbr.rel (%p451) target = $region12
    $region11: #{deepcharge_irt_forward.1} parent=5 // pred_region
      %s455 = ssub.s32 %s24, 1
      // Predicated region
      $region13: #{deepcharge_irt_forward.1} parent=11 // pred_check
        %p456 = pneg %p45
      $region14: #{deepcharge_irt_forward.1} parent=11 // pred_check_branch
        %458 = sbr.rel (%p456) target = $region16
      $region15: #{deepcharge_irt_forward.1} parent=11 // pred_region
        _
      $region16: #{deepcharge_irt_forward.1} parent=11 // pred_fallthru
        _
      // Predicated region
      $region17: #{deepcharge_irt_forward.1} parent=11 // pred_check
        %p459 = pneg %p66
      $region18: #{deepcharge_irt_forward.1} parent=11 // pred_check_branch
        %461 = sbr.rel (%p459) target = $region20
      $region19: #{deepcharge_irt_forward.1} parent=11 // pred_region
        _
      $region20: #{deepcharge_irt_forward.1} parent=11 // pred_fallthru
        _
      // Predicated region
      $region21: #{deepcharge_irt_forward.1} parent=11 // pred_check
        %p462 = pneg %p399
      $region22: #{deepcharge_irt_forward.1} parent=11 // pred_check_branch
        %464 = sbr.rel (%p462) target = $region24
      $region23: #{deepcharge_irt_forward.1} parent=11 // pred_region
        _
      $region24: #{deepcharge_irt_forward.1} parent=11 // pred_fallthru
        _
      // Predicated region
      $region25: #{deepcharge_irt_forward.1} parent=11 // pred_check
        %p465 = pneg %p420
      $region26: #{deepcharge_irt_forward.1} parent=11 // pred_check_branch
        %467 = sbr.rel (%p465) target = $region28
      $region27: #{deepcharge_irt_forward.1} parent=11 // pred_region
        _
      $region28: #{deepcharge_irt_forward.1} parent=11 // pred_fallthru
        _
    $region12: #{deepcharge_irt_forward.1} parent=5 // pred_fallthru
      _
    %p468 = scmp.lt.s32.totalorder %s24, 2
    // Predicated region
    $region29: #{deepcharge_irt_forward.1} parent=5 // pred_check
      %p469 = pneg %p468
    $region30: #{deepcharge_irt_forward.1} parent=5 // pred_check_branch
      %471 = sbr.rel (%p469) target = $region32
    $region31: #{deepcharge_irt_forward.1} parent=5 // pred_region
      // Predicated region
      $region33: #{deepcharge_irt_forward.1} parent=31 // pred_check
        %p472 = pneg %p86
      $region34: #{deepcharge_irt_forward.1} parent=31 // pred_check_branch
        %474 = sbr.rel (%p472) target = $region36
      $region35: #{deepcharge_irt_forward.1} parent=31 // pred_region
        %p475 = scmp.lt.s32.totalorder %s24, 1
        %s476 = scalar_select %p475, %s24, 1
        %s477 = smul.addr %s476, 4
        %s478 = smul.addr %s477, 4
        %s479 = scalar_lea.vmem %s2, %s478
      $region36: #{deepcharge_irt_forward.1} parent=31 // pred_fallthru
        _
      // Predicated region
      $region37: #{deepcharge_irt_forward.1} parent=31 // pred_check
        %p480 = pneg %p112
      $region38: #{deepcharge_irt_forward.1} parent=31 // pred_check_branch
        %482 = sbr.rel (%p480) target = $region40
      $region39: #{deepcharge_irt_forward.1} parent=31 // pred_region
        %p483 = scmp.lt.s32.totalorder %s24, 1
        %s484 = scalar_select %p483, %s24, 1
        %s485 = scalar_lea.vmem %s3, %s484
      $region40: #{deepcharge_irt_forward.1} parent=31 // pred_fallthru
        _
      // Predicated region
      $region41: #{deepcharge_irt_forward.1} parent=31 // pred_check
        %p486 = pneg %p138
      $region42: #{deepcharge_irt_forward.1} parent=31 // pred_check_branch
        %488 = sbr.rel (%p486) target = $region44
      $region43: #{deepcharge_irt_forward.1} parent=31 // pred_region
        %p489 = scmp.lt.s32.totalorder %s24, 1
        %s490 = scalar_select %p489, %s24, 1
        %s491 = smul.addr %s490, 4
        %s492 = smul.addr %s491, 4
        %s493 = scalar_lea.vmem %s4, %s492
      $region44: #{deepcharge_irt_forward.1} parent=31 // pred_fallthru
        _
      // Predicated region
      $region45: #{deepcharge_irt_forward.1} parent=31 // pred_check
        %p494 = pneg %p164
      $region46: #{deepcharge_irt_forward.1} parent=31 // pred_check_branch
        %496 = sbr.rel (%p494) target = $region48
      $region47: #{deepcharge_irt_forward.1} parent=31 // pred_region
        %p497 = scmp.lt.s32.totalorder %s24, 1
        %s498 = scalar_select %p497, %s24, 1
        %s499 = scalar_lea.vmem %s5, %s498
      $region48: #{deepcharge_irt_forward.1} parent=31 // pred_fallthru
        _
      // Predicated region
      $region49: #{deepcharge_irt_forward.1} parent=31 // pred_check
        %p500 = pneg %p190
      $region50: #{deepcharge_irt_forward.1} parent=31 // pred_check_branch
        %502 = sbr.rel (%p500) target = $region52
      $region51: #{deepcharge_irt_forward.1} parent=31 // pred_region
        %p503 = scmp.lt.s32.totalorder %s24, 1
        %s504 = scalar_select %p503, %s24, 1
        %s505 = scalar_lea.vmem %s6, %s504
      $region52: #{deepcharge_irt_forward.1} parent=31 // pred_fallthru
        _
      // Predicated region
      $region53: #{deepcharge_irt_forward.1} parent=31 // pred_check
        %p506 = pneg %p216
      $region54: #{deepcharge_irt_forward.1} parent=31 // pred_check_branch
        %508 = sbr.rel (%p506) target = $region56
      $region55: #{deepcharge_irt_forward.1} parent=31 // pred_region
        %p509 = scmp.lt.s32.totalorder %s24, 1
        %s510 = scalar_select %p509, %s24, 1
        %s511 = scalar_lea.vmem %s7, %s510
      $region56: #{deepcharge_irt_forward.1} parent=31 // pred_fallthru
        _
      // Predicated region
      $region57: #{deepcharge_irt_forward.1} parent=31 // pred_check
        %p512 = pneg %p242
      $region58: #{deepcharge_irt_forward.1} parent=31 // pred_check_branch
        %514 = sbr.rel (%p512) target = $region60
      $region59: #{deepcharge_irt_forward.1} parent=31 // pred_region
        %p515 = scmp.lt.s32.totalorder %s24, 1
        %s516 = scalar_select %p515, %s24, 1
        %s517 = scalar_lea.vmem %s8, %s516
      $region60: #{deepcharge_irt_forward.1} parent=31 // pred_fallthru
        _
      // Predicated region
      $region61: #{deepcharge_irt_forward.1} parent=31 // pred_check
        %p518 = pneg %p268
      $region62: #{deepcharge_irt_forward.1} parent=31 // pred_check_branch
        %520 = sbr.rel (%p518) target = $region64
      $region63: #{deepcharge_irt_forward.1} parent=31 // pred_region
        %p521 = scmp.lt.s32.totalorder %s24, 1
        %s522 = scalar_select %p521, %s24, 1
        %s523 = scalar_lea.vmem %s9, %s522
      $region64: #{deepcharge_irt_forward.1} parent=31 // pred_fallthru
        _
      // Predicated region
      $region65: #{deepcharge_irt_forward.1} parent=31 // pred_check
        %p524 = pneg %p294
      $region66: #{deepcharge_irt_forward.1} parent=31 // pred_check_branch
        %526 = sbr.rel (%p524) target = $region68
      $region67: #{deepcharge_irt_forward.1} parent=31 // pred_region
        %p527 = scmp.lt.s32.totalorder %s24, 1
        %s528 = scalar_select %p527, %s24, 1
        %s529 = smul.addr %s528, 64
        %s530 = smul.addr %s529, 4
        %s531 = scalar_lea.vmem %s10, %s530
      $region68: #{deepcharge_irt_forward.1} parent=31 // pred_fallthru
        _
      // Predicated region
      $region69: #{deepcharge_irt_forward.1} parent=31 // pred_check
        %p532 = pneg %p320
      $region70: #{deepcharge_irt_forward.1} parent=31 // pred_check_branch
        %534 = sbr.rel (%p532) target = $region72
      $region71: #{deepcharge_irt_forward.1} parent=31 // pred_region
        %p535 = scmp.lt.s32.totalorder %s24, 1
        %s536 = scalar_select %p535, %s24, 1
        %s537 = smul.addr %s536, 16
        %s538 = scalar_lea.vmem %s11, %s537
      $region72: #{deepcharge_irt_forward.1} parent=31 // pred_fallthru
        _
      // Predicated region
      $region73: #{deepcharge_irt_forward.1} parent=31 // pred_check
        %p539 = pneg %p346
      $region74: #{deepcharge_irt_forward.1} parent=31 // pred_check_branch
        %541 = sbr.rel (%p539) target = $region76
      $region75: #{deepcharge_irt_forward.1} parent=31 // pred_region
        %p542 = scmp.lt.s32.totalorder %s24, 1
        %s543 = scalar_select %p542, %s24, 1
        %s544 = smul.addr %s543, 256
        %s545 = smul.addr %s544, 4
        %s546 = scalar_lea.vmem %s12, %s545
      $region76: #{deepcharge_irt_forward.1} parent=31 // pred_fallthru
        _
      // Predicated region
      $region77: #{deepcharge_irt_forward.1} parent=31 // pred_check
        %p547 = pneg %p372
      $region78: #{deepcharge_irt_forward.1} parent=31 // pred_check_branch
        %549 = sbr.rel (%p547) target = $region80
      $region79: #{deepcharge_irt_forward.1} parent=31 // pred_region
        %p550 = scmp.lt.s32.totalorder %s24, 1
        %s551 = scalar_select %p550, %s24, 1
        %s552 = scalar_lea.vmem %s13, %s551
      $region80: #{deepcharge_irt_forward.1} parent=31 // pred_fallthru
        _
    $region32: #{deepcharge_irt_forward.1} parent=5 // pred_fallthru
      _
    %p553 = scmp.le.s32.totalorder 1, %s24
    %p554 = scmp.lt.s32.totalorder %s24, 3
    %p555 = pnand %p553, %p554
    %p556 = pneg %p555
    // Predicated region
    $region81: #{deepcharge_irt_forward.1} parent=5 // pred_check
      _
    $region82: #{deepcharge_irt_forward.1} parent=5 // pred_check_branch
      %558 = sbr.rel (%p555) target = $region84
    $region83: #{deepcharge_irt_forward.1} parent=5 // pred_region
      %s559 = ssub.s32 %s24, 1
      %p560 = pneg %p45
      %p561 = pneg %p42
      %p562 = pneg %p66
      %p563 = pneg %p63
      %p564 = scmp.lt.s32.totalorder %s29, 1
      %s565 = scalar_select %p564, %s29, 1
      %s566 = smul.addr %s565, 4
      %s567 = smul.addr %s566, 4
      %s568 = scalar_lea.vmem %s2, %s567
      %p569 = pneg %p92
      %p570 = pneg %p89
      %p571 = scmp.lt.s32.totalorder %s29, 1
      %s572 = scalar_select %p571, %s29, 1
      %s573 = scalar_lea.vmem %s3, %s572
      %p574 = pneg %p118
      %p575 = pneg %p115
      %p576 = scmp.lt.s32.totalorder %s29, 1
      %s577 = scalar_select %p576, %s29, 1
      %s578 = smul.addr %s577, 4
      %s579 = smul.addr %s578, 4
      %s580 = scalar_lea.vmem %s4, %s579
      %p581 = pneg %p144
      %p582 = pneg %p141
      %p583 = scmp.lt.s32.totalorder %s29, 1
      %s584 = scalar_select %p583, %s29, 1
      %s585 = scalar_lea.vmem %s5, %s584
      %p586 = pneg %p170
      %p587 = pneg %p167
      %p588 = scmp.lt.s32.totalorder %s29, 1
      %s589 = scalar_select %p588, %s29, 1
      %s590 = scalar_lea.vmem %s6, %s589
      %p591 = pneg %p196
      %p592 = pneg %p193
      %p593 = scmp.lt.s32.totalorder %s29, 1
      %s594 = scalar_select %p593, %s29, 1
      %s595 = scalar_lea.vmem %s7, %s594
      %p596 = pneg %p222
      %p597 = pneg %p219
      %p598 = scmp.lt.s32.totalorder %s29, 1
      %s599 = scalar_select %p598, %s29, 1
      %s600 = scalar_lea.vmem %s8, %s599
      %p601 = pneg %p248
      %p602 = pneg %p245
      %p603 = scmp.lt.s32.totalorder %s29, 1
      %s604 = scalar_select %p603, %s29, 1
      %s605 = scalar_lea.vmem %s9, %s604
      %p606 = pneg %p274
      %p607 = pneg %p271
      %p608 = scmp.lt.s32.totalorder %s29, 1
      %s609 = scalar_select %p608, %s29, 1
      %s610 = smul.addr %s609, 64
      %s611 = smul.addr %s610, 4
      %s612 = scalar_lea.vmem %s10, %s611
      %p613 = pneg %p300
      %p614 = pneg %p297
      %p615 = scmp.lt.s32.totalorder %s29, 1
      %s616 = scalar_select %p615, %s29, 1
      %s617 = smul.addr %s616, 16
      %s618 = scalar_lea.vmem %s11, %s617
      %p619 = pneg %p326
      %p620 = pneg %p323
      %p621 = scmp.lt.s32.totalorder %s29, 1
      %s622 = scalar_select %p621, %s29, 1
      %s623 = smul.addr %s622, 256
      %s624 = smul.addr %s623, 4
      %s625 = scalar_lea.vmem %s12, %s624
      %p626 = pneg %p352
      %p627 = pneg %p349
      %p628 = scmp.lt.s32.totalorder %s29, 1
      %s629 = scalar_select %p628, %s29, 1
      %s630 = scalar_lea.vmem %s13, %s629
      %p631 = pneg %p378
      %p632 = pneg %p375
      %p633 = pneg %p399
      %p634 = pneg %p396
      %p635 = pneg %p420
      %p636 = pneg %p417
      %p637 = pneg %p441
      %p638 = pneg %p438
      %p639 = scmp.lt.s32.totalorder %s29, 1
      %s640 = scalar_select %p639, %s29, 1
      %s641 = smul.addr %s640, 4
      %s642 = smul.addr %s641, 4
      %s643 = scalar_lea.vmem %s2, %s642
      %p644 = scmp.lt.s32.totalorder %s29, 1
      %s645 = scalar_select %p644, %s29, 1
      %s646 = scalar_lea.vmem %s3, %s645
      %p647 = scmp.lt.s32.totalorder %s29, 1
      %s648 = scalar_select %p647, %s29, 1
      %s649 = smul.addr %s648, 4
      %s650 = smul.addr %s649, 4
      %s651 = scalar_lea.vmem %s4, %s650
      %p652 = scmp.lt.s32.totalorder %s29, 1
      %s653 = scalar_select %p652, %s29, 1
      %s654 = scalar_lea.vmem %s5, %s653
      %p655 = scmp.lt.s32.totalorder %s29, 1
      %s656 = scalar_select %p655, %s29, 1
      %s657 = scalar_lea.vmem %s6, %s656
      %p658 = scmp.lt.s32.totalorder %s29, 1
      %s659 = scalar_select %p658, %s29, 1
      %s660 = scalar_lea.vmem %s7, %s659
      %p661 = scmp.lt.s32.totalorder %s29, 1
      %s662 = scalar_select %p661, %s29, 1
      %s663 = scalar_lea.vmem %s8, %s662
      %p664 = scmp.lt.s32.totalorder %s29, 1
      %s665 = scalar_select %p664, %s29, 1
      %s666 = scalar_lea.vmem %s9, %s665
      %p667 = scmp.lt.s32.totalorder %s29, 1
      %s668 = scalar_select %p667, %s29, 1
      %s669 = smul.addr %s668, 64
      %s670 = smul.addr %s669, 4
      %s671 = scalar_lea.vmem %s10, %s670
      %p672 = scmp.lt.s32.totalorder %s29, 1
      %s673 = scalar_select %p672, %s29, 1
      %s674 = smul.addr %s673, 16
      %s675 = scalar_lea.vmem %s11, %s674
      %p676 = scmp.lt.s32.totalorder %s29, 1
      %s677 = scalar_select %p676, %s29, 1
      %s678 = smul.addr %s677, 256
      %s679 = smul.addr %s678, 4
      %s680 = scalar_lea.vmem %s12, %s679
      %p681 = scmp.lt.s32.totalorder %s29, 1
      %s682 = scalar_select %p681, %s29, 1
      %s683 = scalar_lea.vmem %s13, %s682
      %p685 = scmp.eq.s32.totalorder %s29, 0
      // Predicated region
      $region85: #{deepcharge_irt_forward.1} parent=83 // pred_check
        %p686 = pneg %p685
      $region86: #{deepcharge_irt_forward.1} parent=83 // pred_check_branch
        %688 = sbr.rel (%p686) target = $region88
      $region87: #{deepcharge_irt_forward.1} parent=83 // pred_region
        %v689 = vld [vmem:[%s0] sm:$0xff]
        %v690 = vld [vmem:[%s0 + $0x8] sm:$0xff]
        %vm691 = vcmask 261120
        %692 = vst.msk [vmem:[#allocation2] sm:$0xff] %vm691, %v689
        %693 = vst.msk [vmem:[#allocation2 + $0x8] sm:$0xff] %vm691, %v690
      $region88: #{deepcharge_irt_forward.1} parent=83 // pred_fallthru
        _
      %v694 = vld [vmem:[#allocation2] sm:$0xff]
      %v695 = vld [vmem:[#allocation2 + $0x8] sm:$0xff]
      %v696 = vpack.c.bf16 %v695, %v694
      %v697 = vld [vmem:[%s643] sm:$0xf]
      %v698 = vld [vmem:[%s643 + $0x4] sm:$0xf]
      %v699 = vld [vmem:[%s643 + $0x8] sm:$0xf]
      %v700 = vld [vmem:[%s643 + $0xc] sm:$0xf]
      %v701 = vld [vmem:[%s646] sm:$0x1]
      %v703 = vperm.slane %v701, 0
      %v709 = vunpack.c.l.b16 %v697
      %v710 = vunpack.c.l.b16 %v698
      %v711 = vunpack.c.l.b16 %v699
      %v712 = vunpack.c.l.b16 %v700
      %v713 = vpack.c.b16 %v710, %v709
      %v714 = vpack.c.b16 %v712, %v711
      %vm717 = vcmask 261120
      %v719 = vsel %vm717, %v696, 0
      %721 = vmatpush.bf16.msra.mxu0 0
      %722 = vmatpush.bf16.msra.mxu0 0
      %723 = vmatpush.bf16.msra.mxu0 0
      %724 = vmatpush.bf16.msra.mxu0 0
      %725 = vmatpush.bf16.msra.mxu0 0
      %726 = vmatpush.bf16.msra.mxu0 0
      %727 = vmatpush.bf16.msra.mxu0 %v714
      %728 = vmatpush.bf16.msra.mxu0 %v713
      %729 = vmatmul.bf16.gmra.mxu0 %v719
      %v730 = vpop.f32.mrf.mxu0
      %v731 = vadd.f32 %v703, %v730
      %v732 = vpop.f32.mrf.mxu0
      %v733 = vadd.f32 %v703, %v732
      %734 = vdwg.mxu0
      %737 = vrot.lane.b32.xlu0 %v731, 120
      %v738 = vpop.permute.xlu0 %737
      %739 = vrot.lane.b32.xlu0 %v733, 120
      %v740 = vpop.permute.xlu0 %739
      %741 = vrot.lane.b32.xlu0 %v731, 112
      %v742 = vpop.permute.xlu0 %741
      %743 = vrot.lane.b32.xlu0 %v733, 112
      %v744 = vpop.permute.xlu0 %743
      %745 = vrot.lane.b32.xlu0 %v731, 104
      %v746 = vpop.permute.xlu0 %745
      %747 = vrot.lane.b32.xlu0 %v733, 104
      %v748 = vpop.permute.xlu0 %747
      %v749 = vld [vmem:[%s1] sm:$0x1]
      %v750 = vld [vmem:[%s1 + $0x1] sm:$0x1]
      %v751 = vld [vmem:[%s1 + $0x2] sm:$0x1]
      %v752 = vld [vmem:[%s1 + $0x3] sm:$0x1]
      %v753 = vld [vmem:[%s1 + $0x4] sm:$0x1]
      %v754 = vld [vmem:[%s1 + $0x5] sm:$0x1]
      %v755 = vld [vmem:[%s1 + $0x6] sm:$0x1]
      %v756 = vld [vmem:[%s1 + $0x7] sm:$0x1]
      %v765 = vperm.slane %v749, 0
      %v766 = vperm.slane %v750, 0
      %v767 = vperm.slane %v751, 0
      %v768 = vperm.slane %v752, 0
      %v769 = vperm.slane %v753, 0
      %v770 = vperm.slane %v754, 0
      %v771 = vperm.slane %v755, 0
      %v772 = vperm.slane %v756, 0
      %781 = vrot.lane.b32.xlu0 %v731, 96
      %v782 = vpop.permute.xlu0 %781
      %vm783 = vcmask 64512
      %v784 = vsel %vm783, %v731, 0
      %v786 = vsel %vm783, %v782, 0
      %788 = vmatpush.xpose.msra.mxu0 0.0
      %789 = vmatpush.xpose.msra.mxu0 0.0
      %790 = vmatpush.xpose.msra.mxu0 0.0
      %791 = vmatpush.xpose.msra.mxu0 0.0
      %792 = vmatpush.xpose.msra.mxu0 0.0
      %793 = vmatpush.xpose.msra.mxu0 0.0
      %794 = vmatpush.xpose.msra.mxu0 0.0
      %795 = vmatpush.xpose.msra.mxu0 0.0
      %796 = vmatpush.xpose.msra.mxu0 0.0
      %797 = vmatpush.xpose.msra.mxu0 0.0
      %798 = vmatpush.xpose.msra.mxu0 0.0
      %799 = vmatpush.xpose.msra.mxu0 0.0
      %800 = vmatpush.xpose.msra.mxu0 0.0
      %801 = vmatpush.xpose.msra.mxu0 0.0
      %802 = vmatpush.xpose.msra.mxu0 0.0
      %803 = vmatpush.xpose.msra.mxu0 %v786
      %804 = vmatmul.f32.gmra.mxu0 %v784
      %v805 = vpop.f32.mrf.mxu0
      %v806 = vadd.f32 %v765, %v805
      %807 = vdwg.mxu0
      %808 = vrot.lane.b32.xlu0 %v733, 96
      %v809 = vpop.permute.xlu0 %808
      %v810 = vsel %vm783, %v733, 0
      %v812 = vsel %vm783, %v809, 0
      %814 = vmatpush.xpose.msra.mxu0 0.0
      %815 = vmatpush.xpose.msra.mxu0 0.0
      %816 = vmatpush.xpose.msra.mxu0 0.0
      %817 = vmatpush.xpose.msra.mxu0 0.0
      %818 = vmatpush.xpose.msra.mxu0 0.0
      %819 = vmatpush.xpose.msra.mxu0 0.0
      %820 = vmatpush.xpose.msra.mxu0 0.0
      %821 = vmatpush.xpose.msra.mxu0 0.0
      %822 = vmatpush.xpose.msra.mxu0 0.0
      %823 = vmatpush.xpose.msra.mxu0 0.0
      %824 = vmatpush.xpose.msra.mxu0 0.0
      %825 = vmatpush.xpose.msra.mxu0 0.0
      %826 = vmatpush.xpose.msra.mxu0 0.0
      %827 = vmatpush.xpose.msra.mxu0 0.0
      %828 = vmatpush.xpose.msra.mxu0 0.0
      %829 = vmatpush.xpose.msra.mxu0 %v812
      %830 = vmatmul.f32.gmra.mxu0 %v810
      %v831 = vpop.f32.mrf.mxu0
      %v832 = vadd.f32 %v766, %v831
      %833 = vdwg.mxu0
      %834 = vrot.lane.b32.xlu0 %v738, 96
      %v835 = vpop.permute.xlu0 %834
      %v836 = vsel %vm783, %v738, 0
      %v838 = vsel %vm783, %v835, 0
      %840 = vmatpush.xpose.msra.mxu0 0.0
      %841 = vmatpush.xpose.msra.mxu0 0.0
      %842 = vmatpush.xpose.msra.mxu0 0.0
      %843 = vmatpush.xpose.msra.mxu0 0.0
      %844 = vmatpush.xpose.msra.mxu0 0.0
      %845 = vmatpush.xpose.msra.mxu0 0.0
      %846 = vmatpush.xpose.msra.mxu0 0.0
      %847 = vmatpush.xpose.msra.mxu0 0.0
      %848 = vmatpush.xpose.msra.mxu0 0.0
      %849 = vmatpush.xpose.msra.mxu0 0.0
      %850 = vmatpush.xpose.msra.mxu0 0.0
      %851 = vmatpush.xpose.msra.mxu0 0.0
      %852 = vmatpush.xpose.msra.mxu0 0.0
      %853 = vmatpush.xpose.msra.mxu0 0.0
      %854 = vmatpush.xpose.msra.mxu0 0.0
      %855 = vmatpush.xpose.msra.mxu0 %v838
      %856 = vmatmul.f32.gmra.mxu0 %v836
      %v857 = vpop.f32.mrf.mxu0
      %v858 = vadd.f32 %v767, %v857
      %859 = vdwg.mxu0
      %860 = vrot.lane.b32.xlu0 %v740, 96
      %v861 = vpop.permute.xlu0 %860
      %v862 = vsel %vm783, %v740, 0
      %v864 = vsel %vm783, %v861, 0
      %866 = vmatpush.xpose.msra.mxu0 0.0
      %867 = vmatpush.xpose.msra.mxu0 0.0
      %868 = vmatpush.xpose.msra.mxu0 0.0
      %869 = vmatpush.xpose.msra.mxu0 0.0
      %870 = vmatpush.xpose.msra.mxu0 0.0
      %871 = vmatpush.xpose.msra.mxu0 0.0
      %872 = vmatpush.xpose.msra.mxu0 0.0
      %873 = vmatpush.xpose.msra.mxu0 0.0
      %874 = vmatpush.xpose.msra.mxu0 0.0
      %875 = vmatpush.xpose.msra.mxu0 0.0
      %876 = vmatpush.xpose.msra.mxu0 0.0
      %877 = vmatpush.xpose.msra.mxu0 0.0
      %878 = vmatpush.xpose.msra.mxu0 0.0
      %879 = vmatpush.xpose.msra.mxu0 0.0
      %880 = vmatpush.xpose.msra.mxu0 0.0
      %881 = vmatpush.xpose.msra.mxu0 %v864
      %882 = vmatmul.f32.gmra.mxu0 %v862
      %v883 = vpop.f32.mrf.mxu0
      %v884 = vadd.f32 %v768, %v883
      %885 = vdwg.mxu0
      %886 = vrot.lane.b32.xlu0 %v742, 96
      %v887 = vpop.permute.xlu0 %886
      %v888 = vsel %vm783, %v742, 0
      %v890 = vsel %vm783, %v887, 0
      %892 = vmatpush.xpose.msra.mxu0 0.0
      %893 = vmatpush.xpose.msra.mxu0 0.0
      %894 = vmatpush.xpose.msra.mxu0 0.0
      %895 = vmatpush.xpose.msra.mxu0 0.0
      %896 = vmatpush.xpose.msra.mxu0 0.0
      %897 = vmatpush.xpose.msra.mxu0 0.0
      %898 = vmatpush.xpose.msra.mxu0 0.0
      %899 = vmatpush.xpose.msra.mxu0 0.0
      %900 = vmatpush.xpose.msra.mxu0 0.0
      %901 = vmatpush.xpose.msra.mxu0 0.0
      %902 = vmatpush.xpose.msra.mxu0 0.0
      %903 = vmatpush.xpose.msra.mxu0 0.0
      %904 = vmatpush.xpose.msra.mxu0 0.0
      %905 = vmatpush.xpose.msra.mxu0 0.0
      %906 = vmatpush.xpose.msra.mxu0 0.0
      %907 = vmatpush.xpose.msra.mxu0 %v890
      %908 = vmatmul.f32.gmra.mxu0 %v888
      %v909 = vpop.f32.mrf.mxu0
      %v910 = vadd.f32 %v769, %v909
      %911 = vdwg.mxu0
      %912 = vrot.lane.b32.xlu0 %v744, 96
      %v913 = vpop.permute.xlu0 %912
      %v914 = vsel %vm783, %v744, 0
      %v916 = vsel %vm783, %v913, 0
      %918 = vmatpush.xpose.msra.mxu0 0.0
      %919 = vmatpush.xpose.msra.mxu0 0.0
      %920 = vmatpush.xpose.msra.mxu0 0.0
      %921 = vmatpush.xpose.msra.mxu0 0.0
      %922 = vmatpush.xpose.msra.mxu0 0.0
      %923 = vmatpush.xpose.msra.mxu0 0.0
      %924 = vmatpush.xpose.msra.mxu0 0.0
      %925 = vmatpush.xpose.msra.mxu0 0.0
      %926 = vmatpush.xpose.msra.mxu0 0.0
      %927 = vmatpush.xpose.msra.mxu0 0.0
      %928 = vmatpush.xpose.msra.mxu0 0.0
      %929 = vmatpush.xpose.msra.mxu0 0.0
      %930 = vmatpush.xpose.msra.mxu0 0.0
      %931 = vmatpush.xpose.msra.mxu0 0.0
      %932 = vmatpush.xpose.msra.mxu0 0.0
      %933 = vmatpush.xpose.msra.mxu0 %v916
      %934 = vmatmul.f32.gmra.mxu0 %v914
      %v935 = vpop.f32.mrf.mxu0
      %v936 = vadd.f32 %v770, %v935
      %937 = vdwg.mxu0
      %938 = vrot.lane.b32.xlu0 %v746, 96
      %v939 = vpop.permute.xlu0 %938
      %v940 = vsel %vm783, %v746, 0
      %v942 = vsel %vm783, %v939, 0
      %944 = vmatpush.xpose.msra.mxu0 0.0
      %945 = vmatpush.xpose.msra.mxu0 0.0
      %946 = vmatpush.xpose.msra.mxu0 0.0
      %947 = vmatpush.xpose.msra.mxu0 0.0
      %948 = vmatpush.xpose.msra.mxu0 0.0
      %949 = vmatpush.xpose.msra.mxu0 0.0
      %950 = vmatpush.xpose.msra.mxu0 0.0
      %951 = vmatpush.xpose.msra.mxu0 0.0
      %952 = vmatpush.xpose.msra.mxu0 0.0
      %953 = vmatpush.xpose.msra.mxu0 0.0
      %954 = vmatpush.xpose.msra.mxu0 0.0
      %955 = vmatpush.xpose.msra.mxu0 0.0
      %956 = vmatpush.xpose.msra.mxu0 0.0
      %957 = vmatpush.xpose.msra.mxu0 0.0
      %958 = vmatpush.xpose.msra.mxu0 0.0
      %959 = vmatpush.xpose.msra.mxu0 %v942
      %960 = vmatmul.f32.gmra.mxu0 %v940
      %v961 = vpop.f32.mrf.mxu0
      %v962 = vadd.f32 %v771, %v961
      %963 = vdwg.mxu0
      %964 = vrot.lane.b32.xlu0 %v748, 96
      %v965 = vpop.permute.xlu0 %964
      %v966 = vsel %vm783, %v748, 0
      %v968 = vsel %vm783, %v965, 0
      %970 = vmatpush.xpose.msra.mxu0 0.0
      %971 = vmatpush.xpose.msra.mxu0 0.0
      %972 = vmatpush.xpose.msra.mxu0 0.0
      %973 = vmatpush.xpose.msra.mxu0 0.0
      %974 = vmatpush.xpose.msra.mxu0 0.0
      %975 = vmatpush.xpose.msra.mxu0 0.0
      %976 = vmatpush.xpose.msra.mxu0 0.0
      %977 = vmatpush.xpose.msra.mxu0 0.0
      %978 = vmatpush.xpose.msra.mxu0 0.0
      %979 = vmatpush.xpose.msra.mxu0 0.0
      %980 = vmatpush.xpose.msra.mxu0 0.0
      %981 = vmatpush.xpose.msra.mxu0 0.0
      %982 = vmatpush.xpose.msra.mxu0 0.0
      %983 = vmatpush.xpose.msra.mxu0 0.0
      %984 = vmatpush.xpose.msra.mxu0 0.0
      %985 = vmatpush.xpose.msra.mxu0 %v968
      %986 = vmatmul.f32.gmra.mxu0 %v966
      %v987 = vpop.f32.mrf.mxu0
      %v988 = vadd.f32 %v772, %v987
      %989 = vdwg.mxu0
      %v990 = vsel %vm783, %v806, -inf
      %991 = vmax.xlane.f32.xlu0 %v990
      %v992 = vpop.xlane.xlu0 %991
      %v993 = vsel %vm783, %v832, -inf
      %994 = vmax.xlane.f32.xlu0 %v993
      %v995 = vpop.xlane.xlu0 %994
      %v996 = vsel %vm783, %v858, -inf
      %997 = vmax.xlane.f32.xlu0 %v996
      %v998 = vpop.xlane.xlu0 %997
      %v999 = vsel %vm783, %v884, -inf
      %1000 = vmax.xlane.f32.xlu0 %v999
      %v1001 = vpop.xlane.xlu0 %1000
      %v1002 = vsel %vm783, %v910, -inf
      %1003 = vmax.xlane.f32.xlu0 %v1002
      %v1004 = vpop.xlane.xlu0 %1003
      %v1005 = vsel %vm783, %v936, -inf
      %1006 = vmax.xlane.f32.xlu0 %v1005
      %v1007 = vpop.xlane.xlu0 %1006
      %v1008 = vsel %vm783, %v962, -inf
      %1009 = vmax.xlane.f32.xlu0 %v1008
      %v1010 = vpop.xlane.xlu0 %1009
      %v1011 = vsel %vm783, %v988, -inf
      %1012 = vmax.xlane.f32.xlu0 %v1011
      %v1013 = vpop.xlane.xlu0 %1012
      %v1014 = vsub.f32 %v806, %v992
      %v1015 = vsub.f32 %v832, %v995
      %v1016 = vsub.f32 %v858, %v998
      %v1017 = vsub.f32 %v884, %v1001
      %v1018 = vsub.f32 %v910, %v1004
      %v1019 = vsub.f32 %v936, %v1007
      %v1020 = vsub.f32 %v962, %v1010
      %v1021 = vsub.f32 %v988, %v1013
      %v1022 = vmul.f32 %v1014, 1.442695
      %v1023 = vpow.pop %v1022
      %v1024 = vmul.f32 %v1015, 1.442695
      %v1025 = vpow.pop %v1024
      %v1026 = vmul.f32 %v1016, 1.442695
      %v1027 = vpow.pop %v1026
      %v1028 = vmul.f32 %v1017, 1.442695
      %v1029 = vpow.pop %v1028
      %v1030 = vmul.f32 %v1018, 1.442695
      %v1031 = vpow.pop %v1030
      %v1032 = vmul.f32 %v1019, 1.442695
      %v1033 = vpow.pop %v1032
      %v1034 = vmul.f32 %v1020, 1.442695
      %v1035 = vpow.pop %v1034
      %v1036 = vmul.f32 %v1021, 1.442695
      %v1037 = vpow.pop %v1036
      %v1038 = vsel %vm783, %v1023, 0.0
      %1039 = vadd.xlane.f32.xlu0 %v1038
      %v1040 = vpop.xlane.xlu0 %1039
      %v1041 = vsel %vm783, %v1025, 0.0
      %1042 = vadd.xlane.f32.xlu0 %v1041
      %v1043 = vpop.xlane.xlu0 %1042
      %v1044 = vsel %vm783, %v1027, 0.0
      %1045 = vadd.xlane.f32.xlu0 %v1044
      %v1046 = vpop.xlane.xlu0 %1045
      %v1047 = vsel %vm783, %v1029, 0.0
      %1048 = vadd.xlane.f32.xlu0 %v1047
      %v1049 = vpop.xlane.xlu0 %1048
      %v1050 = vsel %vm783, %v1031, 0.0
      %1051 = vadd.xlane.f32.xlu0 %v1050
      %v1052 = vpop.xlane.xlu0 %1051
      %v1053 = vsel %vm783, %v1033, 0.0
      %1054 = vadd.xlane.f32.xlu0 %v1053
      %v1055 = vpop.xlane.xlu0 %1054
      %v1056 = vsel %vm783, %v1035, 0.0
      %1057 = vadd.xlane.f32.xlu0 %v1056
      %v1058 = vpop.xlane.xlu0 %1057
      %v1059 = vsel %vm783, %v1037, 0.0
      %1060 = vadd.xlane.f32.xlu0 %v1059
      %v1061 = vpop.xlane.xlu0 %1060
      %v1062 = vrcp.pop %v1040
      %v1063 = vrcp.pop %v1043
      %v1064 = vrcp.pop %v1046
      %v1065 = vrcp.pop %v1049
      %v1066 = vrcp.pop %v1052
      %v1067 = vrcp.pop %v1055
      %v1068 = vrcp.pop %v1058
      %v1069 = vrcp.pop %v1061
      %v1070 = vmul.f32 %v1023, %v1062
      %v1071 = vmul.f32 %v1025, %v1063
      %v1072 = vmul.f32 %v1027, %v1064
      %v1073 = vmul.f32 %v1029, %v1065
      %v1074 = vmul.f32 %v1031, %v1066
      %v1075 = vmul.f32 %v1033, %v1067
      %v1076 = vmul.f32 %v1035, %v1068
      %v1077 = vmul.f32 %v1037, %v1069
      %1078 = vrot.lane.b32.xlu0 %v731, 64
      %v1079 = vpop.permute.xlu0 %1078
      %v1082 = vsel %vm783, %v1070, 0
      %1084 = vmatpush.msra.mxu0 0.0
      %1085 = vmatpush.msra.mxu0 0.0
      %1086 = vmatpush.msra.mxu0 0.0
      %1087 = vmatpush.msra.mxu0 0.0
      %1088 = vmatpush.msra.mxu0 0.0
      %1089 = vmatpush.msra.mxu0 0.0
      %1090 = vmatpush.msra.mxu0 0.0
      %1091 = vmatpush.msra.mxu0 0.0
      %1092 = vmatpush.msra.mxu0 0.0
      %1093 = vmatpush.msra.mxu0 0.0
      %1094 = vmatpush.msra.mxu0 0.0
      %1095 = vmatpush.msra.mxu0 0.0
      %1096 = vmatpush.msra.mxu0 0.0
      %1097 = vmatpush.msra.mxu0 0.0
      %1098 = vmatpush.msra.mxu0 0.0
      %1099 = vmatpush.msra.mxu0 %v1079
      %1100 = vmatmul.f32.gmra.mxu0 %v1082
      %v1101 = vpop.f32.mrf.mxu0
      %v1102 = vadd.f32 0.0, %v1101
      %1103 = vdwg.mxu0
      %1104 = vrot.lane.b32.xlu0 %v733, 64
      %v1105 = vpop.permute.xlu0 %1104
      %v1108 = vsel %vm783, %v1071, 0
      %1110 = vmatpush.msra.mxu0 0.0
      %1111 = vmatpush.msra.mxu0 0.0
      %1112 = vmatpush.msra.mxu0 0.0
      %1113 = vmatpush.msra.mxu0 0.0
      %1114 = vmatpush.msra.mxu0 0.0
      %1115 = vmatpush.msra.mxu0 0.0
      %1116 = vmatpush.msra.mxu0 0.0
      %1117 = vmatpush.msra.mxu0 0.0
      %1118 = vmatpush.msra.mxu0 0.0
      %1119 = vmatpush.msra.mxu0 0.0
      %1120 = vmatpush.msra.mxu0 0.0
      %1121 = vmatpush.msra.mxu0 0.0
      %1122 = vmatpush.msra.mxu0 0.0
      %1123 = vmatpush.msra.mxu0 0.0
      %1124 = vmatpush.msra.mxu0 0.0
      %1125 = vmatpush.msra.mxu0 %v1105
      %1126 = vmatmul.f32.gmra.mxu0 %v1108
      %v1127 = vpop.f32.mrf.mxu0
      %v1128 = vadd.f32 0.0, %v1127
      %1129 = vdwg.mxu0
      %1130 = vrot.lane.b32.xlu0 %v738, 64
      %v1131 = vpop.permute.xlu0 %1130
      %v1134 = vsel %vm783, %v1072, 0
      %1136 = vmatpush.msra.mxu0 0.0
      %1137 = vmatpush.msra.mxu0 0.0
      %1138 = vmatpush.msra.mxu0 0.0
      %1139 = vmatpush.msra.mxu0 0.0
      %1140 = vmatpush.msra.mxu0 0.0
      %1141 = vmatpush.msra.mxu0 0.0
      %1142 = vmatpush.msra.mxu0 0.0
      %1143 = vmatpush.msra.mxu0 0.0
      %1144 = vmatpush.msra.mxu0 0.0
      %1145 = vmatpush.msra.mxu0 0.0
      %1146 = vmatpush.msra.mxu0 0.0
      %1147 = vmatpush.msra.mxu0 0.0
      %1148 = vmatpush.msra.mxu0 0.0
      %1149 = vmatpush.msra.mxu0 0.0
      %1150 = vmatpush.msra.mxu0 0.0
      %1151 = vmatpush.msra.mxu0 %v1131
      %1152 = vmatmul.f32.gmra.mxu0 %v1134
      %v1153 = vpop.f32.mrf.mxu0
      %v1154 = vadd.f32 0.0, %v1153
      %1155 = vdwg.mxu0
      %1156 = vrot.lane.b32.xlu0 %v740, 64
      %v1157 = vpop.permute.xlu0 %1156
      %v1160 = vsel %vm783, %v1073, 0
      %1162 = vmatpush.msra.mxu0 0.0
      %1163 = vmatpush.msra.mxu0 0.0
      %1164 = vmatpush.msra.mxu0 0.0
      %1165 = vmatpush.msra.mxu0 0.0
      %1166 = vmatpush.msra.mxu0 0.0
      %1167 = vmatpush.msra.mxu0 0.0
      %1168 = vmatpush.msra.mxu0 0.0
      %1169 = vmatpush.msra.mxu0 0.0
      %1170 = vmatpush.msra.mxu0 0.0
      %1171 = vmatpush.msra.mxu0 0.0
      %1172 = vmatpush.msra.mxu0 0.0
      %1173 = vmatpush.msra.mxu0 0.0
      %1174 = vmatpush.msra.mxu0 0.0
      %1175 = vmatpush.msra.mxu0 0.0
      %1176 = vmatpush.msra.mxu0 0.0
      %1177 = vmatpush.msra.mxu0 %v1157
      %1178 = vmatmul.f32.gmra.mxu0 %v1160
      %v1179 = vpop.f32.mrf.mxu0
      %v1180 = vadd.f32 0.0, %v1179
      %1181 = vdwg.mxu0
      %1182 = vrot.lane.b32.xlu0 %v742, 64
      %v1183 = vpop.permute.xlu0 %1182
      %v1186 = vsel %vm783, %v1074, 0
      %1188 = vmatpush.msra.mxu0 0.0
      %1189 = vmatpush.msra.mxu0 0.0
      %1190 = vmatpush.msra.mxu0 0.0
      %1191 = vmatpush.msra.mxu0 0.0
      %1192 = vmatpush.msra.mxu0 0.0
      %1193 = vmatpush.msra.mxu0 0.0
      %1194 = vmatpush.msra.mxu0 0.0
      %1195 = vmatpush.msra.mxu0 0.0
      %1196 = vmatpush.msra.mxu0 0.0
      %1197 = vmatpush.msra.mxu0 0.0
      %1198 = vmatpush.msra.mxu0 0.0
      %1199 = vmatpush.msra.mxu0 0.0
      %1200 = vmatpush.msra.mxu0 0.0
      %1201 = vmatpush.msra.mxu0 0.0
      %1202 = vmatpush.msra.mxu0 0.0
      %1203 = vmatpush.msra.mxu0 %v1183
      %1204 = vmatmul.f32.gmra.mxu0 %v1186
      %v1205 = vpop.f32.mrf.mxu0
      %v1206 = vadd.f32 0.0, %v1205
      %1207 = vdwg.mxu0
      %1208 = vrot.lane.b32.xlu0 %v744, 64
      %v1209 = vpop.permute.xlu0 %1208
      %v1212 = vsel %vm783, %v1075, 0
      %1214 = vmatpush.msra.mxu0 0.0
      %1215 = vmatpush.msra.mxu0 0.0
      %1216 = vmatpush.msra.mxu0 0.0
      %1217 = vmatpush.msra.mxu0 0.0
      %1218 = vmatpush.msra.mxu0 0.0
      %1219 = vmatpush.msra.mxu0 0.0
      %1220 = vmatpush.msra.mxu0 0.0
      %1221 = vmatpush.msra.mxu0 0.0
      %1222 = vmatpush.msra.mxu0 0.0
      %1223 = vmatpush.msra.mxu0 0.0
      %1224 = vmatpush.msra.mxu0 0.0
      %1225 = vmatpush.msra.mxu0 0.0
      %1226 = vmatpush.msra.mxu0 0.0
      %1227 = vmatpush.msra.mxu0 0.0
      %1228 = vmatpush.msra.mxu0 0.0
      %1229 = vmatpush.msra.mxu0 %v1209
      %1230 = vmatmul.f32.gmra.mxu0 %v1212
      %v1231 = vpop.f32.mrf.mxu0
      %v1232 = vadd.f32 0.0, %v1231
      %1233 = vdwg.mxu0
      %1234 = vrot.lane.b32.xlu0 %v746, 64
      %v1235 = vpop.permute.xlu0 %1234
      %v1238 = vsel %vm783, %v1076, 0
      %1240 = vmatpush.msra.mxu0 0.0
      %1241 = vmatpush.msra.mxu0 0.0
      %1242 = vmatpush.msra.mxu0 0.0
      %1243 = vmatpush.msra.mxu0 0.0
      %1244 = vmatpush.msra.mxu0 0.0
      %1245 = vmatpush.msra.mxu0 0.0
      %1246 = vmatpush.msra.mxu0 0.0
      %1247 = vmatpush.msra.mxu0 0.0
      %1248 = vmatpush.msra.mxu0 0.0
      %1249 = vmatpush.msra.mxu0 0.0
      %1250 = vmatpush.msra.mxu0 0.0
      %1251 = vmatpush.msra.mxu0 0.0
      %1252 = vmatpush.msra.mxu0 0.0
      %1253 = vmatpush.msra.mxu0 0.0
      %1254 = vmatpush.msra.mxu0 0.0
      %1255 = vmatpush.msra.mxu0 %v1235
      %1256 = vmatmul.f32.gmra.mxu0 %v1238
      %v1257 = vpop.f32.mrf.mxu0
      %v1258 = vadd.f32 0.0, %v1257
      %1259 = vdwg.mxu0
      %1260 = vrot.lane.b32.xlu0 %v748, 64
      %v1261 = vpop.permute.xlu0 %1260
      %v1264 = vsel %vm783, %v1077, 0
      %1266 = vmatpush.msra.mxu0 0.0
      %1267 = vmatpush.msra.mxu0 0.0
      %1268 = vmatpush.msra.mxu0 0.0
      %1269 = vmatpush.msra.mxu0 0.0
      %1270 = vmatpush.msra.mxu0 0.0
      %1271 = vmatpush.msra.mxu0 0.0
      %1272 = vmatpush.msra.mxu0 0.0
      %1273 = vmatpush.msra.mxu0 0.0
      %1274 = vmatpush.msra.mxu0 0.0
      %1275 = vmatpush.msra.mxu0 0.0
      %1276 = vmatpush.msra.mxu0 0.0
      %1277 = vmatpush.msra.mxu0 0.0
      %1278 = vmatpush.msra.mxu0 0.0
      %1279 = vmatpush.msra.mxu0 0.0
      %1280 = vmatpush.msra.mxu0 0.0
      %1281 = vmatpush.msra.mxu0 %v1261
      %1282 = vmatmul.f32.gmra.mxu0 %v1264
      %v1283 = vpop.f32.mrf.mxu0
      %v1284 = vadd.f32 0.0, %v1283
      %1285 = vdwg.mxu0
      %1288 = vrot.lane.b32.xlu0 %v1154, 8
      %v1289 = vpop.permute.xlu0 %1288
      %1290 = vrot.lane.b32.xlu0 %v1180, 8
      %v1291 = vpop.permute.xlu0 %1290
      %1296 = vrot.lane.b32.xlu0 %v1206, 16
      %v1297 = vpop.permute.xlu0 %1296
      %1298 = vrot.lane.b32.xlu0 %v1232, 16
      %v1299 = vpop.permute.xlu0 %1298
      %1304 = vrot.lane.b32.xlu0 %v1258, 24
      %v1305 = vpop.permute.xlu0 %1304
      %1306 = vrot.lane.b32.xlu0 %v1284, 24
      %v1307 = vpop.permute.xlu0 %1306
      %v1310 = vsel %vm783, %v1102, %v1289
      %v1311 = vsel %vm783, %v1128, %v1291
      %vm1312 = vcmask 130048
      %v1313 = vsel %vm1312, %v1310, %v1297
      %v1314 = vsel %vm1312, %v1311, %v1299
      %vm1315 = vcmask 195584
      %v1316 = vsel %vm1315, %v1313, %v1305
      %v1317 = vsel %vm1315, %v1314, %v1307
      %v1318 = vpack.c.bf16 %v1317, %v1316
      %v1319 = vld [vmem:[%s651] sm:$0xf]
      %v1320 = vld [vmem:[%s651 + $0x4] sm:$0xf]
      %v1321 = vld [vmem:[%s651 + $0x8] sm:$0xf]
      %v1322 = vld [vmem:[%s651 + $0xc] sm:$0xf]
      %v1323 = vld [vmem:[%s654] sm:$0x1]
      %v1325 = vperm.slane %v1323, 0
      %v1331 = vunpack.c.l.b16 %v1319
      %v1332 = vunpack.c.l.b16 %v1320
      %v1333 = vunpack.c.l.b16 %v1321
      %v1334 = vunpack.c.l.b16 %v1322
      %v1335 = vpack.c.b16 %v1332, %v1331
      %v1336 = vpack.c.b16 %v1334, %v1333
      %v1340 = vsel %vm717, %v1318, 0
      %1342 = vmatpush.bf16.msra.mxu0 0
      %1343 = vmatpush.bf16.msra.mxu0 0
      %1344 = vmatpush.bf16.msra.mxu0 0
      %1345 = vmatpush.bf16.msra.mxu0 0
      %1346 = vmatpush.bf16.msra.mxu0 0
      %1347 = vmatpush.bf16.msra.mxu0 0
      %1348 = vmatpush.bf16.msra.mxu0 %v1336
      %1349 = vmatpush.bf16.msra.mxu0 %v1335
      %1350 = vmatmul.bf16.gmra.mxu0 %v1340
      %v1351 = vpop.f32.mrf.mxu0
      %v1352 = vadd.f32 %v1325, %v1351
      %v1353 = vpop.f32.mrf.mxu0
      %v1354 = vadd.f32 %v1325, %v1353
      %1355 = vdwg.mxu0
      %v1356 = vadd.f32 %v694, %v1352
      %v1357 = vadd.f32 %v695, %v1354
      %v1358 = vld [vmem:[%s657] sm:$0x1]
      %v1359 = vld [vmem:[%s660] sm:$0x1]
      %v1360 = vsel %vm717, %v1356, 0.0
      %1361 = vadd.xlane.f32.xlu0 %v1360
      %v1362 = vpop.xlane.xlu0 %1361
      %v1363 = vsel %vm717, %v1357, 0.0
      %1364 = vadd.xlane.f32.xlu0 %v1363
      %v1365 = vpop.xlane.xlu0 %1364
      %v1366 = vrcp.pop 32.0
      %v1367 = vmul.f32 32.0, %v1366
      %v1368 = vsub.f32 1.0, %v1367
      %v1369 = vmul.f32 %v1366, %v1368
      %v1370 = vadd.f32 %v1366, %v1369
      %vm1371 = vweird.f32 %v1366
      %v1372 = vsel %vm1371, %v1366, %v1370
      %v1373 = vmul.f32 %v1362, %v1372
      %v1374 = vmul.f32 %v1365, %v1372
      %v1375 = vsub.f32 %v1356, %v1373
      %v1376 = vsub.f32 %v1357, %v1374
      %v1377 = vmul.f32 %v1375, %v1375
      %v1378 = vmul.f32 %v1376, %v1376
      %v1379 = vsel %vm717, %v1377, 0.0
      %1380 = vadd.xlane.f32.xlu0 %v1379
      %v1381 = vpop.xlane.xlu0 %1380
      %v1382 = vsel %vm717, %v1378, 0.0
      %1383 = vadd.xlane.f32.xlu0 %v1382
      %v1384 = vpop.xlane.xlu0 %1383
      %v1385 = vmul.f32 %v1381, %v1372
      %v1386 = vmul.f32 %v1384, %v1372
      %v1387 = vadd.f32 %v1385, 1e-05
      %v1388 = vadd.f32 %v1386, 1e-05
      %v1389 = vrsqrt.pop %v1387
      %v1390 = vmul.f32 %v1389, %v1387
      %v1391 = vmul.f32 %v1390, %v1389
      %v1392 = vmul.f32 0.5, %v1391
      %v1393 = vsub.f32 1.5, %v1392
      %v1394 = vmul.f32 %v1389, %v1393
      %vm1395 = vweird.f32 %v1387
      %vm1396 = vweird.f32 %v1389
      %vm1397 = vmor %vm1395, %vm1396
      %v1398 = vsel %vm1397, %v1389, %v1394
      %v1399 = vrsqrt.pop %v1388
      %v1400 = vmul.f32 %v1399, %v1388
      %v1401 = vmul.f32 %v1400, %v1399
      %v1402 = vmul.f32 0.5, %v1401
      %v1403 = vsub.f32 1.5, %v1402
      %v1404 = vmul.f32 %v1399, %v1403
      %vm1405 = vweird.f32 %v1388
      %vm1406 = vweird.f32 %v1399
      %vm1407 = vmor %vm1405, %vm1406
      %v1408 = vsel %vm1407, %v1399, %v1404
      %v1409 = vmul.f32 %v1375, %v1398
      %v1410 = vmul.f32 %v1376, %v1408
      %v1412 = vperm.slane %v1358, 0
      %v1414 = vmul.f32 %v1409, %v1412
      %v1415 = vmul.f32 %v1410, %v1412
      %v1417 = vperm.slane %v1359, 0
      %v1419 = vadd.f32 %v1414, %v1417
      %v1420 = vadd.f32 %v1415, %v1417
      %v1421 = vpack.c.bf16 %v1420, %v1419
      %v1422 = vld [vmem:[%s671] sm:$0xff]
      %v1423 = vld [vmem:[%s671 + $0x8] sm:$0xff]
      %v1424 = vld [vmem:[%s671 + $0x40] sm:$0xff]
      %v1425 = vld [vmem:[%s671 + $0x48] sm:$0xff]
      %v1426 = vld [vmem:[%s671 + $0x80] sm:$0xff]
      %v1427 = vld [vmem:[%s671 + $0x88] sm:$0xff]
      %v1428 = vld [vmem:[%s671 + $0xc0] sm:$0xff]
      %v1429 = vld [vmem:[%s671 + $0xc8] sm:$0xff]
      %v1430 = vld [vmem:[%s675] sm:$0xf]
      %v1432 = vperm.slane %v1430, 0
      %v1433 = vperm.slane %v1430, 1
      %v1434 = vperm.slane %v1430, 2
      %v1435 = vperm.slane %v1430, 3
      %v1448 = vunpack.c.l.b16 %v1422
      %v1449 = vunpack.c.h.b16 %v1422
      %v1450 = vunpack.c.l.b16 %v1423
      %v1451 = vunpack.c.h.b16 %v1423
      %v1452 = vunpack.c.l.b16 %v1424
      %v1453 = vunpack.c.h.b16 %v1424
      %v1454 = vunpack.c.l.b16 %v1425
      %v1455 = vunpack.c.h.b16 %v1425
      %v1456 = vunpack.c.l.b16 %v1426
      %v1457 = vunpack.c.h.b16 %v1426
      %v1458 = vunpack.c.l.b16 %v1427
      %v1459 = vunpack.c.h.b16 %v1427
      %v1460 = vunpack.c.l.b16 %v1428
      %v1461 = vunpack.c.h.b16 %v1428
      %v1462 = vunpack.c.l.b16 %v1429
      %v1463 = vunpack.c.h.b16 %v1429
      %v1464 = vpack.c.b16 %v1452, %v1448
      %v1465 = vpack.c.b16 %v1453, %v1449
      %v1466 = vpack.c.b16 %v1454, %v1450
      %v1467 = vpack.c.b16 %v1455, %v1451
      %v1468 = vpack.c.b16 %v1460, %v1456
      %v1469 = vpack.c.b16 %v1461, %v1457
      %v1470 = vpack.c.b16 %v1462, %v1458
      %v1471 = vpack.c.b16 %v1463, %v1459
      %v1481 = vsel %vm717, %v1421, 0
      %1483 = vmatpush.bf16.msra.mxu0 0
      %1484 = vmatpush.bf16.msra.mxu0 0
      %1485 = vmatpush.bf16.msra.mxu0 0
      %1486 = vmatpush.bf16.msra.mxu0 0
      %1487 = vmatpush.bf16.msra.mxu0 0
      %1488 = vmatpush.bf16.msra.mxu0 0
      %1489 = vmatpush.bf16.msra.mxu0 %v1468
      %1490 = vmatpush.bf16.msra.mxu0 %v1464
      %1491 = vmatmul.bf16.gmra.mxu0 %v1481
      %v1492 = vpop.f32.mrf.mxu0
      %v1493 = vadd.f32 %v1432, %v1492
      %v1494 = vpop.f32.mrf.mxu0
      %v1495 = vadd.f32 %v1432, %v1494
      %1496 = vdwg.mxu0
      %1497 = vmatpush.bf16.msra.mxu0 0
      %1498 = vmatpush.bf16.msra.mxu0 0
      %1499 = vmatpush.bf16.msra.mxu0 0
      %1500 = vmatpush.bf16.msra.mxu0 0
      %1501 = vmatpush.bf16.msra.mxu0 0
      %1502 = vmatpush.bf16.msra.mxu0 0
      %1503 = vmatpush.bf16.msra.mxu0 %v1469
      %1504 = vmatpush.bf16.msra.mxu0 %v1465
      %1505 = vmatmul.bf16.gmra.mxu0 %v1481
      %v1506 = vpop.f32.mrf.mxu0
      %v1507 = vadd.f32 %v1433, %v1506
      %v1508 = vpop.f32.mrf.mxu0
      %v1509 = vadd.f32 %v1433, %v1508
      %1510 = vdwg.mxu0
      %1511 = vmatpush.bf16.msra.mxu0 0
      %1512 = vmatpush.bf16.msra.mxu0 0
      %1513 = vmatpush.bf16.msra.mxu0 0
      %1514 = vmatpush.bf16.msra.mxu0 0
      %1515 = vmatpush.bf16.msra.mxu0 0
      %1516 = vmatpush.bf16.msra.mxu0 0
      %1517 = vmatpush.bf16.msra.mxu0 %v1470
      %1518 = vmatpush.bf16.msra.mxu0 %v1466
      %1519 = vmatmul.bf16.gmra.mxu0 %v1481
      %v1520 = vpop.f32.mrf.mxu0
      %v1521 = vadd.f32 %v1434, %v1520
      %v1522 = vpop.f32.mrf.mxu0
      %v1523 = vadd.f32 %v1434, %v1522
      %1524 = vdwg.mxu0
      %1525 = vmatpush.bf16.msra.mxu0 0
      %1526 = vmatpush.bf16.msra.mxu0 0
      %1527 = vmatpush.bf16.msra.mxu0 0
      %1528 = vmatpush.bf16.msra.mxu0 0
      %1529 = vmatpush.bf16.msra.mxu0 0
      %1530 = vmatpush.bf16.msra.mxu0 0
      %1531 = vmatpush.bf16.msra.mxu0 %v1471
      %1532 = vmatpush.bf16.msra.mxu0 %v1467
      %1533 = vmatmul.bf16.gmra.mxu0 %v1481
      %v1534 = vpop.f32.mrf.mxu0
      %v1535 = vadd.f32 %v1435, %v1534
      %v1536 = vpop.f32.mrf.mxu0
      %v1537 = vadd.f32 %v1435, %v1536
      %1538 = vdwg.mxu0
      %v1539 = vmax.f32 %v1493, 0.0
      %v1540 = vmax.f32 %v1507, 0.0
      %v1541 = vmax.f32 %v1521, 0.0
      %v1542 = vmax.f32 %v1535, 0.0
      %v1543 = vmax.f32 %v1495, 0.0
      %v1544 = vmax.f32 %v1509, 0.0
      %v1545 = vmax.f32 %v1523, 0.0
      %v1546 = vmax.f32 %v1537, 0.0
      %v1547 = vpack.c.bf16 %v1543, %v1539
      %v1548 = vpack.c.bf16 %v1544, %v1540
      %v1549 = vpack.c.bf16 %v1545, %v1541
      %v1550 = vpack.c.bf16 %v1546, %v1542
      %v1551 = vld [vmem:[%s680] sm:$0xf]
      %v1552 = vld [vmem:[%s680 + $0x4] sm:$0xf]
      %v1553 = vld [vmem:[%s680 + $0x8] sm:$0xf]
      %v1554 = vld [vmem:[%s680 + $0xc] sm:$0xf]
      %v1555 = vld [vmem:[%s680 + $0x10] sm:$0xf]
      %v1556 = vld [vmem:[%s680 + $0x14] sm:$0xf]
      %v1557 = vld [vmem:[%s680 + $0x18] sm:$0xf]
      %v1558 = vld [vmem:[%s680 + $0x1c] sm:$0xf]
      %v1559 = vld [vmem:[%s680 + $0x20] sm:$0xf]
      %v1560 = vld [vmem:[%s680 + $0x24] sm:$0xf]
      %v1561 = vld [vmem:[%s680 + $0x28] sm:$0xf]
      %v1562 = vld [vmem:[%s680 + $0x2c] sm:$0xf]
      %v1563 = vld [vmem:[%s680 + $0x30] sm:$0xf]
      %v1564 = vld [vmem:[%s680 + $0x34] sm:$0xf]
      %v1565 = vld [vmem:[%s680 + $0x38] sm:$0xf]
      %v1566 = vld [vmem:[%s680 + $0x3c] sm:$0xf]
      %v1567 = vld [vmem:[%s680 + $0x40] sm:$0xf]
      %v1568 = vld [vmem:[%s680 + $0x44] sm:$0xf]
      %v1569 = vld [vmem:[%s680 + $0x48] sm:$0xf]
      %v1570 = vld [vmem:[%s680 + $0x4c] sm:$0xf]
      %v1571 = vld [vmem:[%s680 + $0x50] sm:$0xf]
      %v1572 = vld [vmem:[%s680 + $0x54] sm:$0xf]
      %v1573 = vld [vmem:[%s680 + $0x58] sm:$0xf]
      %v1574 = vld [vmem:[%s680 + $0x5c] sm:$0xf]
      %v1575 = vld [vmem:[%s680 + $0x60] sm:$0xf]
      %v1576 = vld [vmem:[%s680 + $0x64] sm:$0xf]
      %v1577 = vld [vmem:[%s680 + $0x68] sm:$0xf]
      %v1578 = vld [vmem:[%s680 + $0x6c] sm:$0xf]
      %v1579 = vld [vmem:[%s680 + $0x70] sm:$0xf]
      %v1580 = vld [vmem:[%s680 + $0x74] sm:$0xf]
      %v1581 = vld [vmem:[%s680 + $0x78] sm:$0xf]
      %v1582 = vld [vmem:[%s680 + $0x7c] sm:$0xf]
      %v1583 = vld [vmem:[%s680 + $0x80] sm:$0xf]
      %v1584 = vld [vmem:[%s680 + $0x84] sm:$0xf]
      %v1585 = vld [vmem:[%s680 + $0x88] sm:$0xf]
      %v1586 = vld [vmem:[%s680 + $0x8c] sm:$0xf]
      %v1587 = vld [vmem:[%s680 + $0x90] sm:$0xf]
      %v1588 = vld [vmem:[%s680 + $0x94] sm:$0xf]
      %v1589 = vld [vmem:[%s680 + $0x98] sm:$0xf]
      %v1590 = vld [vmem:[%s680 + $0x9c] sm:$0xf]
      %v1591 = vld [vmem:[%s680 + $0xa0] sm:$0xf]
      %v1592 = vld [vmem:[%s680 + $0xa4] sm:$0xf]
      %v1593 = vld [vmem:[%s680 + $0xa8] sm:$0xf]
      %v1594 = vld [vmem:[%s680 + $0xac] sm:$0xf]
      %v1595 = vld [vmem:[%s680 + $0xb0] sm:$0xf]
      %v1596 = vld [vmem:[%s680 + $0xb4] sm:$0xf]
      %v1597 = vld [vmem:[%s680 + $0xb8] sm:$0xf]
      %v1598 = vld [vmem:[%s680 + $0xbc] sm:$0xf]
      %v1599 = vld [vmem:[%s680 + $0xc0] sm:$0xf]
      %v1600 = vld [vmem:[%s680 + $0xc4] sm:$0xf]
      %v1601 = vld [vmem:[%s680 + $0xc8] sm:$0xf]
      %v1602 = vld [vmem:[%s680 + $0xcc] sm:$0xf]
      %v1603 = vld [vmem:[%s680 + $0xd0] sm:$0xf]
      %v1604 = vld [vmem:[%s680 + $0xd4] sm:$0xf]
      %v1605 = vld [vmem:[%s680 + $0xd8] sm:$0xf]
      %v1606 = vld [vmem:[%s680 + $0xdc] sm:$0xf]
      %v1607 = vld [vmem:[%s680 + $0xe0] sm:$0xf]
      %v1608 = vld [vmem:[%s680 + $0xe4] sm:$0xf]
      %v1609 = vld [vmem:[%s680 + $0xe8] sm:$0xf]
      %v1610 = vld [vmem:[%s680 + $0xec] sm:$0xf]
      %v1611 = vld [vmem:[%s680 + $0xf0] sm:$0xf]
      %v1612 = vld [vmem:[%s680 + $0xf4] sm:$0xf]
      %v1613 = vld [vmem:[%s680 + $0xf8] sm:$0xf]
      %v1614 = vld [vmem:[%s680 + $0xfc] sm:$0xf]
      %v1615 = vld [vmem:[%s671 + $0x10] sm:$0xff]
      %v1616 = vld [vmem:[%s671 + $0x18] sm:$0xff]
      %v1617 = vld [vmem:[%s671 + $0x50] sm:$0xff]
      %v1618 = vld [vmem:[%s671 + $0x58] sm:$0xff]
      %v1619 = vld [vmem:[%s671 + $0x90] sm:$0xff]
      %v1620 = vld [vmem:[%s671 + $0x98] sm:$0xff]
      %v1621 = vld [vmem:[%s671 + $0xd0] sm:$0xff]
      %v1622 = vld [vmem:[%s671 + $0xd8] sm:$0xff]
      %v1623 = vld [vmem:[%s675 + $0x4] sm:$0xf]
      %v1625 = vperm.slane %v1623, 0
      %v1626 = vperm.slane %v1623, 1
      %v1627 = vperm.slane %v1623, 2
      %v1628 = vperm.slane %v1623, 3
      %v1641 = vunpack.c.l.b16 %v1615
      %v1642 = vunpack.c.h.b16 %v1615
      %v1643 = vunpack.c.l.b16 %v1616
      %v1644 = vunpack.c.h.b16 %v1616
      %v1645 = vunpack.c.l.b16 %v1617
      %v1646 = vunpack.c.h.b16 %v1617
      %v1647 = vunpack.c.l.b16 %v1618
      %v1648 = vunpack.c.h.b16 %v1618
      %v1649 = vunpack.c.l.b16 %v1619
      %v1650 = vunpack.c.h.b16 %v1619
      %v1651 = vunpack.c.l.b16 %v1620
      %v1652 = vunpack.c.h.b16 %v1620
      %v1653 = vunpack.c.l.b16 %v1621
      %v1654 = vunpack.c.h.b16 %v1621
      %v1655 = vunpack.c.l.b16 %v1622
      %v1656 = vunpack.c.h.b16 %v1622
      %v1657 = vpack.c.b16 %v1645, %v1641
      %v1658 = vpack.c.b16 %v1646, %v1642
      %v1659 = vpack.c.b16 %v1647, %v1643
      %v1660 = vpack.c.b16 %v1648, %v1644
      %v1661 = vpack.c.b16 %v1653, %v1649
      %v1662 = vpack.c.b16 %v1654, %v1650
      %v1663 = vpack.c.b16 %v1655, %v1651
      %v1664 = vpack.c.b16 %v1656, %v1652
      %1673 = vmatpush.bf16.msra.mxu0 0
      %1674 = vmatpush.bf16.msra.mxu0 0
      %1675 = vmatpush.bf16.msra.mxu0 0
      %1676 = vmatpush.bf16.msra.mxu0 0
      %1677 = vmatpush.bf16.msra.mxu0 0
      %1678 = vmatpush.bf16.msra.mxu0 0
      %1679 = vmatpush.bf16.msra.mxu0 %v1661
      %1680 = vmatpush.bf16.msra.mxu0 %v1657
      %1681 = vmatmul.bf16.gmra.mxu0 %v1481
      %v1682 = vpop.f32.mrf.mxu0
      %v1683 = vadd.f32 %v1625, %v1682
      %v1684 = vpop.f32.mrf.mxu0
      %v1685 = vadd.f32 %v1625, %v1684
      %1686 = vdwg.mxu0
      %1687 = vmatpush.bf16.msra.mxu0 0
      %1688 = vmatpush.bf16.msra.mxu0 0
      %1689 = vmatpush.bf16.msra.mxu0 0
      %1690 = vmatpush.bf16.msra.mxu0 0
      %1691 = vmatpush.bf16.msra.mxu0 0
      %1692 = vmatpush.bf16.msra.mxu0 0
      %1693 = vmatpush.bf16.msra.mxu0 %v1662
      %1694 = vmatpush.bf16.msra.mxu0 %v1658
      %1695 = vmatmul.bf16.gmra.mxu0 %v1481
      %v1696 = vpop.f32.mrf.mxu0
      %v1697 = vadd.f32 %v1626, %v1696
      %v1698 = vpop.f32.mrf.mxu0
      %v1699 = vadd.f32 %v1626, %v1698
      %1700 = vdwg.mxu0
      %1701 = vmatpush.bf16.msra.mxu0 0
      %1702 = vmatpush.bf16.msra.mxu0 0
      %1703 = vmatpush.bf16.msra.mxu0 0
      %1704 = vmatpush.bf16.msra.mxu0 0
      %1705 = vmatpush.bf16.msra.mxu0 0
      %1706 = vmatpush.bf16.msra.mxu0 0
      %1707 = vmatpush.bf16.msra.mxu0 %v1663
      %1708 = vmatpush.bf16.msra.mxu0 %v1659
      %1709 = vmatmul.bf16.gmra.mxu0 %v1481
      %v1710 = vpop.f32.mrf.mxu0
      %v1711 = vadd.f32 %v1627, %v1710
      %v1712 = vpop.f32.mrf.mxu0
      %v1713 = vadd.f32 %v1627, %v1712
      %1714 = vdwg.mxu0
      %1715 = vmatpush.bf16.msra.mxu0 0
      %1716 = vmatpush.bf16.msra.mxu0 0
      %1717 = vmatpush.bf16.msra.mxu0 0
      %1718 = vmatpush.bf16.msra.mxu0 0
      %1719 = vmatpush.bf16.msra.mxu0 0
      %1720 = vmatpush.bf16.msra.mxu0 0
      %1721 = vmatpush.bf16.msra.mxu0 %v1664
      %1722 = vmatpush.bf16.msra.mxu0 %v1660
      %1723 = vmatmul.bf16.gmra.mxu0 %v1481
      %v1724 = vpop.f32.mrf.mxu0
      %v1725 = vadd.f32 %v1628, %v1724
      %v1726 = vpop.f32.mrf.mxu0
      %v1727 = vadd.f32 %v1628, %v1726
      %1728 = vdwg.mxu0
      %v1729 = vmax.f32 %v1683, 0.0
      %v1730 = vmax.f32 %v1697, 0.0
      %v1731 = vmax.f32 %v1711, 0.0
      %v1732 = vmax.f32 %v1725, 0.0
      %v1733 = vmax.f32 %v1685, 0.0
      %v1734 = vmax.f32 %v1699, 0.0
      %v1735 = vmax.f32 %v1713, 0.0
      %v1736 = vmax.f32 %v1727, 0.0
      %v1737 = vpack.c.bf16 %v1733, %v1729
      %v1738 = vpack.c.bf16 %v1734, %v1730
      %v1739 = vpack.c.bf16 %v1735, %v1731
      %v1740 = vpack.c.bf16 %v1736, %v1732
      %v1741 = vld [vmem:[%s680 + $0x100] sm:$0xf]
      %v1742 = vld [vmem:[%s680 + $0x104] sm:$0xf]
      %v1743 = vld [vmem:[%s680 + $0x108] sm:$0xf]
      %v1744 = vld [vmem:[%s680 + $0x10c] sm:$0xf]
      %v1745 = vld [vmem:[%s680 + $0x110] sm:$0xf]
      %v1746 = vld [vmem:[%s680 + $0x114] sm:$0xf]
      %v1747 = vld [vmem:[%s680 + $0x118] sm:$0xf]
      %v1748 = vld [vmem:[%s680 + $0x11c] sm:$0xf]
      %v1749 = vld [vmem:[%s680 + $0x120] sm:$0xf]
      %v1750 = vld [vmem:[%s680 + $0x124] sm:$0xf]
      %v1751 = vld [vmem:[%s680 + $0x128] sm:$0xf]
      %v1752 = vld [vmem:[%s680 + $0x12c] sm:$0xf]
      %v1753 = vld [vmem:[%s680 + $0x130] sm:$0xf]
      %v1754 = vld [vmem:[%s680 + $0x134] sm:$0xf]
      %v1755 = vld [vmem:[%s680 + $0x138] sm:$0xf]
      %v1756 = vld [vmem:[%s680 + $0x13c] sm:$0xf]
      %v1757 = vld [vmem:[%s680 + $0x140] sm:$0xf]
      %v1758 = vld [vmem:[%s680 + $0x144] sm:$0xf]
      %v1759 = vld [vmem:[%s680 + $0x148] sm:$0xf]
      %v1760 = vld [vmem:[%s680 + $0x14c] sm:$0xf]
      %v1761 = vld [vmem:[%s680 + $0x150] sm:$0xf]
      %v1762 = vld [vmem:[%s680 + $0x154] sm:$0xf]
      %v1763 = vld [vmem:[%s680 + $0x158] sm:$0xf]
      %v1764 = vld [vmem:[%s680 + $0x15c] sm:$0xf]
      %v1765 = vld [vmem:[%s680 + $0x160] sm:$0xf]
      %v1766 = vld [vmem:[%s680 + $0x164] sm:$0xf]
      %v1767 = vld [vmem:[%s680 + $0x168] sm:$0xf]
      %v1768 = vld [vmem:[%s680 + $0x16c] sm:$0xf]
      %v1769 = vld [vmem:[%s680 + $0x170] sm:$0xf]
      %v1770 = vld [vmem:[%s680 + $0x174] sm:$0xf]
      %v1771 = vld [vmem:[%s680 + $0x178] sm:$0xf]
      %v1772 = vld [vmem:[%s680 + $0x17c] sm:$0xf]
      %v1773 = vld [vmem:[%s680 + $0x180] sm:$0xf]
      %v1774 = vld [vmem:[%s680 + $0x184] sm:$0xf]
      %v1775 = vld [vmem:[%s680 + $0x188] sm:$0xf]
      %v1776 = vld [vmem:[%s680 + $0x18c] sm:$0xf]
      %v1777 = vld [vmem:[%s680 + $0x190] sm:$0xf]
      %v1778 = vld [vmem:[%s680 + $0x194] sm:$0xf]
      %v1779 = vld [vmem:[%s680 + $0x198] sm:$0xf]
      %v1780 = vld [vmem:[%s680 + $0x19c] sm:$0xf]
      %v1781 = vld [vmem:[%s680 + $0x1a0] sm:$0xf]
      %v1782 = vld [vmem:[%s680 + $0x1a4] sm:$0xf]
      %v1783 = vld [vmem:[%s680 + $0x1a8] sm:$0xf]
      %v1784 = vld [vmem:[%s680 + $0x1ac] sm:$0xf]
      %v1785 = vld [vmem:[%s680 + $0x1b0] sm:$0xf]
      %v1786 = vld [vmem:[%s680 + $0x1b4] sm:$0xf]
      %v1787 = vld [vmem:[%s680 + $0x1b8] sm:$0xf]
      %v1788 = vld [vmem:[%s680 + $0x1bc] sm:$0xf]
      %v1789 = vld [vmem:[%s680 + $0x1c0] sm:$0xf]
      %v1790 = vld [vmem:[%s680 + $0x1c4] sm:$0xf]
      %v1791 = vld [vmem:[%s680 + $0x1c8] sm:$0xf]
      %v1792 = vld [vmem:[%s680 + $0x1cc] sm:$0xf]
      %v1793 = vld [vmem:[%s680 + $0x1d0] sm:$0xf]
      %v1794 = vld [vmem:[%s680 + $0x1d4] sm:$0xf]
      %v1795 = vld [vmem:[%s680 + $0x1d8] sm:$0xf]
      %v1796 = vld [vmem:[%s680 + $0x1dc] sm:$0xf]
      %v1797 = vld [vmem:[%s680 + $0x1e0] sm:$0xf]
      %v1798 = vld [vmem:[%s680 + $0x1e4] sm:$0xf]
      %v1799 = vld [vmem:[%s680 + $0x1e8] sm:$0xf]
      %v1800 = vld [vmem:[%s680 + $0x1ec] sm:$0xf]
      %v1801 = vld [vmem:[%s680 + $0x1f0] sm:$0xf]
      %v1802 = vld [vmem:[%s680 + $0x1f4] sm:$0xf]
      %v1803 = vld [vmem:[%s680 + $0x1f8] sm:$0xf]
      %v1804 = vld [vmem:[%s680 + $0x1fc] sm:$0xf]
      %v1869 = vunpack.c.l.b16 %v1741
      %v1870 = vunpack.c.l.b16 %v1742
      %v1871 = vunpack.c.l.b16 %v1743
      %v1872 = vunpack.c.l.b16 %v1744
      %v1873 = vunpack.c.l.b16 %v1745
      %v1874 = vunpack.c.l.b16 %v1746
      %v1875 = vunpack.c.l.b16 %v1747
      %v1876 = vunpack.c.l.b16 %v1748
      %v1877 = vunpack.c.l.b16 %v1749
      %v1878 = vunpack.c.l.b16 %v1750
      %v1879 = vunpack.c.l.b16 %v1751
      %v1880 = vunpack.c.l.b16 %v1752
      %v1881 = vunpack.c.l.b16 %v1753
      %v1882 = vunpack.c.l.b16 %v1754
      %v1883 = vunpack.c.l.b16 %v1755
      %v1884 = vunpack.c.l.b16 %v1756
      %v1885 = vunpack.c.l.b16 %v1757
      %v1886 = vunpack.c.l.b16 %v1758
      %v1887 = vunpack.c.l.b16 %v1759
      %v1888 = vunpack.c.l.b16 %v1760
      %v1889 = vunpack.c.l.b16 %v1761
      %v1890 = vunpack.c.l.b16 %v1762
      %v1891 = vunpack.c.l.b16 %v1763
      %v1892 = vunpack.c.l.b16 %v1764
      %v1893 = vunpack.c.l.b16 %v1765
      %v1894 = vunpack.c.l.b16 %v1766
      %v1895 = vunpack.c.l.b16 %v1767
      %v1896 = vunpack.c.l.b16 %v1768
      %v1897 = vunpack.c.l.b16 %v1769
      %v1898 = vunpack.c.l.b16 %v1770
      %v1899 = vunpack.c.l.b16 %v1771
      %v1900 = vunpack.c.l.b16 %v1772
      %v1901 = vunpack.c.l.b16 %v1773
      %v1902 = vunpack.c.l.b16 %v1774
      %v1903 = vunpack.c.l.b16 %v1775
      %v1904 = vunpack.c.l.b16 %v1776
      %v1905 = vunpack.c.l.b16 %v1777
      %v1906 = vunpack.c.l.b16 %v1778
      %v1907 = vunpack.c.l.b16 %v1779
      %v1908 = vunpack.c.l.b16 %v1780
      %v1909 = vunpack.c.l.b16 %v1781
      %v1910 = vunpack.c.l.b16 %v1782
      %v1911 = vunpack.c.l.b16 %v1783
      %v1912 = vunpack.c.l.b16 %v1784
      %v1913 = vunpack.c.l.b16 %v1785
      %v1914 = vunpack.c.l.b16 %v1786
      %v1915 = vunpack.c.l.b16 %v1787
      %v1916 = vunpack.c.l.b16 %v1788
      %v1917 = vunpack.c.l.b16 %v1789
      %v1918 = vunpack.c.l.b16 %v1790
      %v1919 = vunpack.c.l.b16 %v1791
      %v1920 = vunpack.c.l.b16 %v1792
      %v1921 = vunpack.c.l.b16 %v1793
      %v1922 = vunpack.c.l.b16 %v1794
      %v1923 = vunpack.c.l.b16 %v1795
      %v1924 = vunpack.c.l.b16 %v1796
      %v1925 = vunpack.c.l.b16 %v1797
      %v1926 = vunpack.c.l.b16 %v1798
      %v1927 = vunpack.c.l.b16 %v1799
      %v1928 = vunpack.c.l.b16 %v1800
      %v1929 = vunpack.c.l.b16 %v1801
      %v1930 = vunpack.c.l.b16 %v1802
      %v1931 = vunpack.c.l.b16 %v1803
      %v1932 = vunpack.c.l.b16 %v1804
      %v1933 = vpack.c.b16 %v1870, %v1869
      %v1934 = vpack.c.b16 %v1872, %v1871
      %v1935 = vpack.c.b16 %v1874, %v1873
      %v1936 = vpack.c.b16 %v1876, %v1875
      %v1937 = vpack.c.b16 %v1878, %v1877
      %v1938 = vpack.c.b16 %v1880, %v1879
      %v1939 = vpack.c.b16 %v1882, %v1881
      %v1940 = vpack.c.b16 %v1884, %v1883
      %v1941 = vpack.c.b16 %v1886, %v1885
      %v1942 = vpack.c.b16 %v1888, %v1887
      %v1943 = vpack.c.b16 %v1890, %v1889
      %v1944 = vpack.c.b16 %v1892, %v1891
      %v1945 = vpack.c.b16 %v1894, %v1893
      %v1946 = vpack.c.b16 %v1896, %v1895
      %v1947 = vpack.c.b16 %v1898, %v1897
      %v1948 = vpack.c.b16 %v1900, %v1899
      %v1949 = vpack.c.b16 %v1902, %v1901
      %v1950 = vpack.c.b16 %v1904, %v1903
      %v1951 = vpack.c.b16 %v1906, %v1905
      %v1952 = vpack.c.b16 %v1908, %v1907
      %v1953 = vpack.c.b16 %v1910, %v1909
      %v1954 = vpack.c.b16 %v1912, %v1911
      %v1955 = vpack.c.b16 %v1914, %v1913
      %v1956 = vpack.c.b16 %v1916, %v1915
      %v1957 = vpack.c.b16 %v1918, %v1917
      %v1958 = vpack.c.b16 %v1920, %v1919
      %v1959 = vpack.c.b16 %v1922, %v1921
      %v1960 = vpack.c.b16 %v1924, %v1923
      %v1961 = vpack.c.b16 %v1926, %v1925
      %v1962 = vpack.c.b16 %v1928, %v1927
      %v1963 = vpack.c.b16 %v1930, %v1929
      %v1964 = vpack.c.b16 %v1932, %v1931
      %1997 = vmatpush.bf16.msra.mxu0 %v1940
      %1998 = vmatpush.bf16.msra.mxu0 %v1939
      %1999 = vmatpush.bf16.msra.mxu0 %v1938
      %2000 = vmatpush.bf16.msra.mxu0 %v1937
      %2001 = vmatpush.bf16.msra.mxu0 %v1936
      %2002 = vmatpush.bf16.msra.mxu0 %v1935
      %2003 = vmatpush.bf16.msra.mxu0 %v1934
      %2004 = vmatpush.bf16.msra.mxu0 %v1933
      %2005 = vmatmul.bf16.gmra.mxu0 %v1737
      %v2006 = vpop.f32.mrf.mxu0
      %v2007 = vadd.f32 0.0, %v2006
      %v2008 = vpop.f32.mrf.mxu0
      %v2009 = vadd.f32 0.0, %v2008
      %2010 = vdwg.mxu0
      %2011 = vmatpush.bf16.msra.mxu0 %v1948
      %2012 = vmatpush.bf16.msra.mxu0 %v1947
      %2013 = vmatpush.bf16.msra.mxu0 %v1946
      %2014 = vmatpush.bf16.msra.mxu0 %v1945
      %2015 = vmatpush.bf16.msra.mxu0 %v1944
      %2016 = vmatpush.bf16.msra.mxu0 %v1943
      %2017 = vmatpush.bf16.msra.mxu0 %v1942
      %2018 = vmatpush.bf16.msra.mxu0 %v1941
      %2019 = vmatmul.bf16.gmra.mxu0 %v1738
      %v2020 = vpop.f32.mrf.mxu0
      %v2021 = vadd.f32 %v2007, %v2020
      %v2022 = vpop.f32.mrf.mxu0
      %v2023 = vadd.f32 %v2009, %v2022
      %2024 = vdwg.mxu0
      %2025 = vmatpush.bf16.msra.mxu0 %v1956
      %2026 = vmatpush.bf16.msra.mxu0 %v1955
      %2027 = vmatpush.bf16.msra.mxu0 %v1954
      %2028 = vmatpush.bf16.msra.mxu0 %v1953
      %2029 = vmatpush.bf16.msra.mxu0 %v1952
      %2030 = vmatpush.bf16.msra.mxu0 %v1951
      %2031 = vmatpush.bf16.msra.mxu0 %v1950
      %2032 = vmatpush.bf16.msra.mxu0 %v1949
      %2033 = vmatmul.bf16.gmra.mxu0 %v1739
      %v2034 = vpop.f32.mrf.mxu0
      %v2035 = vadd.f32 %v2021, %v2034
      %v2036 = vpop.f32.mrf.mxu0
      %v2037 = vadd.f32 %v2023, %v2036
      %2038 = vdwg.mxu0
      %2039 = vmatpush.bf16.msra.mxu0 %v1964
      %2040 = vmatpush.bf16.msra.mxu0 %v1963
      %2041 = vmatpush.bf16.msra.mxu0 %v1962
      %2042 = vmatpush.bf16.msra.mxu0 %v1961
      %2043 = vmatpush.bf16.msra.mxu0 %v1960
      %2044 = vmatpush.bf16.msra.mxu0 %v1959
      %2045 = vmatpush.bf16.msra.mxu0 %v1958
      %2046 = vmatpush.bf16.msra.mxu0 %v1957
      %2047 = vmatmul.bf16.gmra.mxu0 %v1740
      %v2048 = vpop.f32.mrf.mxu0
      %v2049 = vadd.f32 %v2035, %v2048
      %v2050 = vpop.f32.mrf.mxu0
      %v2051 = vadd.f32 %v2037, %v2050
      %2052 = vdwg.mxu0
      %v2117 = vunpack.c.l.b16 %v1551
      %v2118 = vunpack.c.l.b16 %v1552
      %v2119 = vunpack.c.l.b16 %v1553
      %v2120 = vunpack.c.l.b16 %v1554
      %v2121 = vunpack.c.l.b16 %v1555
      %v2122 = vunpack.c.l.b16 %v1556
      %v2123 = vunpack.c.l.b16 %v1557
      %v2124 = vunpack.c.l.b16 %v1558
      %v2125 = vunpack.c.l.b16 %v1559
      %v2126 = vunpack.c.l.b16 %v1560
      %v2127 = vunpack.c.l.b16 %v1561
      %v2128 = vunpack.c.l.b16 %v1562
      %v2129 = vunpack.c.l.b16 %v1563
      %v2130 = vunpack.c.l.b16 %v1564
      %v2131 = vunpack.c.l.b16 %v1565
      %v2132 = vunpack.c.l.b16 %v1566
      %v2133 = vunpack.c.l.b16 %v1567
      %v2134 = vunpack.c.l.b16 %v1568
      %v2135 = vunpack.c.l.b16 %v1569
      %v2136 = vunpack.c.l.b16 %v1570
      %v2137 = vunpack.c.l.b16 %v1571
      %v2138 = vunpack.c.l.b16 %v1572
      %v2139 = vunpack.c.l.b16 %v1573
      %v2140 = vunpack.c.l.b16 %v1574
      %v2141 = vunpack.c.l.b16 %v1575
      %v2142 = vunpack.c.l.b16 %v1576
      %v2143 = vunpack.c.l.b16 %v1577
      %v2144 = vunpack.c.l.b16 %v1578
      %v2145 = vunpack.c.l.b16 %v1579
      %v2146 = vunpack.c.l.b16 %v1580
      %v2147 = vunpack.c.l.b16 %v1581
      %v2148 = vunpack.c.l.b16 %v1582
      %v2149 = vunpack.c.l.b16 %v1583
      %v2150 = vunpack.c.l.b16 %v1584
      %v2151 = vunpack.c.l.b16 %v1585
      %v2152 = vunpack.c.l.b16 %v1586
      %v2153 = vunpack.c.l.b16 %v1587
      %v2154 = vunpack.c.l.b16 %v1588
      %v2155 = vunpack.c.l.b16 %v1589
      %v2156 = vunpack.c.l.b16 %v1590
      %v2157 = vunpack.c.l.b16 %v1591
      %v2158 = vunpack.c.l.b16 %v1592
      %v2159 = vunpack.c.l.b16 %v1593
      %v2160 = vunpack.c.l.b16 %v1594
      %v2161 = vunpack.c.l.b16 %v1595
      %v2162 = vunpack.c.l.b16 %v1596
      %v2163 = vunpack.c.l.b16 %v1597
      %v2164 = vunpack.c.l.b16 %v1598
      %v2165 = vunpack.c.l.b16 %v1599
      %v2166 = vunpack.c.l.b16 %v1600
      %v2167 = vunpack.c.l.b16 %v1601
      %v2168 = vunpack.c.l.b16 %v1602
      %v2169 = vunpack.c.l.b16 %v1603
      %v2170 = vunpack.c.l.b16 %v1604
      %v2171 = vunpack.c.l.b16 %v1605
      %v2172 = vunpack.c.l.b16 %v1606
      %v2173 = vunpack.c.l.b16 %v1607
      %v2174 = vunpack.c.l.b16 %v1608
      %v2175 = vunpack.c.l.b16 %v1609
      %v2176 = vunpack.c.l.b16 %v1610
      %v2177 = vunpack.c.l.b16 %v1611
      %v2178 = vunpack.c.l.b16 %v1612
      %v2179 = vunpack.c.l.b16 %v1613
      %v2180 = vunpack.c.l.b16 %v1614
      %v2181 = vpack.c.b16 %v2118, %v2117
      %v2182 = vpack.c.b16 %v2120, %v2119
      %v2183 = vpack.c.b16 %v2122, %v2121
      %v2184 = vpack.c.b16 %v2124, %v2123
      %v2185 = vpack.c.b16 %v2126, %v2125
      %v2186 = vpack.c.b16 %v2128, %v2127
      %v2187 = vpack.c.b16 %v2130, %v2129
      %v2188 = vpack.c.b16 %v2132, %v2131
      %v2189 = vpack.c.b16 %v2134, %v2133
      %v2190 = vpack.c.b16 %v2136, %v2135
      %v2191 = vpack.c.b16 %v2138, %v2137
      %v2192 = vpack.c.b16 %v2140, %v2139
      %v2193 = vpack.c.b16 %v2142, %v2141
      %v2194 = vpack.c.b16 %v2144, %v2143
      %v2195 = vpack.c.b16 %v2146, %v2145
      %v2196 = vpack.c.b16 %v2148, %v2147
      %v2197 = vpack.c.b16 %v2150, %v2149
      %v2198 = vpack.c.b16 %v2152, %v2151
      %v2199 = vpack.c.b16 %v2154, %v2153
      %v2200 = vpack.c.b16 %v2156, %v2155
      %v2201 = vpack.c.b16 %v2158, %v2157
      %v2202 = vpack.c.b16 %v2160, %v2159
      %v2203 = vpack.c.b16 %v2162, %v2161
      %v2204 = vpack.c.b16 %v2164, %v2163
      %v2205 = vpack.c.b16 %v2166, %v2165
      %v2206 = vpack.c.b16 %v2168, %v2167
      %v2207 = vpack.c.b16 %v2170, %v2169
      %v2208 = vpack.c.b16 %v2172, %v2171
      %v2209 = vpack.c.b16 %v2174, %v2173
      %v2210 = vpack.c.b16 %v2176, %v2175
      %v2211 = vpack.c.b16 %v2178, %v2177
      %v2212 = vpack.c.b16 %v2180, %v2179
      %2245 = vmatpush.bf16.msra.mxu0 %v2188
      %2246 = vmatpush.bf16.msra.mxu0 %v2187
      %2247 = vmatpush.bf16.msra.mxu0 %v2186
      %2248 = vmatpush.bf16.msra.mxu0 %v2185
      %2249 = vmatpush.bf16.msra.mxu0 %v2184
      %2250 = vmatpush.bf16.msra.mxu0 %v2183
      %2251 = vmatpush.bf16.msra.mxu0 %v2182
      %2252 = vmatpush.bf16.msra.mxu0 %v2181
      %2253 = vmatmul.bf16.gmra.mxu0 %v1547
      %v2254 = vpop.f32.mrf.mxu0
      %v2255 = vadd.f32 %v2049, %v2254
      %v2256 = vpop.f32.mrf.mxu0
      %v2257 = vadd.f32 %v2051, %v2256
      %2258 = vdwg.mxu0
      %2259 = vmatpush.bf16.msra.mxu0 %v2196
      %2260 = vmatpush.bf16.msra.mxu0 %v2195
      %2261 = vmatpush.bf16.msra.mxu0 %v2194
      %2262 = vmatpush.bf16.msra.mxu0 %v2193
      %2263 = vmatpush.bf16.msra.mxu0 %v2192
      %2264 = vmatpush.bf16.msra.mxu0 %v2191
      %2265 = vmatpush.bf16.msra.mxu0 %v2190
      %2266 = vmatpush.bf16.msra.mxu0 %v2189
      %2267 = vmatmul.bf16.gmra.mxu0 %v1548
      %v2268 = vpop.f32.mrf.mxu0
      %v2269 = vadd.f32 %v2255, %v2268
      %v2270 = vpop.f32.mrf.mxu0
      %v2271 = vadd.f32 %v2257, %v2270
      %2272 = vdwg.mxu0
      %2273 = vmatpush.bf16.msra.mxu0 %v2204
      %2274 = vmatpush.bf16.msra.mxu0 %v2203
      %2275 = vmatpush.bf16.msra.mxu0 %v2202
      %2276 = vmatpush.bf16.msra.mxu0 %v2201
      %2277 = vmatpush.bf16.msra.mxu0 %v2200
      %2278 = vmatpush.bf16.msra.mxu0 %v2199
      %2279 = vmatpush.bf16.msra.mxu0 %v2198
      %2280 = vmatpush.bf16.msra.mxu0 %v2197
      %2281 = vmatmul.bf16.gmra.mxu0 %v1549
      %v2282 = vpop.f32.mrf.mxu0
      %v2283 = vadd.f32 %v2269, %v2282
      %v2284 = vpop.f32.mrf.mxu0
      %v2285 = vadd.f32 %v2271, %v2284
      %2286 = vdwg.mxu0
      %2287 = vmatpush.bf16.msra.mxu0 %v2212
      %2288 = vmatpush.bf16.msra.mxu0 %v2211
      %2289 = vmatpush.bf16.msra.mxu0 %v2210
      %2290 = vmatpush.bf16.msra.mxu0 %v2209
      %2291 = vmatpush.bf16.msra.mxu0 %v2208
      %2292 = vmatpush.bf16.msra.mxu0 %v2207
      %2293 = vmatpush.bf16.msra.mxu0 %v2206
      %2294 = vmatpush.bf16.msra.mxu0 %v2205
      %2295 = vmatmul.bf16.gmra.mxu0 %v1550
      %v2296 = vpop.f32.mrf.mxu0
      %v2297 = vadd.f32 %v2283, %v2296
      %v2298 = vpop.f32.mrf.mxu0
      %v2299 = vadd.f32 %v2285, %v2298
      %2300 = vdwg.mxu0
      %v2301 = vld [vmem:[%s671 + $0x20] sm:$0xff]
      %v2302 = vld [vmem:[%s671 + $0x28] sm:$0xff]
      %v2303 = vld [vmem:[%s671 + $0x60] sm:$0xff]
      %v2304 = vld [vmem:[%s671 + $0x68] sm:$0xff]
      %v2305 = vld [vmem:[%s671 + $0xa0] sm:$0xff]
      %v2306 = vld [vmem:[%s671 + $0xa8] sm:$0xff]
      %v2307 = vld [vmem:[%s671 + $0xe0] sm:$0xff]
      %v2308 = vld [vmem:[%s671 + $0xe8] sm:$0xff]
      %v2309 = vld [vmem:[%s675 + $0x8] sm:$0xf]
      %v2311 = vperm.slane %v2309, 0
      %v2312 = vperm.slane %v2309, 1
      %v2313 = vperm.slane %v2309, 2
      %v2314 = vperm.slane %v2309, 3
      %v2327 = vunpack.c.l.b16 %v2301
      %v2328 = vunpack.c.h.b16 %v2301
      %v2329 = vunpack.c.l.b16 %v2302
      %v2330 = vunpack.c.h.b16 %v2302
      %v2331 = vunpack.c.l.b16 %v2303
      %v2332 = vunpack.c.h.b16 %v2303
      %v2333 = vunpack.c.l.b16 %v2304
      %v2334 = vunpack.c.h.b16 %v2304
      %v2335 = vunpack.c.l.b16 %v2305
      %v2336 = vunpack.c.h.b16 %v2305
      %v2337 = vunpack.c.l.b16 %v2306
      %v2338 = vunpack.c.h.b16 %v2306
      %v2339 = vunpack.c.l.b16 %v2307
      %v2340 = vunpack.c.h.b16 %v2307
      %v2341 = vunpack.c.l.b16 %v2308
      %v2342 = vunpack.c.h.b16 %v2308
      %v2343 = vpack.c.b16 %v2331, %v2327
      %v2344 = vpack.c.b16 %v2332, %v2328
      %v2345 = vpack.c.b16 %v2333, %v2329
      %v2346 = vpack.c.b16 %v2334, %v2330
      %v2347 = vpack.c.b16 %v2339, %v2335
      %v2348 = vpack.c.b16 %v2340, %v2336
      %v2349 = vpack.c.b16 %v2341, %v2337
      %v2350 = vpack.c.b16 %v2342, %v2338
      %2359 = vmatpush.bf16.msra.mxu0 0
      %2360 = vmatpush.bf16.msra.mxu0 0
      %2361 = vmatpush.bf16.msra.mxu0 0
      %2362 = vmatpush.bf16.msra.mxu0 0
      %2363 = vmatpush.bf16.msra.mxu0 0
      %2364 = vmatpush.bf16.msra.mxu0 0
      %2365 = vmatpush.bf16.msra.mxu0 %v2347
      %2366 = vmatpush.bf16.msra.mxu0 %v2343
      %2367 = vmatmul.bf16.gmra.mxu0 %v1481
      %v2368 = vpop.f32.mrf.mxu0
      %v2369 = vadd.f32 %v2311, %v2368
      %v2370 = vpop.f32.mrf.mxu0
      %v2371 = vadd.f32 %v2311, %v2370
      %2372 = vdwg.mxu0
      %2373 = vmatpush.bf16.msra.mxu0 0
      %2374 = vmatpush.bf16.msra.mxu0 0
      %2375 = vmatpush.bf16.msra.mxu0 0
      %2376 = vmatpush.bf16.msra.mxu0 0
      %2377 = vmatpush.bf16.msra.mxu0 0
      %2378 = vmatpush.bf16.msra.mxu0 0
      %2379 = vmatpush.bf16.msra.mxu0 %v2348
      %2380 = vmatpush.bf16.msra.mxu0 %v2344
      %2381 = vmatmul.bf16.gmra.mxu0 %v1481
      %v2382 = vpop.f32.mrf.mxu0
      %v2383 = vadd.f32 %v2312, %v2382
      %v2384 = vpop.f32.mrf.mxu0
      %v2385 = vadd.f32 %v2312, %v2384
      %2386 = vdwg.mxu0
      %2387 = vmatpush.bf16.msra.mxu0 0
      %2388 = vmatpush.bf16.msra.mxu0 0
      %2389 = vmatpush.bf16.msra.mxu0 0
      %2390 = vmatpush.bf16.msra.mxu0 0
      %2391 = vmatpush.bf16.msra.mxu0 0
      %2392 = vmatpush.bf16.msra.mxu0 0
      %2393 = vmatpush.bf16.msra.mxu0 %v2349
      %2394 = vmatpush.bf16.msra.mxu0 %v2345
      %2395 = vmatmul.bf16.gmra.mxu0 %v1481
      %v2396 = vpop.f32.mrf.mxu0
      %v2397 = vadd.f32 %v2313, %v2396
      %v2398 = vpop.f32.mrf.mxu0
      %v2399 = vadd.f32 %v2313, %v2398
      %2400 = vdwg.mxu0
      %2401 = vmatpush.bf16.msra.mxu0 0
      %2402 = vmatpush.bf16.msra.mxu0 0
      %2403 = vmatpush.bf16.msra.mxu0 0
      %2404 = vmatpush.bf16.msra.mxu0 0
      %2405 = vmatpush.bf16.msra.mxu0 0
      %2406 = vmatpush.bf16.msra.mxu0 0
      %2407 = vmatpush.bf16.msra.mxu0 %v2350
      %2408 = vmatpush.bf16.msra.mxu0 %v2346
      %2409 = vmatmul.bf16.gmra.mxu0 %v1481
      %v2410 = vpop.f32.mrf.mxu0
      %v2411 = vadd.f32 %v2314, %v2410
      %v2412 = vpop.f32.mrf.mxu0
      %v2413 = vadd.f32 %v2314, %v2412
      %2414 = vdwg.mxu0
      %v2415 = vmax.f32 %v2369, 0.0
      %v2416 = vmax.f32 %v2383, 0.0
      %v2417 = vmax.f32 %v2397, 0.0
      %v2418 = vmax.f32 %v2411, 0.0
      %v2419 = vmax.f32 %v2371, 0.0
      %v2420 = vmax.f32 %v2385, 0.0
      %v2421 = vmax.f32 %v2399, 0.0
      %v2422 = vmax.f32 %v2413, 0.0
      %v2423 = vpack.c.bf16 %v2419, %v2415
      %v2424 = vpack.c.bf16 %v2420, %v2416
      %v2425 = vpack.c.bf16 %v2421, %v2417
      %v2426 = vpack.c.bf16 %v2422, %v2418
      %v2427 = vld [vmem:[%s680 + $0x200] sm:$0xf]
      %v2428 = vld [vmem:[%s680 + $0x204] sm:$0xf]
      %v2429 = vld [vmem:[%s680 + $0x208] sm:$0xf]
      %v2430 = vld [vmem:[%s680 + $0x20c] sm:$0xf]
      %v2431 = vld [vmem:[%s680 + $0x210] sm:$0xf]
      %v2432 = vld [vmem:[%s680 + $0x214] sm:$0xf]
      %v2433 = vld [vmem:[%s680 + $0x218] sm:$0xf]
      %v2434 = vld [vmem:[%s680 + $0x21c] sm:$0xf]
      %v2435 = vld [vmem:[%s680 + $0x220] sm:$0xf]
      %v2436 = vld [vmem:[%s680 + $0x224] sm:$0xf]
      %v2437 = vld [vmem:[%s680 + $0x228] sm:$0xf]
      %v2438 = vld [vmem:[%s680 + $0x22c] sm:$0xf]
      %v2439 = vld [vmem:[%s680 + $0x230] sm:$0xf]
      %v2440 = vld [vmem:[%s680 + $0x234] sm:$0xf]
      %v2441 = vld [vmem:[%s680 + $0x238] sm:$0xf]
      %v2442 = vld [vmem:[%s680 + $0x23c] sm:$0xf]
      %v2443 = vld [vmem:[%s680 + $0x240] sm:$0xf]
      %v2444 = vld [vmem:[%s680 + $0x244] sm:$0xf]
      %v2445 = vld [vmem:[%s680 + $0x248] sm:$0xf]
      %v2446 = vld [vmem:[%s680 + $0x24c] sm:$0xf]
      %v2447 = vld [vmem:[%s680 + $0x250] sm:$0xf]
      %v2448 = vld [vmem:[%s680 + $0x254] sm:$0xf]
      %v2449 = vld [vmem:[%s680 + $0x258] sm:$0xf]
      %v2450 = vld [vmem:[%s680 + $0x25c] sm:$0xf]
      %v2451 = vld [vmem:[%s680 + $0x260] sm:$0xf]
      %v2452 = vld [vmem:[%s680 + $0x264] sm:$0xf]
      %v2453 = vld [vmem:[%s680 + $0x268] sm:$0xf]
      %v2454 = vld [vmem:[%s680 + $0x26c] sm:$0xf]
      %v2455 = vld [vmem:[%s680 + $0x270] sm:$0xf]
      %v2456 = vld [vmem:[%s680 + $0x274] sm:$0xf]
      %v2457 = vld [vmem:[%s680 + $0x278] sm:$0xf]
      %v2458 = vld [vmem:[%s680 + $0x27c] sm:$0xf]
      %v2459 = vld [vmem:[%s680 + $0x280] sm:$0xf]
      %v2460 = vld [vmem:[%s680 + $0x284] sm:$0xf]
      %v2461 = vld [vmem:[%s680 + $0x288] sm:$0xf]
      %v2462 = vld [vmem:[%s680 + $0x28c] sm:$0xf]
      %v2463 = vld [vmem:[%s680 + $0x290] sm:$0xf]
      %v2464 = vld [vmem:[%s680 + $0x294] sm:$0xf]
      %v2465 = vld [vmem:[%s680 + $0x298] sm:$0xf]
      %v2466 = vld [vmem:[%s680 + $0x29c] sm:$0xf]
      %v2467 = vld [vmem:[%s680 + $0x2a0] sm:$0xf]
      %v2468 = vld [vmem:[%s680 + $0x2a4] sm:$0xf]
      %v2469 = vld [vmem:[%s680 + $0x2a8] sm:$0xf]
      %v2470 = vld [vmem:[%s680 + $0x2ac] sm:$0xf]
      %v2471 = vld [vmem:[%s680 + $0x2b0] sm:$0xf]
      %v2472 = vld [vmem:[%s680 + $0x2b4] sm:$0xf]
      %v2473 = vld [vmem:[%s680 + $0x2b8] sm:$0xf]
      %v2474 = vld [vmem:[%s680 + $0x2bc] sm:$0xf]
      %v2475 = vld [vmem:[%s680 + $0x2c0] sm:$0xf]
      %v2476 = vld [vmem:[%s680 + $0x2c4] sm:$0xf]
      %v2477 = vld [vmem:[%s680 + $0x2c8] sm:$0xf]
      %v2478 = vld [vmem:[%s680 + $0x2cc] sm:$0xf]
      %v2479 = vld [vmem:[%s680 + $0x2d0] sm:$0xf]
      %v2480 = vld [vmem:[%s680 + $0x2d4] sm:$0xf]
      %v2481 = vld [vmem:[%s680 + $0x2d8] sm:$0xf]
      %v2482 = vld [vmem:[%s680 + $0x2dc] sm:$0xf]
      %v2483 = vld [vmem:[%s680 + $0x2e0] sm:$0xf]
      %v2484 = vld [vmem:[%s680 + $0x2e4] sm:$0xf]
      %v2485 = vld [vmem:[%s680 + $0x2e8] sm:$0xf]
      %v2486 = vld [vmem:[%s680 + $0x2ec] sm:$0xf]
      %v2487 = vld [vmem:[%s680 + $0x2f0] sm:$0xf]
      %v2488 = vld [vmem:[%s680 + $0x2f4] sm:$0xf]
      %v2489 = vld [vmem:[%s680 + $0x2f8] sm:$0xf]
      %v2490 = vld [vmem:[%s680 + $0x2fc] sm:$0xf]
      %v2555 = vunpack.c.l.b16 %v2427
      %v2556 = vunpack.c.l.b16 %v2428
      %v2557 = vunpack.c.l.b16 %v2429
      %v2558 = vunpack.c.l.b16 %v2430
      %v2559 = vunpack.c.l.b16 %v2431
      %v2560 = vunpack.c.l.b16 %v2432
      %v2561 = vunpack.c.l.b16 %v2433
      %v2562 = vunpack.c.l.b16 %v2434
      %v2563 = vunpack.c.l.b16 %v2435
      %v2564 = vunpack.c.l.b16 %v2436
      %v2565 = vunpack.c.l.b16 %v2437
      %v2566 = vunpack.c.l.b16 %v2438
      %v2567 = vunpack.c.l.b16 %v2439
      %v2568 = vunpack.c.l.b16 %v2440
      %v2569 = vunpack.c.l.b16 %v2441
      %v2570 = vunpack.c.l.b16 %v2442
      %v2571 = vunpack.c.l.b16 %v2443
      %v2572 = vunpack.c.l.b16 %v2444
      %v2573 = vunpack.c.l.b16 %v2445
      %v2574 = vunpack.c.l.b16 %v2446
      %v2575 = vunpack.c.l.b16 %v2447
      %v2576 = vunpack.c.l.b16 %v2448
      %v2577 = vunpack.c.l.b16 %v2449
      %v2578 = vunpack.c.l.b16 %v2450
      %v2579 = vunpack.c.l.b16 %v2451
      %v2580 = vunpack.c.l.b16 %v2452
      %v2581 = vunpack.c.l.b16 %v2453
      %v2582 = vunpack.c.l.b16 %v2454
      %v2583 = vunpack.c.l.b16 %v2455
      %v2584 = vunpack.c.l.b16 %v2456
      %v2585 = vunpack.c.l.b16 %v2457
      %v2586 = vunpack.c.l.b16 %v2458
      %v2587 = vunpack.c.l.b16 %v2459
      %v2588 = vunpack.c.l.b16 %v2460
      %v2589 = vunpack.c.l.b16 %v2461
      %v2590 = vunpack.c.l.b16 %v2462
      %v2591 = vunpack.c.l.b16 %v2463
      %v2592 = vunpack.c.l.b16 %v2464
      %v2593 = vunpack.c.l.b16 %v2465
      %v2594 = vunpack.c.l.b16 %v2466
      %v2595 = vunpack.c.l.b16 %v2467
      %v2596 = vunpack.c.l.b16 %v2468
      %v2597 = vunpack.c.l.b16 %v2469
      %v2598 = vunpack.c.l.b16 %v2470
      %v2599 = vunpack.c.l.b16 %v2471
      %v2600 = vunpack.c.l.b16 %v2472
      %v2601 = vunpack.c.l.b16 %v2473
      %v2602 = vunpack.c.l.b16 %v2474
      %v2603 = vunpack.c.l.b16 %v2475
      %v2604 = vunpack.c.l.b16 %v2476
      %v2605 = vunpack.c.l.b16 %v2477
      %v2606 = vunpack.c.l.b16 %v2478
      %v2607 = vunpack.c.l.b16 %v2479
      %v2608 = vunpack.c.l.b16 %v2480
      %v2609 = vunpack.c.l.b16 %v2481
      %v2610 = vunpack.c.l.b16 %v2482
      %v2611 = vunpack.c.l.b16 %v2483
      %v2612 = vunpack.c.l.b16 %v2484
      %v2613 = vunpack.c.l.b16 %v2485
      %v2614 = vunpack.c.l.b16 %v2486
      %v2615 = vunpack.c.l.b16 %v2487
      %v2616 = vunpack.c.l.b16 %v2488
      %v2617 = vunpack.c.l.b16 %v2489
      %v2618 = vunpack.c.l.b16 %v2490
      %v2619 = vpack.c.b16 %v2556, %v2555
      %v2620 = vpack.c.b16 %v2558, %v2557
      %v2621 = vpack.c.b16 %v2560, %v2559
      %v2622 = vpack.c.b16 %v2562, %v2561
      %v2623 = vpack.c.b16 %v2564, %v2563
      %v2624 = vpack.c.b16 %v2566, %v2565
      %v2625 = vpack.c.b16 %v2568, %v2567
      %v2626 = vpack.c.b16 %v2570, %v2569
      %v2627 = vpack.c.b16 %v2572, %v2571
      %v2628 = vpack.c.b16 %v2574, %v2573
      %v2629 = vpack.c.b16 %v2576, %v2575
      %v2630 = vpack.c.b16 %v2578, %v2577
      %v2631 = vpack.c.b16 %v2580, %v2579
      %v2632 = vpack.c.b16 %v2582, %v2581
      %v2633 = vpack.c.b16 %v2584, %v2583
      %v2634 = vpack.c.b16 %v2586, %v2585
      %v2635 = vpack.c.b16 %v2588, %v2587
      %v2636 = vpack.c.b16 %v2590, %v2589
      %v2637 = vpack.c.b16 %v2592, %v2591
      %v2638 = vpack.c.b16 %v2594, %v2593
      %v2639 = vpack.c.b16 %v2596, %v2595
      %v2640 = vpack.c.b16 %v2598, %v2597
      %v2641 = vpack.c.b16 %v2600, %v2599
      %v2642 = vpack.c.b16 %v2602, %v2601
      %v2643 = vpack.c.b16 %v2604, %v2603
      %v2644 = vpack.c.b16 %v2606, %v2605
      %v2645 = vpack.c.b16 %v2608, %v2607
      %v2646 = vpack.c.b16 %v2610, %v2609
      %v2647 = vpack.c.b16 %v2612, %v2611
      %v2648 = vpack.c.b16 %v2614, %v2613
      %v2649 = vpack.c.b16 %v2616, %v2615
      %v2650 = vpack.c.b16 %v2618, %v2617
      %2683 = vmatpush.bf16.msra.mxu0 %v2626
      %2684 = vmatpush.bf16.msra.mxu0 %v2625
      %2685 = vmatpush.bf16.msra.mxu0 %v2624
      %2686 = vmatpush.bf16.msra.mxu0 %v2623
      %2687 = vmatpush.bf16.msra.mxu0 %v2622
      %2688 = vmatpush.bf16.msra.mxu0 %v2621
      %2689 = vmatpush.bf16.msra.mxu0 %v2620
      %2690 = vmatpush.bf16.msra.mxu0 %v2619
      %2691 = vmatmul.bf16.gmra.mxu0 %v2423
      %v2692 = vpop.f32.mrf.mxu0
      %v2693 = vadd.f32 0.0, %v2692
      %v2694 = vpop.f32.mrf.mxu0
      %v2695 = vadd.f32 0.0, %v2694
      %2696 = vdwg.mxu0
      %2697 = vmatpush.bf16.msra.mxu0 %v2634
      %2698 = vmatpush.bf16.msra.mxu0 %v2633
      %2699 = vmatpush.bf16.msra.mxu0 %v2632
      %2700 = vmatpush.bf16.msra.mxu0 %v2631
      %2701 = vmatpush.bf16.msra.mxu0 %v2630
      %2702 = vmatpush.bf16.msra.mxu0 %v2629
      %2703 = vmatpush.bf16.msra.mxu0 %v2628
      %2704 = vmatpush.bf16.msra.mxu0 %v2627
      %2705 = vmatmul.bf16.gmra.mxu0 %v2424
      %v2706 = vpop.f32.mrf.mxu0
      %v2707 = vadd.f32 %v2693, %v2706
      %v2708 = vpop.f32.mrf.mxu0
      %v2709 = vadd.f32 %v2695, %v2708
      %2710 = vdwg.mxu0
      %2711 = vmatpush.bf16.msra.mxu0 %v2642
      %2712 = vmatpush.bf16.msra.mxu0 %v2641
      %2713 = vmatpush.bf16.msra.mxu0 %v2640
      %2714 = vmatpush.bf16.msra.mxu0 %v2639
      %2715 = vmatpush.bf16.msra.mxu0 %v2638
      %2716 = vmatpush.bf16.msra.mxu0 %v2637
      %2717 = vmatpush.bf16.msra.mxu0 %v2636
      %2718 = vmatpush.bf16.msra.mxu0 %v2635
      %2719 = vmatmul.bf16.gmra.mxu0 %v2425
      %v2720 = vpop.f32.mrf.mxu0
      %v2721 = vadd.f32 %v2707, %v2720
      %v2722 = vpop.f32.mrf.mxu0
      %v2723 = vadd.f32 %v2709, %v2722
      %2724 = vdwg.mxu0
      %2725 = vmatpush.bf16.msra.mxu0 %v2650
      %2726 = vmatpush.bf16.msra.mxu0 %v2649
      %2727 = vmatpush.bf16.msra.mxu0 %v2648
      %2728 = vmatpush.bf16.msra.mxu0 %v2647
      %2729 = vmatpush.bf16.msra.mxu0 %v2646
      %2730 = vmatpush.bf16.msra.mxu0 %v2645
      %2731 = vmatpush.bf16.msra.mxu0 %v2644
      %2732 = vmatpush.bf16.msra.mxu0 %v2643
      %2733 = vmatmul.bf16.gmra.mxu0 %v2426
      %v2734 = vpop.f32.mrf.mxu0
      %v2735 = vadd.f32 %v2721, %v2734
      %v2736 = vpop.f32.mrf.mxu0
      %v2737 = vadd.f32 %v2723, %v2736
      %2738 = vdwg.mxu0
      %v2739 = vadd.f32 %v2297, %v2735
      %v2740 = vadd.f32 %v2299, %v2737
      %v2741 = vld [vmem:[%s671 + $0x30] sm:$0xff]
      %v2742 = vld [vmem:[%s671 + $0x38] sm:$0xff]
      %v2743 = vld [vmem:[%s671 + $0x70] sm:$0xff]
      %v2744 = vld [vmem:[%s671 + $0x78] sm:$0xff]
      %v2745 = vld [vmem:[%s671 + $0xb0] sm:$0xff]
      %v2746 = vld [vmem:[%s671 + $0xb8] sm:$0xff]
      %v2747 = vld [vmem:[%s671 + $0xf0] sm:$0xff]
      %v2748 = vld [vmem:[%s671 + $0xf8] sm:$0xff]
      %v2749 = vld [vmem:[%s675 + $0xc] sm:$0xf]
      %v2751 = vperm.slane %v2749, 0
      %v2752 = vperm.slane %v2749, 1
      %v2753 = vperm.slane %v2749, 2
      %v2754 = vperm.slane %v2749, 3
      %v2767 = vunpack.c.l.b16 %v2741
      %v2768 = vunpack.c.h.b16 %v2741
      %v2769 = vunpack.c.l.b16 %v2742
      %v2770 = vunpack.c.h.b16 %v2742
      %v2771 = vunpack.c.l.b16 %v2743
      %v2772 = vunpack.c.h.b16 %v2743
      %v2773 = vunpack.c.l.b16 %v2744
      %v2774 = vunpack.c.h.b16 %v2744
      %v2775 = vunpack.c.l.b16 %v2745
      %v2776 = vunpack.c.h.b16 %v2745
      %v2777 = vunpack.c.l.b16 %v2746
      %v2778 = vunpack.c.h.b16 %v2746
      %v2779 = vunpack.c.l.b16 %v2747
      %v2780 = vunpack.c.h.b16 %v2747
      %v2781 = vunpack.c.l.b16 %v2748
      %v2782 = vunpack.c.h.b16 %v2748
      %v2783 = vpack.c.b16 %v2771, %v2767
      %v2784 = vpack.c.b16 %v2772, %v2768
      %v2785 = vpack.c.b16 %v2773, %v2769
      %v2786 = vpack.c.b16 %v2774, %v2770
      %v2787 = vpack.c.b16 %v2779, %v2775
      %v2788 = vpack.c.b16 %v2780, %v2776
      %v2789 = vpack.c.b16 %v2781, %v2777
      %v2790 = vpack.c.b16 %v2782, %v2778
      %2799 = vmatpush.bf16.msra.mxu0 0
      %2800 = vmatpush.bf16.msra.mxu0 0
      %2801 = vmatpush.bf16.msra.mxu0 0
      %2802 = vmatpush.bf16.msra.mxu0 0
      %2803 = vmatpush.bf16.msra.mxu0 0
      %2804 = vmatpush.bf16.msra.mxu0 0
      %2805 = vmatpush.bf16.msra.mxu0 %v2787
      %2806 = vmatpush.bf16.msra.mxu0 %v2783
      %2807 = vmatmul.bf16.gmra.mxu0 %v1481
      %v2808 = vpop.f32.mrf.mxu0
      %v2809 = vadd.f32 %v2751, %v2808
      %v2810 = vpop.f32.mrf.mxu0
      %v2811 = vadd.f32 %v2751, %v2810
      %2812 = vdwg.mxu0
      %2813 = vmatpush.bf16.msra.mxu0 0
      %2814 = vmatpush.bf16.msra.mxu0 0
      %2815 = vmatpush.bf16.msra.mxu0 0
      %2816 = vmatpush.bf16.msra.mxu0 0
      %2817 = vmatpush.bf16.msra.mxu0 0
      %2818 = vmatpush.bf16.msra.mxu0 0
      %2819 = vmatpush.bf16.msra.mxu0 %v2788
      %2820 = vmatpush.bf16.msra.mxu0 %v2784
      %2821 = vmatmul.bf16.gmra.mxu0 %v1481
      %v2822 = vpop.f32.mrf.mxu0
      %v2823 = vadd.f32 %v2752, %v2822
      %v2824 = vpop.f32.mrf.mxu0
      %v2825 = vadd.f32 %v2752, %v2824
      %2826 = vdwg.mxu0
      %2827 = vmatpush.bf16.msra.mxu0 0
      %2828 = vmatpush.bf16.msra.mxu0 0
      %2829 = vmatpush.bf16.msra.mxu0 0
      %2830 = vmatpush.bf16.msra.mxu0 0
      %2831 = vmatpush.bf16.msra.mxu0 0
      %2832 = vmatpush.bf16.msra.mxu0 0
      %2833 = vmatpush.bf16.msra.mxu0 %v2789
      %2834 = vmatpush.bf16.msra.mxu0 %v2785
      %2835 = vmatmul.bf16.gmra.mxu0 %v1481
      %v2836 = vpop.f32.mrf.mxu0
      %v2837 = vadd.f32 %v2753, %v2836
      %v2838 = vpop.f32.mrf.mxu0
      %v2839 = vadd.f32 %v2753, %v2838
      %2840 = vdwg.mxu0
      %2841 = vmatpush.bf16.msra.mxu0 0
      %2842 = vmatpush.bf16.msra.mxu0 0
      %2843 = vmatpush.bf16.msra.mxu0 0
      %2844 = vmatpush.bf16.msra.mxu0 0
      %2845 = vmatpush.bf16.msra.mxu0 0
      %2846 = vmatpush.bf16.msra.mxu0 0
      %2847 = vmatpush.bf16.msra.mxu0 %v2790
      %2848 = vmatpush.bf16.msra.mxu0 %v2786
      %2849 = vmatmul.bf16.gmra.mxu0 %v1481
      %v2850 = vpop.f32.mrf.mxu0
      %v2851 = vadd.f32 %v2754, %v2850
      %v2852 = vpop.f32.mrf.mxu0
      %v2853 = vadd.f32 %v2754, %v2852
      %2854 = vdwg.mxu0
      %v2855 = vmax.f32 %v2809, 0.0
      %v2856 = vmax.f32 %v2823, 0.0
      %v2857 = vmax.f32 %v2837, 0.0
      %v2858 = vmax.f32 %v2851, 0.0
      %v2859 = vmax.f32 %v2811, 0.0
      %v2860 = vmax.f32 %v2825, 0.0
      %v2861 = vmax.f32 %v2839, 0.0
      %v2862 = vmax.f32 %v2853, 0.0
      %v2863 = vpack.c.bf16 %v2859, %v2855
      %v2864 = vpack.c.bf16 %v2860, %v2856
      %v2865 = vpack.c.bf16 %v2861, %v2857
      %v2866 = vpack.c.bf16 %v2862, %v2858
      %v2867 = vld [vmem:[%s680 + $0x300] sm:$0xf]
      %v2868 = vld [vmem:[%s680 + $0x304] sm:$0xf]
      %v2869 = vld [vmem:[%s680 + $0x308] sm:$0xf]
      %v2870 = vld [vmem:[%s680 + $0x30c] sm:$0xf]
      %v2871 = vld [vmem:[%s680 + $0x310] sm:$0xf]
      %v2872 = vld [vmem:[%s680 + $0x314] sm:$0xf]
      %v2873 = vld [vmem:[%s680 + $0x318] sm:$0xf]
      %v2874 = vld [vmem:[%s680 + $0x31c] sm:$0xf]
      %v2875 = vld [vmem:[%s680 + $0x320] sm:$0xf]
      %v2876 = vld [vmem:[%s680 + $0x324] sm:$0xf]
      %v2877 = vld [vmem:[%s680 + $0x328] sm:$0xf]
      %v2878 = vld [vmem:[%s680 + $0x32c] sm:$0xf]
      %v2879 = vld [vmem:[%s680 + $0x330] sm:$0xf]
      %v2880 = vld [vmem:[%s680 + $0x334] sm:$0xf]
      %v2881 = vld [vmem:[%s680 + $0x338] sm:$0xf]
      %v2882 = vld [vmem:[%s680 + $0x33c] sm:$0xf]
      %v2883 = vld [vmem:[%s680 + $0x340] sm:$0xf]
      %v2884 = vld [vmem:[%s680 + $0x344] sm:$0xf]
      %v2885 = vld [vmem:[%s680 + $0x348] sm:$0xf]
      %v2886 = vld [vmem:[%s680 + $0x34c] sm:$0xf]
      %v2887 = vld [vmem:[%s680 + $0x350] sm:$0xf]
      %v2888 = vld [vmem:[%s680 + $0x354] sm:$0xf]
      %v2889 = vld [vmem:[%s680 + $0x358] sm:$0xf]
      %v2890 = vld [vmem:[%s680 + $0x35c] sm:$0xf]
      %v2891 = vld [vmem:[%s680 + $0x360] sm:$0xf]
      %v2892 = vld [vmem:[%s680 + $0x364] sm:$0xf]
      %v2893 = vld [vmem:[%s680 + $0x368] sm:$0xf]
      %v2894 = vld [vmem:[%s680 + $0x36c] sm:$0xf]
      %v2895 = vld [vmem:[%s680 + $0x370] sm:$0xf]
      %v2896 = vld [vmem:[%s680 + $0x374] sm:$0xf]
      %v2897 = vld [vmem:[%s680 + $0x378] sm:$0xf]
      %v2898 = vld [vmem:[%s680 + $0x37c] sm:$0xf]
      %v2899 = vld [vmem:[%s680 + $0x380] sm:$0xf]
      %v2900 = vld [vmem:[%s680 + $0x384] sm:$0xf]
      %v2901 = vld [vmem:[%s680 + $0x388] sm:$0xf]
      %v2902 = vld [vmem:[%s680 + $0x38c] sm:$0xf]
      %v2903 = vld [vmem:[%s680 + $0x390] sm:$0xf]
      %v2904 = vld [vmem:[%s680 + $0x394] sm:$0xf]
      %v2905 = vld [vmem:[%s680 + $0x398] sm:$0xf]
      %v2906 = vld [vmem:[%s680 + $0x39c] sm:$0xf]
      %v2907 = vld [vmem:[%s680 + $0x3a0] sm:$0xf]
      %v2908 = vld [vmem:[%s680 + $0x3a4] sm:$0xf]
      %v2909 = vld [vmem:[%s680 + $0x3a8] sm:$0xf]
      %v2910 = vld [vmem:[%s680 + $0x3ac] sm:$0xf]
      %v2911 = vld [vmem:[%s680 + $0x3b0] sm:$0xf]
      %v2912 = vld [vmem:[%s680 + $0x3b4] sm:$0xf]
      %v2913 = vld [vmem:[%s680 + $0x3b8] sm:$0xf]
      %v2914 = vld [vmem:[%s680 + $0x3bc] sm:$0xf]
      %v2915 = vld [vmem:[%s680 + $0x3c0] sm:$0xf]
      %v2916 = vld [vmem:[%s680 + $0x3c4] sm:$0xf]
      %v2917 = vld [vmem:[%s680 + $0x3c8] sm:$0xf]
      %v2918 = vld [vmem:[%s680 + $0x3cc] sm:$0xf]
      %v2919 = vld [vmem:[%s680 + $0x3d0] sm:$0xf]
      %v2920 = vld [vmem:[%s680 + $0x3d4] sm:$0xf]
      %v2921 = vld [vmem:[%s680 + $0x3d8] sm:$0xf]
      %v2922 = vld [vmem:[%s680 + $0x3dc] sm:$0xf]
      %v2923 = vld [vmem:[%s680 + $0x3e0] sm:$0xf]
      %v2924 = vld [vmem:[%s680 + $0x3e4] sm:$0xf]
      %v2925 = vld [vmem:[%s680 + $0x3e8] sm:$0xf]
      %v2926 = vld [vmem:[%s680 + $0x3ec] sm:$0xf]
      %v2927 = vld [vmem:[%s680 + $0x3f0] sm:$0xf]
      %v2928 = vld [vmem:[%s680 + $0x3f4] sm:$0xf]
      %v2929 = vld [vmem:[%s680 + $0x3f8] sm:$0xf]
      %v2930 = vld [vmem:[%s680 + $0x3fc] sm:$0xf]
      %v2995 = vunpack.c.l.b16 %v2867
      %v2996 = vunpack.c.l.b16 %v2868
      %v2997 = vunpack.c.l.b16 %v2869
      %v2998 = vunpack.c.l.b16 %v2870
      %v2999 = vunpack.c.l.b16 %v2871
      %v3000 = vunpack.c.l.b16 %v2872
      %v3001 = vunpack.c.l.b16 %v2873
      %v3002 = vunpack.c.l.b16 %v2874
      %v3003 = vunpack.c.l.b16 %v2875
      %v3004 = vunpack.c.l.b16 %v2876
      %v3005 = vunpack.c.l.b16 %v2877
      %v3006 = vunpack.c.l.b16 %v2878
      %v3007 = vunpack.c.l.b16 %v2879
      %v3008 = vunpack.c.l.b16 %v2880
      %v3009 = vunpack.c.l.b16 %v2881
      %v3010 = vunpack.c.l.b16 %v2882
      %v3011 = vunpack.c.l.b16 %v2883
      %v3012 = vunpack.c.l.b16 %v2884
      %v3013 = vunpack.c.l.b16 %v2885
      %v3014 = vunpack.c.l.b16 %v2886
      %v3015 = vunpack.c.l.b16 %v2887
      %v3016 = vunpack.c.l.b16 %v2888
      %v3017 = vunpack.c.l.b16 %v2889
      %v3018 = vunpack.c.l.b16 %v2890
      %v3019 = vunpack.c.l.b16 %v2891
      %v3020 = vunpack.c.l.b16 %v2892
      %v3021 = vunpack.c.l.b16 %v2893
      %v3022 = vunpack.c.l.b16 %v2894
      %v3023 = vunpack.c.l.b16 %v2895
      %v3024 = vunpack.c.l.b16 %v2896
      %v3025 = vunpack.c.l.b16 %v2897
      %v3026 = vunpack.c.l.b16 %v2898
      %v3027 = vunpack.c.l.b16 %v2899
      %v3028 = vunpack.c.l.b16 %v2900
      %v3029 = vunpack.c.l.b16 %v2901
      %v3030 = vunpack.c.l.b16 %v2902
      %v3031 = vunpack.c.l.b16 %v2903
      %v3032 = vunpack.c.l.b16 %v2904
      %v3033 = vunpack.c.l.b16 %v2905
      %v3034 = vunpack.c.l.b16 %v2906
      %v3035 = vunpack.c.l.b16 %v2907
      %v3036 = vunpack.c.l.b16 %v2908
      %v3037 = vunpack.c.l.b16 %v2909
      %v3038 = vunpack.c.l.b16 %v2910
      %v3039 = vunpack.c.l.b16 %v2911
      %v3040 = vunpack.c.l.b16 %v2912
      %v3041 = vunpack.c.l.b16 %v2913
      %v3042 = vunpack.c.l.b16 %v2914
      %v3043 = vunpack.c.l.b16 %v2915
      %v3044 = vunpack.c.l.b16 %v2916
      %v3045 = vunpack.c.l.b16 %v2917
      %v3046 = vunpack.c.l.b16 %v2918
      %v3047 = vunpack.c.l.b16 %v2919
      %v3048 = vunpack.c.l.b16 %v2920
      %v3049 = vunpack.c.l.b16 %v2921
      %v3050 = vunpack.c.l.b16 %v2922
      %v3051 = vunpack.c.l.b16 %v2923
      %v3052 = vunpack.c.l.b16 %v2924
      %v3053 = vunpack.c.l.b16 %v2925
      %v3054 = vunpack.c.l.b16 %v2926
      %v3055 = vunpack.c.l.b16 %v2927
      %v3056 = vunpack.c.l.b16 %v2928
      %v3057 = vunpack.c.l.b16 %v2929
      %v3058 = vunpack.c.l.b16 %v2930
      %v3059 = vpack.c.b16 %v2996, %v2995
      %v3060 = vpack.c.b16 %v2998, %v2997
      %v3061 = vpack.c.b16 %v3000, %v2999
      %v3062 = vpack.c.b16 %v3002, %v3001
      %v3063 = vpack.c.b16 %v3004, %v3003
      %v3064 = vpack.c.b16 %v3006, %v3005
      %v3065 = vpack.c.b16 %v3008, %v3007
      %v3066 = vpack.c.b16 %v3010, %v3009
      %v3067 = vpack.c.b16 %v3012, %v3011
      %v3068 = vpack.c.b16 %v3014, %v3013
      %v3069 = vpack.c.b16 %v3016, %v3015
      %v3070 = vpack.c.b16 %v3018, %v3017
      %v3071 = vpack.c.b16 %v3020, %v3019
      %v3072 = vpack.c.b16 %v3022, %v3021
      %v3073 = vpack.c.b16 %v3024, %v3023
      %v3074 = vpack.c.b16 %v3026, %v3025
      %v3075 = vpack.c.b16 %v3028, %v3027
      %v3076 = vpack.c.b16 %v3030, %v3029
      %v3077 = vpack.c.b16 %v3032, %v3031
      %v3078 = vpack.c.b16 %v3034, %v3033
      %v3079 = vpack.c.b16 %v3036, %v3035
      %v3080 = vpack.c.b16 %v3038, %v3037
      %v3081 = vpack.c.b16 %v3040, %v3039
      %v3082 = vpack.c.b16 %v3042, %v3041
      %v3083 = vpack.c.b16 %v3044, %v3043
      %v3084 = vpack.c.b16 %v3046, %v3045
      %v3085 = vpack.c.b16 %v3048, %v3047
      %v3086 = vpack.c.b16 %v3050, %v3049
      %v3087 = vpack.c.b16 %v3052, %v3051
      %v3088 = vpack.c.b16 %v3054, %v3053
      %v3089 = vpack.c.b16 %v3056, %v3055
      %v3090 = vpack.c.b16 %v3058, %v3057
      %3123 = vmatpush.bf16.msra.mxu0 %v3066
      %3124 = vmatpush.bf16.msra.mxu0 %v3065
      %3125 = vmatpush.bf16.msra.mxu0 %v3064
      %3126 = vmatpush.bf16.msra.mxu0 %v3063
      %3127 = vmatpush.bf16.msra.mxu0 %v3062
      %3128 = vmatpush.bf16.msra.mxu0 %v3061
      %3129 = vmatpush.bf16.msra.mxu0 %v3060
      %3130 = vmatpush.bf16.msra.mxu0 %v3059
      %3131 = vmatmul.bf16.gmra.mxu0 %v2863
      %v3132 = vpop.f32.mrf.mxu0
      %v3133 = vadd.f32 0.0, %v3132
      %v3134 = vpop.f32.mrf.mxu0
      %v3135 = vadd.f32 0.0, %v3134
      %3136 = vdwg.mxu0
      %3137 = vmatpush.bf16.msra.mxu0 %v3074
      %3138 = vmatpush.bf16.msra.mxu0 %v3073
      %3139 = vmatpush.bf16.msra.mxu0 %v3072
      %3140 = vmatpush.bf16.msra.mxu0 %v3071
      %3141 = vmatpush.bf16.msra.mxu0 %v3070
      %3142 = vmatpush.bf16.msra.mxu0 %v3069
      %3143 = vmatpush.bf16.msra.mxu0 %v3068
      %3144 = vmatpush.bf16.msra.mxu0 %v3067
      %3145 = vmatmul.bf16.gmra.mxu0 %v2864
      %v3146 = vpop.f32.mrf.mxu0
      %v3147 = vadd.f32 %v3133, %v3146
      %v3148 = vpop.f32.mrf.mxu0
      %v3149 = vadd.f32 %v3135, %v3148
      %3150 = vdwg.mxu0
      %3151 = vmatpush.bf16.msra.mxu0 %v3082
      %3152 = vmatpush.bf16.msra.mxu0 %v3081
      %3153 = vmatpush.bf16.msra.mxu0 %v3080
      %3154 = vmatpush.bf16.msra.mxu0 %v3079
      %3155 = vmatpush.bf16.msra.mxu0 %v3078
      %3156 = vmatpush.bf16.msra.mxu0 %v3077
      %3157 = vmatpush.bf16.msra.mxu0 %v3076
      %3158 = vmatpush.bf16.msra.mxu0 %v3075
      %3159 = vmatmul.bf16.gmra.mxu0 %v2865
      %v3160 = vpop.f32.mrf.mxu0
      %v3161 = vadd.f32 %v3147, %v3160
      %v3162 = vpop.f32.mrf.mxu0
      %v3163 = vadd.f32 %v3149, %v3162
      %3164 = vdwg.mxu0
      %3165 = vmatpush.bf16.msra.mxu0 %v3090
      %3166 = vmatpush.bf16.msra.mxu0 %v3089
      %3167 = vmatpush.bf16.msra.mxu0 %v3088
      %3168 = vmatpush.bf16.msra.mxu0 %v3087
      %3169 = vmatpush.bf16.msra.mxu0 %v3086
      %3170 = vmatpush.bf16.msra.mxu0 %v3085
      %3171 = vmatpush.bf16.msra.mxu0 %v3084
      %3172 = vmatpush.bf16.msra.mxu0 %v3083
      %3173 = vmatmul.bf16.gmra.mxu0 %v2866
      %v3174 = vpop.f32.mrf.mxu0
      %v3175 = vadd.f32 %v3161, %v3174
      %v3176 = vpop.f32.mrf.mxu0
      %v3177 = vadd.f32 %v3163, %v3176
      %3178 = vdwg.mxu0
      %v3179 = vadd.f32 %v2739, %v3175
      %v3180 = vadd.f32 %v2740, %v3177
      %v3181 = vld [vmem:[%s683] sm:$0x1]
      %v3183 = vperm.slane %v3181, 0
      %v3185 = vadd.f32 %v3179, %v3183
      %v3186 = vadd.f32 %v3180, %v3183
      %v3187 = vadd.f32 %v1419, %v3185
      %v3188 = vadd.f32 %v1420, %v3186
      %v3189 = vld [vmem:[%s663] sm:$0x1]
      %v3190 = vld [vmem:[%s666] sm:$0x1]
      %v3191 = vsel %vm717, %v3187, 0.0
      %3192 = vadd.xlane.f32.xlu0 %v3191
      %v3193 = vpop.xlane.xlu0 %3192
      %v3194 = vsel %vm717, %v3188, 0.0
      %3195 = vadd.xlane.f32.xlu0 %v3194
      %v3196 = vpop.xlane.xlu0 %3195
      %v3197 = vmul.f32 %v3193, %v1372
      %v3198 = vmul.f32 %v3196, %v1372
      %v3199 = vsub.f32 %v3187, %v3197
      %v3200 = vsub.f32 %v3188, %v3198
      %v3201 = vmul.f32 %v3199, %v3199
      %v3202 = vmul.f32 %v3200, %v3200
      %v3203 = vsel %vm717, %v3201, 0.0
      %3204 = vadd.xlane.f32.xlu0 %v3203
      %v3205 = vpop.xlane.xlu0 %3204
      %v3206 = vsel %vm717, %v3202, 0.0
      %3207 = vadd.xlane.f32.xlu0 %v3206
      %v3208 = vpop.xlane.xlu0 %3207
      %v3209 = vmul.f32 %v3205, %v1372
      %v3210 = vmul.f32 %v3208, %v1372
      %v3211 = vadd.f32 %v3209, 1e-05
      %v3212 = vadd.f32 %v3210, 1e-05
      %v3213 = vrsqrt.pop %v3211
      %v3214 = vmul.f32 %v3213, %v3211
      %v3215 = vmul.f32 %v3214, %v3213
      %v3216 = vmul.f32 0.5, %v3215
      %v3217 = vsub.f32 1.5, %v3216
      %v3218 = vmul.f32 %v3213, %v3217
      %vm3219 = vweird.f32 %v3211
      %vm3220 = vweird.f32 %v3213
      %vm3221 = vmor %vm3219, %vm3220
      %v3222 = vsel %vm3221, %v3213, %v3218
      %v3223 = vrsqrt.pop %v3212
      %v3224 = vmul.f32 %v3223, %v3212
      %v3225 = vmul.f32 %v3224, %v3223
      %v3226 = vmul.f32 0.5, %v3225
      %v3227 = vsub.f32 1.5, %v3226
      %v3228 = vmul.f32 %v3223, %v3227
      %vm3229 = vweird.f32 %v3212
      %vm3230 = vweird.f32 %v3223
      %vm3231 = vmor %vm3229, %vm3230
      %v3232 = vsel %vm3231, %v3223, %v3228
      %v3233 = vmul.f32 %v3199, %v3222
      %v3234 = vmul.f32 %v3200, %v3232
      %v3236 = vperm.slane %v3189, 0
      %v3238 = vmul.f32 %v3233, %v3236
      %v3239 = vmul.f32 %v3234, %v3236
      %v3241 = vperm.slane %v3190, 0
      %v3243 = vadd.f32 %v3238, %v3241
      %v3244 = vadd.f32 %v3239, %v3241
      %3245 = vst.msk [vmem:[#allocation2] sm:$0xff] %vm717, %v3243
      %3246 = vst.msk [vmem:[#allocation2 + $0x8] sm:$0xff] %vm717, %v3244
      %p3247 = scmp.eq.s32.totalorder %s29, 1
      // Predicated region
      $region89: #{deepcharge_irt_forward.1} parent=83 // pred_check
        %p3248 = pneg %p3247
      $region90: #{deepcharge_irt_forward.1} parent=83 // pred_check_branch
        %3250 = sbr.rel (%p3248) target = $region92
      $region91: #{deepcharge_irt_forward.1} parent=83 // pred_region
        %v3251 = vld [vmem:[%s14] sm:$0x1]
        %v3253 = vperm.slane %v3251, 0
        %v3255 = vmul.f32 %v3243, %v3253
        %v3256 = vmul.f32 %v3244, %v3253
        %v3259 = vrot.slane %v3256, 7
        %vm3260 = vcmask 1041409
        %v3261 = vsel %vm3260, %v3259, %v3255
        %vm3263 = vcmask 254976
        %v3264 = vsel %vm3263, %v3261, 0.0
        %3265 = vadd.xlane.f32.xlu0 %v3264
        %v3266 = vpop.xlane.xlu0 %3265
        %v3267 = vld [vmem:[#allocation3] sm:$0x1]
        %v3269 = vperm.slane %v3267, 0
        %v3271 = vadd.f32 %v3266, %v3269
        %vm3272 = vcmask 1024
        %3273 = vst.msk [vmem:[%s16] sm:$0x3] %vm3272, %v3271
      $region92: #{deepcharge_irt_forward.1} parent=83 // pred_fallthru
        _
      // Predicated region
      $region93: #{deepcharge_irt_forward.1} parent=83 // pred_check
        %p3274 = pneg %p438
      $region94: #{deepcharge_irt_forward.1} parent=83 // pred_check_branch
        %3276 = sbr.rel (%p3274) target = $region96
      $region95: #{deepcharge_irt_forward.1} parent=83 // pred_region
        _
      $region96: #{deepcharge_irt_forward.1} parent=83 // pred_fallthru
        _
      // Predicated region
      $region97: #{deepcharge_irt_forward.1} parent=83 // pred_check
        %p3277 = pneg %p438
      $region98: #{deepcharge_irt_forward.1} parent=83 // pred_check_branch
        %3279 = sbr.rel (%p3277) target = $region100
      $region99: #{deepcharge_irt_forward.1} parent=83 // pred_region
        _
      $region100: #{deepcharge_irt_forward.1} parent=83 // pred_fallthru
        _
    $region84: #{deepcharge_irt_forward.1} parent=5 // pred_fallthru
      _
    %p3280 = scmp.le.s32.totalorder 2, %s24
    // Predicated region
    $region101: #{deepcharge_irt_forward.1} parent=5 // pred_check
      %p3281 = pneg %p3280
    $region102: #{deepcharge_irt_forward.1} parent=5 // pred_check_branch
      %3283 = sbr.rel (%p3281) target = $region104
    $region103: #{deepcharge_irt_forward.1} parent=5 // pred_region
      %s3284 = ssub.s32 %s24, 2
    $region104: #{deepcharge_irt_forward.1} parent=5 // pred_fallthru
      _
  $region6: #{deepcharge_irt_forward.1} parent=0 // loop_footer
    %s28 = sadd.s32 1, %s24
  $region7: #{deepcharge_irt_forward.1} parent=0 // loop_footer_branch
    %23 = sbr.rel target = $region3
  $region8: #{deepcharge_irt_forward.1} parent=0 // loop_exit
    _

</llo_original>
